<compile_context>
chip_gen: v7x
topology: tpu7x:2x2x1
jax: 0.10.0
libtpu: 0.0.40
codegen_flags: <defaults>
</compile_context>

<pallas_src>
import functools

import jax
import jax.numpy as jnp
from jax.experimental import pallas as pl
from jax.experimental.pallas import tpu as pltpu


# ----------------------------------------------------------------------------
# Fused kernel: patch-embed -> L encoder layers -> mean-pool -> classifier
# ----------------------------------------------------------------------------
def vit_fused_kernel(patches_ref, pos_ref, pe_w_ref, pe_b_ref,
                     wqkv_ref, wo_ref, ln1_ref, w1_ref, w2_ref, ln2_ref,
                     cw1_ref, cb1_ref, bng_ref, bnb_ref, bnm_ref, bnv_ref,
                     cw2_ref, cb2_ref, cw3_ref, cb3_ref,
                     out_ref, x_scr,
                     *, nhead, ln_eps, bn_eps, batch, seq, d_model):
    f32 = jnp.float32
    bf16 = jnp.bfloat16
    D = d_model
    hd = D // nhead
    scale = 1.0 / float(hd) ** 0.5

    lyr = pl.program_id(0)
    n_lyr = pl.num_programs(0)

    # ---------------- patch embedding (first grid step only) -----------------
    @pl.when(lyr == 0)
    def _():
        proj = jnp.dot(patches_ref[...].astype(bf16), pe_w_ref[...],
                       preferred_element_type=f32)               # (B*S, D)
        x_scr[...] = proj + pe_b_ref[...] + pos_ref[...]

    # ---------------- encoder layer `lyr` (post-norm, bias=False) ------------
    x = x_scr[...]                                               # (B*S, D) f32

    # fused QKV projection: one MXU pass, 3x wider N
    qkv = jnp.dot(x.astype(bf16), wqkv_ref[0],
                  preferred_element_type=f32)                    # (B*S, 3D)

    # per-(batch, head) attention via static lane/sublane slices — no
    # swapaxes / head-transposes; score matrix keeps S in the lane dim.
    ctx_rows = []
    for b in range(batch):                                       # static, tiny
        r0 = b * seq
        head_ctx = []
        for h in range(nhead):                                   # static, tiny
            c0 = h * hd
            qh = qkv[r0:r0 + seq, c0:c0 + hd]
            kh = qkv[r0:r0 + seq, D + c0:D + c0 + hd]
            vh = qkv[r0:r0 + seq, 2 * D + c0:2 * D + c0 + hd]
            s = jnp.einsum('qd,kd->qk', qh.astype(bf16), kh.astype(bf16),
                           preferred_element_type=f32) * scale   # (S, S)
            s = s - jnp.max(s, axis=-1, keepdims=True)
            p = jnp.exp(s)
            p = p * pl.reciprocal(jnp.sum(p, axis=-1, keepdims=True),
                                  approx=True)                   # EUP, not VALU div
            head_ctx.append(jnp.dot(p.astype(bf16), vh.astype(bf16),
                                    preferred_element_type=f32))  # (S, hd)
        ctx_rows.append(jnp.concatenate(head_ctx, axis=-1))       # (S, D)
    ctx = ctx_rows[0] if batch == 1 else jnp.concatenate(ctx_rows, axis=0)

    sa = jnp.dot(ctx.astype(bf16), wo_ref[0], preferred_element_type=f32)

    # residual + LayerNorm 1 (weight only, bias=False)
    h1 = x + sa
    mu1 = jnp.mean(h1, axis=-1, keepdims=True)
    var1 = jnp.mean((h1 - mu1) ** 2, axis=-1, keepdims=True)
    h1 = (h1 - mu1) * jax.lax.rsqrt(var1 + ln_eps) * ln1_ref[0]

    # feed-forward: Linear -> GELU -> Linear   (dropout = identity in eval)
    ff = jnp.dot(h1.astype(bf16), w1_ref[0], preferred_element_type=f32)
    ff = jax.nn.gelu(ff, approximate=True)
    ff = jnp.dot(ff.astype(bf16), w2_ref[0], preferred_element_type=f32)

    # residual + LayerNorm 2
    h2 = h1 + ff
    mu2 = jnp.mean(h2, axis=-1, keepdims=True)
    var2 = jnp.mean((h2 - mu2) ** 2, axis=-1, keepdims=True)
    y = (h2 - mu2) * jax.lax.rsqrt(var2 + ln_eps) * ln2_ref[0]    # (B*S, D)

    x_scr[...] = y                                                # stays in VMEM

    # ---------------- classifier head (last grid step only) ------------------
    @pl.when(lyr == n_lyr - 1)
    def _():
        # mean-pool over the sequence, per batch row (static slices)
        pooled = jnp.concatenate(
            [jnp.mean(y[b * seq:(b + 1) * seq, :], axis=0, keepdims=True)
             for b in range(batch)], axis=0)                      # (B, D)
        # Linear(D, D/4) + BatchNorm1d(eval) + GELU + Dropout(identity)
        h = jnp.dot(pooled, cw1_ref[...], preferred_element_type=f32) + cb1_ref[...]
        h = (h - bnm_ref[...]) * jax.lax.rsqrt(bnv_ref[...] + bn_eps)
        h = h * bng_ref[...] + bnb_ref[...]
        h = jax.nn.gelu(h, approximate=True)
        # Linear(D/4, D/16), then Linear(D/16, target_size)
        h = jnp.dot(h, cw2_ref[...], preferred_element_type=f32) + cb2_ref[...]
        logits = jnp.dot(h, cw3_ref[...], preferred_element_type=f32) + cb3_ref[...]
        out_ref[...] = logits.astype(out_ref.dtype)               # (B, T)


# ----------------------------------------------------------------------------
# One-time parameter preparation (hoisted out of the per-call forward path)
# ----------------------------------------------------------------------------
def prepare_params(params):
    bf16 = jnp.bfloat16
    layers = params["layers"]
    return {
        "pe_w": params["pe_w"].astype(bf16),
        "pe_b": params["pe_b"],
        "pos": params["pos"],
        "w_qkv": jnp.stack([jnp.concatenate([l["wq"], l["wk"], l["wv"]], axis=1)
                            for l in layers]).astype(bf16),       # (L, D, 3D)
        "w_o": jnp.stack([l["wo"] for l in layers]).astype(bf16), # (L, D, D)
        "ln1_w": jnp.stack([l["ln1_w"] for l in layers]),         # (L, 1, D)
        "w1": jnp.stack([l["w1"] for l in layers]).astype(bf16),  # (L, D, F)
        "w2": jnp.stack([l["w2"] for l in layers]).astype(bf16),  # (L, F, D)
        "ln2_w": jnp.stack([l["ln2_w"] for l in layers]),         # (L, 1, D)
        "cls_w1": params["cls_w1"], "cls_b1": params["cls_b1"],
        "bn_g": params["bn_g"], "bn_b": params["bn_b"],
        "bn_m": params["bn_m"], "bn_v": params["bn_v"],
        "cls_w2": params["cls_w2"], "cls_b2": params["cls_b2"],
        "cls_w3": params["cls_w3"], "cls_b3": params["cls_b3"],
        "num_layers": len(layers),
    }


# ----------------------------------------------------------------------------
# Wrapper: one pallas_call for the full forward pass, grid = (num_layers,)
# ----------------------------------------------------------------------------
def vit_forward(x_nchw, prep, *, patch_size, nhead,
                layer_norm_eps=1e-5, bn_eps=1e-5):
    B, C, H, W = x_nchw.shape
    P = patch_size
    N = (H // P) * (W // P)
    CPP = C * P * P
    D = prep["w_o"].shape[-1]
    F = prep["w1"].shape[-1]
    L = prep["num_layers"]
    D1 = prep["cls_w1"].shape[1]
    D2 = prep["cls_w2"].shape[1]
    T = prep["cls_w3"].shape[1]
    M = B * N                     # MXU M dim: full batch packed in one tile

    # im2col for the stride=P patch "conv" (pure layout glue, no compute)
    patches = (x_nchw.reshape(B, C, H // P, P, W // P, P)
               .transpose(0, 2, 4, 1, 3, 5)
               .reshape(M, CPP))
    pos = jnp.tile(prep["pos"], (B, 1))                           # (B*N, D)

    def const2(shape):
        return pl.BlockSpec(shape, lambda l: (0, 0))

    def per_layer(shape):
        return pl.BlockSpec((1,) + shape, lambda l: (l, 0, 0))

    kernel = functools.partial(
        vit_fused_kernel, nhead=nhead, ln_eps=layer_norm_eps, bn_eps=bn_eps,
        batch=B, seq=N, d_model=D)

    out = pl.pallas_call(
        kernel,
        out_shape=jax.ShapeDtypeStruct((B, T), jnp.float32),
        grid=(L,),
        in_specs=[
            const2((M, CPP)),        # patches
            const2((M, D)),          # positional embedding (tiled over batch)
            const2((CPP, D)),        # patch-embed W (bf16)
            const2((1, D)),          # patch-embed b
            per_layer((D, 3 * D)),   # fused QKV W
            per_layer((D, D)),       # out-proj W
            per_layer((1, D)),       # LN1 weight
            per_layer((D, F)),       # FFN W1
            per_layer((F, D)),       # FFN W2
            per_layer((1, D)),       # LN2 weight
            const2((D, D1)), const2((1, D1)),   # classifier L1
            const2((1, D1)), const2((1, D1)),   # BN gamma / beta
            const2((1, D1)), const2((1, D1)),   # BN running mean / var
            const2((D1, D2)), const2((1, D2)),  # classifier L2
            const2((D2, T)), const2((1, T)),    # classifier L3
        ],
        out_specs=pl.BlockSpec((B, T), lambda l: (0, 0)),
        scratch_shapes=[pltpu.VMEM((M, D), jnp.float32)],  # resident activation
        compiler_params=pltpu.CompilerParams(
            dimension_semantics=("arbitrary",)),
    )(patches, pos, prep["pe_w"], prep["pe_b"],
      prep["w_qkv"], prep["w_o"], prep["ln1_w"], prep["w1"], prep["w2"],
      prep["ln2_w"],
      prep["cls_w1"], prep["cls_b1"],
      prep["bn_g"], prep["bn_b"], prep["bn_m"], prep["bn_v"],
      prep["cls_w2"], prep["cls_b2"], prep["cls_w3"], prep["cls_b3"])

    return out


# ----------------------------------------------------------------------------
# Main
# ----------------------------------------------------------------------------
if __name__ == "__main__":
    # Small config consistent with the module structure; d_model kept a
    # multiple of 128 so all minor dims are lane-dense.
    B, C, H, W = 2, 4, 16, 16
    P = 8                      # patch_size
    D = 128                    # d_model
    NHEAD = 4
    F = 256                    # dim_feedforward
    NUM_LAYERS = 2             # encoder_layer
    TARGET = 4                 # target_size
    LN_EPS = 1e-5
    BN_EPS = 1e-5
    N = (H // P) * (W // P)    # number of patches (seq len) = 4
    D1 = D // 4                # classifier hidden 1
    D2 = D1 // 4               # classifier hidden 2

    key = jax.random.PRNGKey(0)
    keys = iter(jax.random.split(key, 64))

    def nrm(shape, scale=0.02):
        return (scale * jax.random.normal(next(keys), shape)).astype(jnp.float32)

    params = {
        # patch embedding: conv weight (D, C, P, P) flattened to (C*P*P, D)
        "pe_w": nrm((C * P * P, D)),
        "pe_b": nrm((1, D)),
        "pos": nrm((N, D)),
        "layers": [
            {
                "wq": nrm((D, D)), "wk": nrm((D, D)),
                "wv": nrm((D, D)), "wo": nrm((D, D)),
                "ln1_w": jnp.ones((1, D), jnp.float32),
                "w1": nrm((D, F)), "w2": nrm((F, D)),
                "ln2_w": jnp.ones((1, D), jnp.float32),
            }
            for _ in range(NUM_LAYERS)
        ],
        # Classifier: Linear(D,D/4)+BN+GELU+Drop, Linear(D/4,D/16), Linear(D/16,4)
        "cls_w1": nrm((D, D1)), "cls_b1": nrm((1, D1)),
        "bn_g": jnp.ones((1, D1), jnp.float32),
        "bn_b": jnp.zeros((1, D1), jnp.float32),
        "bn_m": jnp.zeros((1, D1), jnp.float32),
        "bn_v": jnp.ones((1, D1), jnp.float32),
        "cls_w2": nrm((D1, D2)), "cls_b2": nrm((1, D2)),
        "cls_w3": nrm((D2, TARGET)), "cls_b3": nrm((1, TARGET)),
    }

    x = jax.random.normal(next(keys), (B, C, H, W), jnp.float32)

    prep = prepare_params(params)   # one-time weight prep, cached across calls
    out = vit_forward(x, prep, patch_size=P, nhead=NHEAD,
                      layer_norm_eps=LN_EPS, bn_eps=BN_EPS)
    jax.block_until_ready(out)
    assert out.shape == (B, TARGET)
    print("KERNEL_OK")
</pallas_src>

<mosaic_0001>
module attributes {stable_mosaic.version = 11 : i64} {
  func.func @vit_fused_kernel(%arg0: i32, %arg1: memref<8x256xf32, #tpu.memory_space<vmem>>, %arg2: memref<8x128xf32, #tpu.memory_space<vmem>>, %arg3: memref<256x128xbf16, #tpu.memory_space<vmem>>, %arg4: memref<1x128xf32, #tpu.memory_space<vmem>>, %arg5: memref<1x128x384xbf16, #tpu.memory_space<vmem>>, %arg6: memref<1x128x128xbf16, #tpu.memory_space<vmem>>, %arg7: memref<1x1x128xf32, #tpu.memory_space<vmem>>, %arg8: memref<1x128x256xbf16, #tpu.memory_space<vmem>>, %arg9: memref<1x256x128xbf16, #tpu.memory_space<vmem>>, %arg10: memref<1x1x128xf32, #tpu.memory_space<vmem>>, %arg11: memref<128x32xf32, #tpu.memory_space<vmem>>, %arg12: memref<1x32xf32, #tpu.memory_space<vmem>>, %arg13: memref<1x32xf32, #tpu.memory_space<vmem>>, %arg14: memref<1x32xf32, #tpu.memory_space<vmem>>, %arg15: memref<1x32xf32, #tpu.memory_space<vmem>>, %arg16: memref<1x32xf32, #tpu.memory_space<vmem>>, %arg17: memref<32x8xf32, #tpu.memory_space<vmem>>, %arg18: memref<1x8xf32, #tpu.memory_space<vmem>>, %arg19: memref<8x4xf32, #tpu.memory_space<vmem>>, %arg20: memref<1x4xf32, #tpu.memory_space<vmem>>, %arg21: memref<2x4xf32, #tpu.memory_space<vmem>>, %arg22: memref<8x128xf32, #tpu.memory_space<vmem>>) attributes {dimension_semantics = [#tpu.dimension_semantics<arbitrary>], iteration_bounds = array<i64: 2>, scalar_prefetch = 0 : i64, scratch_operands = 1 : i64, tpu.core_type = #tpu.core_type<tc>, window_params = [{pipeline_mode = #tpu.pipeline_mode<synchronous>, transform_indices = @transform_0, window_bounds = array<i64: 8, 256>}, {pipeline_mode = #tpu.pipeline_mode<synchronous>, transform_indices = @transform_1, window_bounds = array<i64: 8, 128>}, {pipeline_mode = #tpu.pipeline_mode<synchronous>, transform_indices = @transform_2, window_bounds = array<i64: 256, 128>}, {pipeline_mode = #tpu.pipeline_mode<synchronous>, transform_indices = @transform_3, window_bounds = array<i64: 1, 128>}, {transform_indices = @transform_4, window_bounds = array<i64: 1, 128, 384>}, {transform_indices = @transform_5, window_bounds = array<i64: 1, 128, 128>}, {transform_indices = @transform_6, window_bounds = array<i64: 1, 1, 128>}, {transform_indices = @transform_7, window_bounds = array<i64: 1, 128, 256>}, {transform_indices = @transform_8, window_bounds = array<i64: 1, 256, 128>}, {transform_indices = @transform_9, window_bounds = array<i64: 1, 1, 128>}, {pipeline_mode = #tpu.pipeline_mode<synchronous>, transform_indices = @transform_10, window_bounds = array<i64: 128, 32>}, {pipeline_mode = #tpu.pipeline_mode<synchronous>, transform_indices = @transform_11, window_bounds = array<i64: 1, 32>}, {pipeline_mode = #tpu.pipeline_mode<synchronous>, transform_indices = @transform_12, window_bounds = array<i64: 1, 32>}, {pipeline_mode = #tpu.pipeline_mode<synchronous>, transform_indices = @transform_13, window_bounds = array<i64: 1, 32>}, {pipeline_mode = #tpu.pipeline_mode<synchronous>, transform_indices = @transform_14, window_bounds = array<i64: 1, 32>}, {pipeline_mode = #tpu.pipeline_mode<synchronous>, transform_indices = @transform_15, window_bounds = array<i64: 1, 32>}, {pipeline_mode = #tpu.pipeline_mode<synchronous>, transform_indices = @transform_16, window_bounds = array<i64: 32, 8>}, {pipeline_mode = #tpu.pipeline_mode<synchronous>, transform_indices = @transform_17, window_bounds = array<i64: 1, 8>}, {pipeline_mode = #tpu.pipeline_mode<synchronous>, transform_indices = @transform_18, window_bounds = array<i64: 8, 4>}, {pipeline_mode = #tpu.pipeline_mode<synchronous>, transform_indices = @transform_19, window_bounds = array<i64: 1, 4>}, {pipeline_mode = #tpu.pipeline_mode<synchronous>, transform_indices = @transform_20, window_bounds = array<i64: 2, 4>}]} {
    %c0_i32 = arith.constant 0 : i32
    %0 = arith.cmpi eq, %arg0, %c0_i32 : i32
    %1 = arith.extui %0 : i1 to i32
    %c0_i32_0 = arith.constant 0 : i32
    %2 = arith.cmpi ne, %1, %c0_i32_0 : i32
    scf.if %2 {
      %c0_80 = arith.constant 0 : index
      %c0_81 = arith.constant 0 : index
      %254 = vector.load %arg1[%c0_80, %c0_81] : memref<8x256xf32, #tpu.memory_space<vmem>>, vector<8x256xf32>
      %255 = arith.truncf %254 : vector<8x256xf32> to vector<8x256xbf16>
      %c0_82 = arith.constant 0 : index
      %c0_83 = arith.constant 0 : index
      %256 = vector.load %arg3[%c0_82, %c0_83] : memref<256x128xbf16, #tpu.memory_space<vmem>>, vector<256x128xbf16>
      %cst_84 = arith.constant dense<0.000000e+00> : vector<8x128xf32>
      %257 = tpu.matmul %255, %256, %cst_84 {dimension_numbers = #tpu.dot_dimension_numbers<[1], [0], [0], [1], [0, 0, 1, 1], [], []>} : vector<8x256xbf16>, vector<256x128xbf16>, vector<8x128xf32> -> vector<8x128xf32>
      %c0_85 = arith.constant 0 : index
      %c0_86 = arith.constant 0 : index
      %258 = vector.load %arg4[%c0_85, %c0_86] : memref<1x128xf32, #tpu.memory_space<vmem>>, vector<1x128xf32>
      %259 = vector.broadcast %258 : vector<1x128xf32> to vector<8x128xf32>
      %260 = arith.addf %257, %259 : vector<8x128xf32>
      %c0_87 = arith.constant 0 : index
      %c0_88 = arith.constant 0 : index
      %261 = vector.load %arg2[%c0_87, %c0_88] : memref<8x128xf32, #tpu.memory_space<vmem>>, vector<8x128xf32>
      %262 = arith.addf %260, %261 : vector<8x128xf32>
      %c0_89 = arith.constant 0 : index
      %c0_90 = arith.constant 0 : index
      %263 = vector.load %arg22[%c0_89, %c0_90] : memref<8x128xf32, #tpu.memory_space<vmem>>, vector<8x128xf32>
      tpu.vector_store %arg22[%c0_89, %c0_90], %262 {strides = array<i32>} : memref<8x128xf32, #tpu.memory_space<vmem>>, vector<8x128xf32>,
    } else {
    }
    %c0 = arith.constant 0 : index
    %c0_1 = arith.constant 0 : index
    %3 = vector.load %arg22[%c0, %c0_1] : memref<8x128xf32, #tpu.memory_space<vmem>>, vector<8x128xf32>
    %4 = arith.truncf %3 : vector<8x128xf32> to vector<8x128xbf16>
    %c0_2 = arith.constant 0 : index
    %c0_3 = arith.constant 0 : index
    %c0_4 = arith.constant 0 : index
    %5 = vector.load %arg5[%c0_2, %c0_3, %c0_4] : memref<1x128x384xbf16, #tpu.memory_space<vmem>>, vector<1x128x384xbf16>
    %6 = vector.shape_cast %5 : vector<1x128x384xbf16> to vector<128x384xbf16>
    %cst = arith.constant dense<0.000000e+00> : vector<8x384xf32>
    %7 = tpu.matmul %4, %6, %cst {dimension_numbers = #tpu.dot_dimension_numbers<[1], [0], [0], [1], [0, 0, 1, 1], [], []>} : vector<8x128xbf16>, vector<128x384xbf16>, vector<8x384xf32> -> vector<8x384xf32>
    %8 = vector.extract_strided_slice %7 {offsets = [0, 0], sizes = [4, 32], strides = [1, 1]} : vector<8x384xf32> to vector<4x32xf32>
    %9 = vector.extract_strided_slice %7 {offsets = [0, 128], sizes = [4, 32], strides = [1, 1]} : vector<8x384xf32> to vector<4x32xf32>
    %10 = vector.extract_strided_slice %7 {offsets = [0, 256], sizes = [4, 32], strides = [1, 1]} : vector<8x384xf32> to vector<4x32xf32>
    %11 = arith.truncf %8 : vector<4x32xf32> to vector<4x32xbf16>
    %12 = arith.truncf %9 : vector<4x32xf32> to vector<4x32xbf16>
    "tpu.trace_start"() <{level = 10 : i32, message = "qd,kd->qk"}> : () -> ()
    %cst_5 = arith.constant dense<0.000000e+00> : vector<4x4xf32>
    %13 = tpu.matmul %11, %12, %cst_5 {dimension_numbers = #tpu.dot_dimension_numbers<[1], [1], [0], [0], [0, 0, 1, 0], [], []>} : vector<4x32xbf16>, vector<4x32xbf16>, vector<4x4xf32> -> vector<4x4xf32>
    "tpu.trace_stop"() : () -> ()
    %cst_6 = arith.constant 0.176776692 : f32
    %14 = vector.broadcast %cst_6 : f32 to vector<4x4xf32>
    %15 = arith.mulf %13, %14 : vector<4x4xf32>
    %cst_7 = arith.constant dense<0xFF800000> : vector<4xf32>
    %16 = vector.multi_reduction <maximumf>, %15, %cst_7 [1] : vector<4x4xf32> to vector<4xf32>
    %17 = vector.shape_cast %16 : vector<4xf32> to vector<4x1xf32>
    %18 = vector.broadcast %17 : vector<4x1xf32> to vector<4x4xf32>
    %19 = arith.subf %15, %18 : vector<4x4xf32>
    %20 = math.exp %19 : vector<4x4xf32>
    %cst_8 = arith.constant dense<0.000000e+00> : vector<4xf32>
    %21 = vector.multi_reduction <add>, %20, %cst_8 [1] : vector<4x4xf32> to vector<4xf32>
    %22 = vector.shape_cast %21 : vector<4xf32> to vector<4x1xf32>
    %23 = tpu.reciprocal %22 {approx = true} : vector<4x1xf32> -> vector<4x1xf32>
    %24 = vector.broadcast %23 : vector<4x1xf32> to vector<4x4xf32>
    %25 = arith.mulf %20, %24 : vector<4x4xf32>
    %26 = arith.truncf %25 : vector<4x4xf32> to vector<4x4xbf16>
    %27 = arith.truncf %10 : vector<4x32xf32> to vector<4x32xbf16>
    %cst_9 = arith.constant dense<0.000000e+00> : vector<4x32xf32>
    %28 = tpu.matmul %26, %27, %cst_9 {dimension_numbers = #tpu.dot_dimension_numbers<[1], [0], [0], [1], [0, 0, 1, 1], [], []>} : vector<4x4xbf16>, vector<4x32xbf16>, vector<4x32xf32> -> vector<4x32xf32>
    %29 = vector.extract_strided_slice %7 {offsets = [0, 32], sizes = [4, 32], strides = [1, 1]} : vector<8x384xf32> to vector<4x32xf32>
    %30 = vector.extract_strided_slice %7 {offsets = [0, 160], sizes = [4, 32], strides = [1, 1]} : vector<8x384xf32> to vector<4x32xf32>
    %31 = vector.extract_strided_slice %7 {offsets = [0, 288], sizes = [4, 32], strides = [1, 1]} : vector<8x384xf32> to vector<4x32xf32>
    %32 = arith.truncf %29 : vector<4x32xf32> to vector<4x32xbf16>
    %33 = arith.truncf %30 : vector<4x32xf32> to vector<4x32xbf16>
    "tpu.trace_start"() <{level = 10 : i32, message = "qd,kd->qk"}> : () -> ()
    %cst_10 = arith.constant dense<0.000000e+00> : vector<4x4xf32>
    %34 = tpu.matmul %32, %33, %cst_10 {dimension_numbers = #tpu.dot_dimension_numbers<[1], [1], [0], [0], [0, 0, 1, 0], [], []>} : vector<4x32xbf16>, vector<4x32xbf16>, vector<4x4xf32> -> vector<4x4xf32>
    "tpu.trace_stop"() : () -> ()
    %cst_11 = arith.constant 0.176776692 : f32
    %35 = vector.broadcast %cst_11 : f32 to vector<4x4xf32>
    %36 = arith.mulf %34, %35 : vector<4x4xf32>
    %cst_12 = arith.constant dense<0xFF800000> : vector<4xf32>
    %37 = vector.multi_reduction <maximumf>, %36, %cst_12 [1] : vector<4x4xf32> to vector<4xf32>
    %38 = vector.shape_cast %37 : vector<4xf32> to vector<4x1xf32>
    %39 = vector.broadcast %38 : vector<4x1xf32> to vector<4x4xf32>
    %40 = arith.subf %36, %39 : vector<4x4xf32>
    %41 = math.exp %40 : vector<4x4xf32>
    %cst_13 = arith.constant dense<0.000000e+00> : vector<4xf32>
    %42 = vector.multi_reduction <add>, %41, %cst_13 [1] : vector<4x4xf32> to vector<4xf32>
    %43 = vector.shape_cast %42 : vector<4xf32> to vector<4x1xf32>
    %44 = tpu.reciprocal %43 {approx = true} : vector<4x1xf32> -> vector<4x1xf32>
    %45 = vector.broadcast %44 : vector<4x1xf32> to vector<4x4xf32>
    %46 = arith.mulf %41, %45 : vector<4x4xf32>
    %47 = arith.truncf %46 : vector<4x4xf32> to vector<4x4xbf16>
    %48 = arith.truncf %31 : vector<4x32xf32> to vector<4x32xbf16>
    %cst_14 = arith.constant dense<0.000000e+00> : vector<4x32xf32>
    %49 = tpu.matmul %47, %48, %cst_14 {dimension_numbers = #tpu.dot_dimension_numbers<[1], [0], [0], [1], [0, 0, 1, 1], [], []>} : vector<4x4xbf16>, vector<4x32xbf16>, vector<4x32xf32> -> vector<4x32xf32>
    %50 = vector.extract_strided_slice %7 {offsets = [0, 64], sizes = [4, 32], strides = [1, 1]} : vector<8x384xf32> to vector<4x32xf32>
    %51 = vector.extract_strided_slice %7 {offsets = [0, 192], sizes = [4, 32], strides = [1, 1]} : vector<8x384xf32> to vector<4x32xf32>
    %52 = vector.extract_strided_slice %7 {offsets = [0, 320], sizes = [4, 32], strides = [1, 1]} : vector<8x384xf32> to vector<4x32xf32>
    %53 = arith.truncf %50 : vector<4x32xf32> to vector<4x32xbf16>
    %54 = arith.truncf %51 : vector<4x32xf32> to vector<4x32xbf16>
    "tpu.trace_start"() <{level = 10 : i32, message = "qd,kd->qk"}> : () -> ()
    %cst_15 = arith.constant dense<0.000000e+00> : vector<4x4xf32>
    %55 = tpu.matmul %53, %54, %cst_15 {dimension_numbers = #tpu.dot_dimension_numbers<[1], [1], [0], [0], [0, 0, 1, 0], [], []>} : vector<4x32xbf16>, vector<4x32xbf16>, vector<4x4xf32> -> vector<4x4xf32>
    "tpu.trace_stop"() : () -> ()
    %cst_16 = arith.constant 0.176776692 : f32
    %56 = vector.broadcast %cst_16 : f32 to vector<4x4xf32>
    %57 = arith.mulf %55, %56 : vector<4x4xf32>
    %cst_17 = arith.constant dense<0xFF800000> : vector<4xf32>
    %58 = vector.multi_reduction <maximumf>, %57, %cst_17 [1] : vector<4x4xf32> to vector<4xf32>
    %59 = vector.shape_cast %58 : vector<4xf32> to vector<4x1xf32>
    %60 = vector.broadcast %59 : vector<4x1xf32> to vector<4x4xf32>
    %61 = arith.subf %57, %60 : vector<4x4xf32>
    %62 = math.exp %61 : vector<4x4xf32>
    %cst_18 = arith.constant dense<0.000000e+00> : vector<4xf32>
    %63 = vector.multi_reduction <add>, %62, %cst_18 [1] : vector<4x4xf32> to vector<4xf32>
    %64 = vector.shape_cast %63 : vector<4xf32> to vector<4x1xf32>
    %65 = tpu.reciprocal %64 {approx = true} : vector<4x1xf32> -> vector<4x1xf32>
    %66 = vector.broadcast %65 : vector<4x1xf32> to vector<4x4xf32>
    %67 = arith.mulf %62, %66 : vector<4x4xf32>
    %68 = arith.truncf %67 : vector<4x4xf32> to vector<4x4xbf16>
    %69 = arith.truncf %52 : vector<4x32xf32> to vector<4x32xbf16>
    %cst_19 = arith.constant dense<0.000000e+00> : vector<4x32xf32>
    %70 = tpu.matmul %68, %69, %cst_19 {dimension_numbers = #tpu.dot_dimension_numbers<[1], [0], [0], [1], [0, 0, 1, 1], [], []>} : vector<4x4xbf16>, vector<4x32xbf16>, vector<4x32xf32> -> vector<4x32xf32>
    %71 = vector.extract_strided_slice %7 {offsets = [0, 96], sizes = [4, 32], strides = [1, 1]} : vector<8x384xf32> to vector<4x32xf32>
    %72 = vector.extract_strided_slice %7 {offsets = [0, 224], sizes = [4, 32], strides = [1, 1]} : vector<8x384xf32> to vector<4x32xf32>
    %73 = vector.extract_strided_slice %7 {offsets = [0, 352], sizes = [4, 32], strides = [1, 1]} : vector<8x384xf32> to vector<4x32xf32>
    %74 = arith.truncf %71 : vector<4x32xf32> to vector<4x32xbf16>
    %75 = arith.truncf %72 : vector<4x32xf32> to vector<4x32xbf16>
    "tpu.trace_start"() <{level = 10 : i32, message = "qd,kd->qk"}> : () -> ()
    %cst_20 = arith.constant dense<0.000000e+00> : vector<4x4xf32>
    %76 = tpu.matmul %74, %75, %cst_20 {dimension_numbers = #tpu.dot_dimension_numbers<[1], [1], [0], [0], [0, 0, 1, 0], [], []>} : vector<4x32xbf16>, vector<4x32xbf16>, vector<4x4xf32> -> vector<4x4xf32>
    "tpu.trace_stop"() : () -> ()
    %cst_21 = arith.constant 0.176776692 : f32
    %77 = vector.broadcast %cst_21 : f32 to vector<4x4xf32>
    %78 = arith.mulf %76, %77 : vector<4x4xf32>
    %cst_22 = arith.constant dense<0xFF800000> : vector<4xf32>
    %79 = vector.multi_reduction <maximumf>, %78, %cst_22 [1] : vector<4x4xf32> to vector<4xf32>
    %80 = vector.shape_cast %79 : vector<4xf32> to vector<4x1xf32>
    %81 = vector.broadcast %80 : vector<4x1xf32> to vector<4x4xf32>
    %82 = arith.subf %78, %81 : vector<4x4xf32>
    %83 = math.exp %82 : vector<4x4xf32>
    %cst_23 = arith.constant dense<0.000000e+00> : vector<4xf32>
    %84 = vector.multi_reduction <add>, %83, %cst_23 [1] : vector<4x4xf32> to vector<4xf32>
    %85 = vector.shape_cast %84 : vector<4xf32> to vector<4x1xf32>
    %86 = tpu.reciprocal %85 {approx = true} : vector<4x1xf32> -> vector<4x1xf32>
    %87 = vector.broadcast %86 : vector<4x1xf32> to vector<4x4xf32>
    %88 = arith.mulf %83, %87 : vector<4x4xf32>
    %89 = arith.truncf %88 : vector<4x4xf32> to vector<4x4xbf16>
    %90 = arith.truncf %73 : vector<4x32xf32> to vector<4x32xbf16>
    %cst_24 = arith.constant dense<0.000000e+00> : vector<4x32xf32>
    %91 = tpu.matmul %89, %90, %cst_24 {dimension_numbers = #tpu.dot_dimension_numbers<[1], [0], [0], [1], [0, 0, 1, 1], [], []>} : vector<4x4xbf16>, vector<4x32xbf16>, vector<4x32xf32> -> vector<4x32xf32>
    %92 = tpu.concatenate %28, %49, %70, %91 in 1 : vector<4x32xf32>, vector<4x32xf32>, vector<4x32xf32>, vector<4x32xf32> -> vector<4x128xf32>
    %93 = vector.extract_strided_slice %7 {offsets = [4, 0], sizes = [4, 32], strides = [1, 1]} : vector<8x384xf32> to vector<4x32xf32>
    %94 = vector.extract_strided_slice %7 {offsets = [4, 128], sizes = [4, 32], strides = [1, 1]} : vector<8x384xf32> to vector<4x32xf32>
    %95 = vector.extract_strided_slice %7 {offsets = [4, 256], sizes = [4, 32], strides = [1, 1]} : vector<8x384xf32> to vector<4x32xf32>
    %96 = arith.truncf %93 : vector<4x32xf32> to vector<4x32xbf16>
    %97 = arith.truncf %94 : vector<4x32xf32> to vector<4x32xbf16>
    "tpu.trace_start"() <{level = 10 : i32, message = "qd,kd->qk"}> : () -> ()
    %cst_25 = arith.constant dense<0.000000e+00> : vector<4x4xf32>
    %98 = tpu.matmul %96, %97, %cst_25 {dimension_numbers = #tpu.dot_dimension_numbers<[1], [1], [0], [0], [0, 0, 1, 0], [], []>} : vector<4x32xbf16>, vector<4x32xbf16>, vector<4x4xf32> -> vector<4x4xf32>
    "tpu.trace_stop"() : () -> ()
    %cst_26 = arith.constant 0.176776692 : f32
    %99 = vector.broadcast %cst_26 : f32 to vector<4x4xf32>
    %100 = arith.mulf %98, %99 : vector<4x4xf32>
    %cst_27 = arith.constant dense<0xFF800000> : vector<4xf32>
    %101 = vector.multi_reduction <maximumf>, %100, %cst_27 [1] : vector<4x4xf32> to vector<4xf32>
    %102 = vector.shape_cast %101 : vector<4xf32> to vector<4x1xf32>
    %103 = vector.broadcast %102 : vector<4x1xf32> to vector<4x4xf32>
    %104 = arith.subf %100, %103 : vector<4x4xf32>
    %105 = math.exp %104 : vector<4x4xf32>
    %cst_28 = arith.constant dense<0.000000e+00> : vector<4xf32>
    %106 = vector.multi_reduction <add>, %105, %cst_28 [1] : vector<4x4xf32> to vector<4xf32>
    %107 = vector.shape_cast %106 : vector<4xf32> to vector<4x1xf32>
    %108 = tpu.reciprocal %107 {approx = true} : vector<4x1xf32> -> vector<4x1xf32>
    %109 = vector.broadcast %108 : vector<4x1xf32> to vector<4x4xf32>
    %110 = arith.mulf %105, %109 : vector<4x4xf32>
    %111 = arith.truncf %110 : vector<4x4xf32> to vector<4x4xbf16>
    %112 = arith.truncf %95 : vector<4x32xf32> to vector<4x32xbf16>
    %cst_29 = arith.constant dense<0.000000e+00> : vector<4x32xf32>
    %113 = tpu.matmul %111, %112, %cst_29 {dimension_numbers = #tpu.dot_dimension_numbers<[1], [0], [0], [1], [0, 0, 1, 1], [], []>} : vector<4x4xbf16>, vector<4x32xbf16>, vector<4x32xf32> -> vector<4x32xf32>
    %114 = vector.extract_strided_slice %7 {offsets = [4, 32], sizes = [4, 32], strides = [1, 1]} : vector<8x384xf32> to vector<4x32xf32>
    %115 = vector.extract_strided_slice %7 {offsets = [4, 160], sizes = [4, 32], strides = [1, 1]} : vector<8x384xf32> to vector<4x32xf32>
    %116 = vector.extract_strided_slice %7 {offsets = [4, 288], sizes = [4, 32], strides = [1, 1]} : vector<8x384xf32> to vector<4x32xf32>
    %117 = arith.truncf %114 : vector<4x32xf32> to vector<4x32xbf16>
    %118 = arith.truncf %115 : vector<4x32xf32> to vector<4x32xbf16>
    "tpu.trace_start"() <{level = 10 : i32, message = "qd,kd->qk"}> : () -> ()
    %cst_30 = arith.constant dense<0.000000e+00> : vector<4x4xf32>
    %119 = tpu.matmul %117, %118, %cst_30 {dimension_numbers = #tpu.dot_dimension_numbers<[1], [1], [0], [0], [0, 0, 1, 0], [], []>} : vector<4x32xbf16>, vector<4x32xbf16>, vector<4x4xf32> -> vector<4x4xf32>
    "tpu.trace_stop"() : () -> ()
    %cst_31 = arith.constant 0.176776692 : f32
    %120 = vector.broadcast %cst_31 : f32 to vector<4x4xf32>
    %121 = arith.mulf %119, %120 : vector<4x4xf32>
    %cst_32 = arith.constant dense<0xFF800000> : vector<4xf32>
    %122 = vector.multi_reduction <maximumf>, %121, %cst_32 [1] : vector<4x4xf32> to vector<4xf32>
    %123 = vector.shape_cast %122 : vector<4xf32> to vector<4x1xf32>
    %124 = vector.broadcast %123 : vector<4x1xf32> to vector<4x4xf32>
    %125 = arith.subf %121, %124 : vector<4x4xf32>
    %126 = math.exp %125 : vector<4x4xf32>
    %cst_33 = arith.constant dense<0.000000e+00> : vector<4xf32>
    %127 = vector.multi_reduction <add>, %126, %cst_33 [1] : vector<4x4xf32> to vector<4xf32>
    %128 = vector.shape_cast %127 : vector<4xf32> to vector<4x1xf32>
    %129 = tpu.reciprocal %128 {approx = true} : vector<4x1xf32> -> vector<4x1xf32>
    %130 = vector.broadcast %129 : vector<4x1xf32> to vector<4x4xf32>
    %131 = arith.mulf %126, %130 : vector<4x4xf32>
    %132 = arith.truncf %131 : vector<4x4xf32> to vector<4x4xbf16>
    %133 = arith.truncf %116 : vector<4x32xf32> to vector<4x32xbf16>
    %cst_34 = arith.constant dense<0.000000e+00> : vector<4x32xf32>
    %134 = tpu.matmul %132, %133, %cst_34 {dimension_numbers = #tpu.dot_dimension_numbers<[1], [0], [0], [1], [0, 0, 1, 1], [], []>} : vector<4x4xbf16>, vector<4x32xbf16>, vector<4x32xf32> -> vector<4x32xf32>
    %135 = vector.extract_strided_slice %7 {offsets = [4, 64], sizes = [4, 32], strides = [1, 1]} : vector<8x384xf32> to vector<4x32xf32>
    %136 = vector.extract_strided_slice %7 {offsets = [4, 192], sizes = [4, 32], strides = [1, 1]} : vector<8x384xf32> to vector<4x32xf32>
    %137 = vector.extract_strided_slice %7 {offsets = [4, 320], sizes = [4, 32], strides = [1, 1]} : vector<8x384xf32> to vector<4x32xf32>
    %138 = arith.truncf %135 : vector<4x32xf32> to vector<4x32xbf16>
    %139 = arith.truncf %136 : vector<4x32xf32> to vector<4x32xbf16>
    "tpu.trace_start"() <{level = 10 : i32, message = "qd,kd->qk"}> : () -> ()
    %cst_35 = arith.constant dense<0.000000e+00> : vector<4x4xf32>
    %140 = tpu.matmul %138, %139, %cst_35 {dimension_numbers = #tpu.dot_dimension_numbers<[1], [1], [0], [0], [0, 0, 1, 0], [], []>} : vector<4x32xbf16>, vector<4x32xbf16>, vector<4x4xf32> -> vector<4x4xf32>
    "tpu.trace_stop"() : () -> ()
    %cst_36 = arith.constant 0.176776692 : f32
    %141 = vector.broadcast %cst_36 : f32 to vector<4x4xf32>
    %142 = arith.mulf %140, %141 : vector<4x4xf32>
    %cst_37 = arith.constant dense<0xFF800000> : vector<4xf32>
    %143 = vector.multi_reduction <maximumf>, %142, %cst_37 [1] : vector<4x4xf32> to vector<4xf32>
    %144 = vector.shape_cast %143 : vector<4xf32> to vector<4x1xf32>
    %145 = vector.broadcast %144 : vector<4x1xf32> to vector<4x4xf32>
    %146 = arith.subf %142, %145 : vector<4x4xf32>
    %147 = math.exp %146 : vector<4x4xf32>
    %cst_38 = arith.constant dense<0.000000e+00> : vector<4xf32>
    %148 = vector.multi_reduction <add>, %147, %cst_38 [1] : vector<4x4xf32> to vector<4xf32>
    %149 = vector.shape_cast %148 : vector<4xf32> to vector<4x1xf32>
    %150 = tpu.reciprocal %149 {approx = true} : vector<4x1xf32> -> vector<4x1xf32>
    %151 = vector.broadcast %150 : vector<4x1xf32> to vector<4x4xf32>
    %152 = arith.mulf %147, %151 : vector<4x4xf32>
    %153 = arith.truncf %152 : vector<4x4xf32> to vector<4x4xbf16>
    %154 = arith.truncf %137 : vector<4x32xf32> to vector<4x32xbf16>
    %cst_39 = arith.constant dense<0.000000e+00> : vector<4x32xf32>
    %155 = tpu.matmul %153, %154, %cst_39 {dimension_numbers = #tpu.dot_dimension_numbers<[1], [0], [0], [1], [0, 0, 1, 1], [], []>} : vector<4x4xbf16>, vector<4x32xbf16>, vector<4x32xf32> -> vector<4x32xf32>
    %156 = vector.extract_strided_slice %7 {offsets = [4, 96], sizes = [4, 32], strides = [1, 1]} : vector<8x384xf32> to vector<4x32xf32>
    %157 = vector.extract_strided_slice %7 {offsets = [4, 224], sizes = [4, 32], strides = [1, 1]} : vector<8x384xf32> to vector<4x32xf32>
    %158 = vector.extract_strided_slice %7 {offsets = [4, 352], sizes = [4, 32], strides = [1, 1]} : vector<8x384xf32> to vector<4x32xf32>
    %159 = arith.truncf %156 : vector<4x32xf32> to vector<4x32xbf16>
    %160 = arith.truncf %157 : vector<4x32xf32> to vector<4x32xbf16>
    "tpu.trace_start"() <{level = 10 : i32, message = "qd,kd->qk"}> : () -> ()
    %cst_40 = arith.constant dense<0.000000e+00> : vector<4x4xf32>
    %161 = tpu.matmul %159, %160, %cst_40 {dimension_numbers = #tpu.dot_dimension_numbers<[1], [1], [0], [0], [0, 0, 1, 0], [], []>} : vector<4x32xbf16>, vector<4x32xbf16>, vector<4x4xf32> -> vector<4x4xf32>
    "tpu.trace_stop"() : () -> ()
    %cst_41 = arith.constant 0.176776692 : f32
    %162 = vector.broadcast %cst_41 : f32 to vector<4x4xf32>
    %163 = arith.mulf %161, %162 : vector<4x4xf32>
    %cst_42 = arith.constant dense<0xFF800000> : vector<4xf32>
    %164 = vector.multi_reduction <maximumf>, %163, %cst_42 [1] : vector<4x4xf32> to vector<4xf32>
    %165 = vector.shape_cast %164 : vector<4xf32> to vector<4x1xf32>
    %166 = vector.broadcast %165 : vector<4x1xf32> to vector<4x4xf32>
    %167 = arith.subf %163, %166 : vector<4x4xf32>
    %168 = math.exp %167 : vector<4x4xf32>
    %cst_43 = arith.constant dense<0.000000e+00> : vector<4xf32>
    %169 = vector.multi_reduction <add>, %168, %cst_43 [1] : vector<4x4xf32> to vector<4xf32>
    %170 = vector.shape_cast %169 : vector<4xf32> to vector<4x1xf32>
    %171 = tpu.reciprocal %170 {approx = true} : vector<4x1xf32> -> vector<4x1xf32>
    %172 = vector.broadcast %171 : vector<4x1xf32> to vector<4x4xf32>
    %173 = arith.mulf %168, %172 : vector<4x4xf32>
    %174 = arith.truncf %173 : vector<4x4xf32> to vector<4x4xbf16>
    %175 = arith.truncf %158 : vector<4x32xf32> to vector<4x32xbf16>
    %cst_44 = arith.constant dense<0.000000e+00> : vector<4x32xf32>
    %176 = tpu.matmul %174, %175, %cst_44 {dimension_numbers = #tpu.dot_dimension_numbers<[1], [0], [0], [1], [0, 0, 1, 1], [], []>} : vector<4x4xbf16>, vector<4x32xbf16>, vector<4x32xf32> -> vector<4x32xf32>
    %177 = tpu.concatenate %113, %134, %155, %176 in 1 : vector<4x32xf32>, vector<4x32xf32>, vector<4x32xf32>, vector<4x32xf32> -> vector<4x128xf32>
    %178 = tpu.concatenate %92, %177 in 0 : vector<4x128xf32>, vector<4x128xf32> -> vector<8x128xf32>
    %179 = arith.truncf %178 : vector<8x128xf32> to vector<8x128xbf16>
    %c0_45 = arith.constant 0 : index
    %c0_46 = arith.constant 0 : index
    %c0_47 = arith.constant 0 : index
    %180 = vector.load %arg6[%c0_45, %c0_46, %c0_47] : memref<1x128x128xbf16, #tpu.memory_space<vmem>>, vector<1x128x128xbf16>
    %181 = vector.shape_cast %180 : vector<1x128x128xbf16> to vector<128x128xbf16>
    %cst_48 = arith.constant dense<0.000000e+00> : vector<8x128xf32>
    %182 = tpu.matmul %179, %181, %cst_48 {dimension_numbers = #tpu.dot_dimension_numbers<[1], [0], [0], [1], [0, 0, 1, 1], [], []>} : vector<8x128xbf16>, vector<128x128xbf16>, vector<8x128xf32> -> vector<8x128xf32>
    %183 = arith.addf %3, %182 : vector<8x128xf32>
    %cst_49 = arith.constant dense<0.000000e+00> : vector<8xf32>
    %184 = vector.multi_reduction <add>, %183, %cst_49 [1] : vector<8x128xf32> to vector<8xf32>
    %185 = vector.shape_cast %184 : vector<8xf32> to vector<8x1xf32>
    %cst_50 = arith.constant 1.280000e+02 : f32
    %186 = vector.broadcast %cst_50 : f32 to vector<8x1xf32>
    %187 = arith.divf %185, %186 : vector<8x1xf32>
    %188 = vector.broadcast %187 : vector<8x1xf32> to vector<8x128xf32>
    %189 = arith.subf %183, %188 : vector<8x128xf32>
    %190 = arith.mulf %189, %189 : vector<8x128xf32>
    %cst_51 = arith.constant dense<0.000000e+00> : vector<8xf32>
    %191 = vector.multi_reduction <add>, %190, %cst_51 [1] : vector<8x128xf32> to vector<8xf32>
    %192 = vector.shape_cast %191 : vector<8xf32> to vector<8x1xf32>
    %cst_52 = arith.constant 1.280000e+02 : f32
    %193 = vector.broadcast %cst_52 : f32 to vector<8x1xf32>
    %194 = arith.divf %192, %193 : vector<8x1xf32>
    %195 = vector.broadcast %187 : vector<8x1xf32> to vector<8x128xf32>
    %196 = arith.subf %183, %195 : vector<8x128xf32>
    %cst_53 = arith.constant 9.99999974E-6 : f32
    %197 = vector.broadcast %cst_53 : f32 to vector<8x1xf32>
    %198 = arith.addf %194, %197 : vector<8x1xf32>
    %199 = math.rsqrt %198 : vector<8x1xf32>
    %200 = vector.broadcast %199 : vector<8x1xf32> to vector<8x128xf32>
    %201 = arith.mulf %196, %200 : vector<8x128xf32>
    %c0_54 = arith.constant 0 : index
    %c0_55 = arith.constant 0 : index
    %c0_56 = arith.constant 0 : index
    %202 = vector.load %arg7[%c0_54, %c0_55, %c0_56] : memref<1x1x128xf32, #tpu.memory_space<vmem>>, vector<1x1x128xf32>
    %203 = vector.shape_cast %202 : vector<1x1x128xf32> to vector<1x128xf32>
    %204 = vector.broadcast %203 : vector<1x128xf32> to vector<8x128xf32>
    %205 = arith.mulf %201, %204 : vector<8x128xf32>
    %206 = arith.truncf %205 : vector<8x128xf32> to vector<8x128xbf16>
    %c0_57 = arith.constant 0 : index
    %c0_58 = arith.constant 0 : index
    %c0_59 = arith.constant 0 : index
    %207 = vector.load %arg8[%c0_57, %c0_58, %c0_59] : memref<1x128x256xbf16, #tpu.memory_space<vmem>>, vector<1x128x256xbf16>
    %208 = vector.shape_cast %207 : vector<1x128x256xbf16> to vector<128x256xbf16>
    %cst_60 = arith.constant dense<0.000000e+00> : vector<8x256xf32>
    %209 = tpu.matmul %206, %208, %cst_60 {dimension_numbers = #tpu.dot_dimension_numbers<[1], [0], [0], [1], [0, 0, 1, 1], [], []>} : vector<8x128xbf16>, vector<128x256xbf16>, vector<8x256xf32> -> vector<8x256xf32>
    %210 = arith.mulf %209, %209 : vector<8x256xf32>
    %211 = arith.mulf %209, %210 : vector<8x256xf32>
    %cst_61 = arith.constant 4.471500e-02 : f32
    %212 = vector.broadcast %cst_61 : f32 to vector<8x256xf32>
    %213 = arith.mulf %212, %211 : vector<8x256xf32>
    %214 = arith.addf %209, %213 : vector<8x256xf32>
    %cst_62 = arith.constant 0.797884583 : f32
    %215 = vector.broadcast %cst_62 : f32 to vector<8x256xf32>
    %216 = arith.mulf %215, %214 : vector<8x256xf32>
    %217 = math.tanh %216 : vector<8x256xf32>
    %cst_63 = arith.constant 1.000000e+00 : f32
    %218 = vector.broadcast %cst_63 : f32 to vector<8x256xf32>
    %219 = arith.addf %218, %217 : vector<8x256xf32>
    %cst_64 = arith.constant 5.000000e-01 : f32
    %220 = vector.broadcast %cst_64 : f32 to vector<8x256xf32>
    %221 = arith.mulf %220, %219 : vector<8x256xf32>
    %222 = arith.mulf %209, %221 : vector<8x256xf32>
    %223 = arith.truncf %222 : vector<8x256xf32> to vector<8x256xbf16>
    %c0_65 = arith.constant 0 : index
    %c0_66 = arith.constant 0 : index
    %c0_67 = arith.constant 0 : index
    %224 = vector.load %arg9[%c0_65, %c0_66, %c0_67] : memref<1x256x128xbf16, #tpu.memory_space<vmem>>, vector<1x256x128xbf16>
    %225 = vector.shape_cast %224 : vector<1x256x128xbf16> to vector<256x128xbf16>
    %cst_68 = arith.constant dense<0.000000e+00> : vector<8x128xf32>
    %226 = tpu.matmul %223, %225, %cst_68 {dimension_numbers = #tpu.dot_dimension_numbers<[1], [0], [0], [1], [0, 0, 1, 1], [], []>} : vector<8x256xbf16>, vector<256x128xbf16>, vector<8x128xf32> -> vector<8x128xf32>
    %227 = arith.addf %205, %226 : vector<8x128xf32>
    %cst_69 = arith.constant dense<0.000000e+00> : vector<8xf32>
    %228 = vector.multi_reduction <add>, %227, %cst_69 [1] : vector<8x128xf32> to vector<8xf32>
    %229 = vector.shape_cast %228 : vector<8xf32> to vector<8x1xf32>
    %cst_70 = arith.constant 1.280000e+02 : f32
    %230 = vector.broadcast %cst_70 : f32 to vector<8x1xf32>
    %231 = arith.divf %229, %230 : vector<8x1xf32>
    %232 = vector.broadcast %231 : vector<8x1xf32> to vector<8x128xf32>
    %233 = arith.subf %227, %232 : vector<8x128xf32>
    %234 = arith.mulf %233, %233 : vector<8x128xf32>
    %cst_71 = arith.constant dense<0.000000e+00> : vector<8xf32>
    %235 = vector.multi_reduction <add>, %234, %cst_71 [1] : vector<8x128xf32> to vector<8xf32>
    %236 = vector.shape_cast %235 : vector<8xf32> to vector<8x1xf32>
    %cst_72 = arith.constant 1.280000e+02 : f32
    %237 = vector.broadcast %cst_72 : f32 to vector<8x1xf32>
    %238 = arith.divf %236, %237 : vector<8x1xf32>
    %239 = vector.broadcast %231 : vector<8x1xf32> to vector<8x128xf32>
    %240 = arith.subf %227, %239 : vector<8x128xf32>
    %cst_73 = arith.constant 9.99999974E-6 : f32
    %241 = vector.broadcast %cst_73 : f32 to vector<8x1xf32>
    %242 = arith.addf %238, %241 : vector<8x1xf32>
    %243 = math.rsqrt %242 : vector<8x1xf32>
    %244 = vector.broadcast %243 : vector<8x1xf32> to vector<8x128xf32>
    %245 = arith.mulf %240, %244 : vector<8x128xf32>
    %c0_74 = arith.constant 0 : index
    %c0_75 = arith.constant 0 : index
    %c0_76 = arith.constant 0 : index
    %246 = vector.load %arg10[%c0_74, %c0_75, %c0_76] : memref<1x1x128xf32, #tpu.memory_space<vmem>>, vector<1x1x128xf32>
    %247 = vector.shape_cast %246 : vector<1x1x128xf32> to vector<1x128xf32>
    %248 = vector.broadcast %247 : vector<1x128xf32> to vector<8x128xf32>
    %249 = arith.mulf %245, %248 : vector<8x128xf32>
    %c0_77 = arith.constant 0 : index
    %c0_78 = arith.constant 0 : index
    %250 = vector.load %arg22[%c0_77, %c0_78] : memref<8x128xf32, #tpu.memory_space<vmem>>, vector<8x128xf32>
    tpu.vector_store %arg22[%c0_77, %c0_78], %249 {strides = array<i32>} : memref<8x128xf32, #tpu.memory_space<vmem>>, vector<8x128xf32>,
    %c1_i32 = arith.constant 1 : i32
    %251 = arith.cmpi eq, %arg0, %c1_i32 : i32
    %252 = arith.extui %251 : i1 to i32
    %c0_i32_79 = arith.constant 0 : i32
    %253 = arith.cmpi ne, %252, %c0_i32_79 : i32
    scf.if %253 {
      %254 = vector.extract_strided_slice %249 {offsets = [0, 0], sizes = [4, 128], strides = [1, 1]} : vector<8x128xf32> to vector<4x128xf32>
      %cst_80 = arith.constant dense<0.000000e+00> : vector<128xf32>
      %255 = vector.multi_reduction <add>, %254, %cst_80 [0] : vector<4x128xf32> to vector<128xf32>
      %256 = vector.shape_cast %255 : vector<128xf32> to vector<1x128xf32>
      %cst_81 = arith.constant 4.000000e+00 : f32
      %257 = vector.broadcast %cst_81 : f32 to vector<1x128xf32>
      %258 = arith.divf %256, %257 : vector<1x128xf32>
      %259 = vector.extract_strided_slice %249 {offsets = [4, 0], sizes = [4, 128], strides = [1, 1]} : vector<8x128xf32> to vector<4x128xf32>
      %cst_82 = arith.constant dense<0.000000e+00> : vector<128xf32>
      %260 = vector.multi_reduction <add>, %259, %cst_82 [0] : vector<4x128xf32> to vector<128xf32>
      %261 = vector.shape_cast %260 : vector<128xf32> to vector<1x128xf32>
      %cst_83 = arith.constant 4.000000e+00 : f32
      %262 = vector.broadcast %cst_83 : f32 to vector<1x128xf32>
      %263 = arith.divf %261, %262 : vector<1x128xf32>
      %264 = tpu.concatenate %258, %263 in 0 : vector<1x128xf32>, vector<1x128xf32> -> vector<2x128xf32>
      %c0_84 = arith.constant 0 : index
      %c0_85 = arith.constant 0 : index
      %265 = vector.load %arg11[%c0_84, %c0_85] : memref<128x32xf32, #tpu.memory_space<vmem>>, vector<128x32xf32>
      %cst_86 = arith.constant dense<0.000000e+00> : vector<2x32xf32>
      %266 = tpu.matmul %264, %265, %cst_86 {dimension_numbers = #tpu.dot_dimension_numbers<[1], [0], [0], [1], [0, 0, 1, 1], [], []>} : vector<2x128xf32>, vector<128x32xf32>, vector<2x32xf32> -> vector<2x32xf32>
      %c0_87 = arith.constant 0 : index
      %c0_88 = arith.constant 0 : index
      %267 = vector.load %arg12[%c0_87, %c0_88] : memref<1x32xf32, #tpu.memory_space<vmem>>, vector<1x32xf32>
      %268 = vector.broadcast %267 : vector<1x32xf32> to vector<2x32xf32>
      %269 = arith.addf %266, %268 : vector<2x32xf32>
      %c0_89 = arith.constant 0 : index
      %c0_90 = arith.constant 0 : index
      %270 = vector.load %arg15[%c0_89, %c0_90] : memref<1x32xf32, #tpu.memory_space<vmem>>, vector<1x32xf32>
      %271 = vector.broadcast %270 : vector<1x32xf32> to vector<2x32xf32>
      %272 = arith.subf %269, %271 : vector<2x32xf32>
      %c0_91 = arith.constant 0 : index
      %c0_92 = arith.constant 0 : index
      %273 = vector.load %arg16[%c0_91, %c0_92] : memref<1x32xf32, #tpu.memory_space<vmem>>, vector<1x32xf32>
      %cst_93 = arith.constant 9.99999974E-6 : f32
      %274 = vector.broadcast %cst_93 : f32 to vector<1x32xf32>
      %275 = arith.addf %273, %274 : vector<1x32xf32>
      %276 = math.rsqrt %275 : vector<1x32xf32>
      %277 = vector.broadcast %276 : vector<1x32xf32> to vector<2x32xf32>
      %278 = arith.mulf %272, %277 : vector<2x32xf32>
      %c0_94 = arith.constant 0 : index
      %c0_95 = arith.constant 0 : index
      %279 = vector.load %arg13[%c0_94, %c0_95] : memref<1x32xf32, #tpu.memory_space<vmem>>, vector<1x32xf32>
      %280 = vector.broadcast %279 : vector<1x32xf32> to vector<2x32xf32>
      %281 = arith.mulf %278, %280 : vector<2x32xf32>
      %c0_96 = arith.constant 0 : index
      %c0_97 = arith.constant 0 : index
      %282 = vector.load %arg14[%c0_96, %c0_97] : memref<1x32xf32, #tpu.memory_space<vmem>>, vector<1x32xf32>
      %283 = vector.broadcast %282 : vector<1x32xf32> to vector<2x32xf32>
      %284 = arith.addf %281, %283 : vector<2x32xf32>
      %285 = arith.mulf %284, %284 : vector<2x32xf32>
      %286 = arith.mulf %284, %285 : vector<2x32xf32>
      %cst_98 = arith.constant 4.471500e-02 : f32
      %287 = vector.broadcast %cst_98 : f32 to vector<2x32xf32>
      %288 = arith.mulf %287, %286 : vector<2x32xf32>
      %289 = arith.addf %284, %288 : vector<2x32xf32>
      %cst_99 = arith.constant 0.797884583 : f32
      %290 = vector.broadcast %cst_99 : f32 to vector<2x32xf32>
      %291 = arith.mulf %290, %289 : vector<2x32xf32>
      %292 = math.tanh %291 : vector<2x32xf32>
      %cst_100 = arith.constant 1.000000e+00 : f32
      %293 = vector.broadcast %cst_100 : f32 to vector<2x32xf32>
      %294 = arith.addf %293, %292 : vector<2x32xf32>
      %cst_101 = arith.constant 5.000000e-01 : f32
      %295 = vector.broadcast %cst_101 : f32 to vector<2x32xf32>
      %296 = arith.mulf %295, %294 : vector<2x32xf32>
      %297 = arith.mulf %284, %296 : vector<2x32xf32>
      %c0_102 = arith.constant 0 : index
      %c0_103 = arith.constant 0 : index
      %298 = vector.load %arg17[%c0_102, %c0_103] : memref<32x8xf32, #tpu.memory_space<vmem>>, vector<32x8xf32>
      %cst_104 = arith.constant dense<0.000000e+00> : vector<2x8xf32>
      %299 = tpu.matmul %297, %298, %cst_104 {dimension_numbers = #tpu.dot_dimension_numbers<[1], [0], [0], [1], [0, 0, 1, 1], [], []>} : vector<2x32xf32>, vector<32x8xf32>, vector<2x8xf32> -> vector<2x8xf32>
      %c0_105 = arith.constant 0 : index
      %c0_106 = arith.constant 0 : index
      %300 = vector.load %arg18[%c0_105, %c0_106] : memref<1x8xf32, #tpu.memory_space<vmem>>, vector<1x8xf32>
      %301 = vector.broadcast %300 : vector<1x8xf32> to vector<2x8xf32>
      %302 = arith.addf %299, %301 : vector<2x8xf32>
      %c0_107 = arith.constant 0 : index
      %c0_108 = arith.constant 0 : index
      %303 = vector.load %arg19[%c0_107, %c0_108] : memref<8x4xf32, #tpu.memory_space<vmem>>, vector<8x4xf32>
      %cst_109 = arith.constant dense<0.000000e+00> : vector<2x4xf32>
      %304 = tpu.matmul %302, %303, %cst_109 {dimension_numbers = #tpu.dot_dimension_numbers<[1], [0], [0], [1], [0, 0, 1, 1], [], []>} : vector<2x8xf32>, vector<8x4xf32>, vector<2x4xf32> -> vector<2x4xf32>
      %c0_110 = arith.constant 0 : index
      %c0_111 = arith.constant 0 : index
      %305 = vector.load %arg20[%c0_110, %c0_111] : memref<1x4xf32, #tpu.memory_space<vmem>>, vector<1x4xf32>
      %306 = vector.broadcast %305 : vector<1x4xf32> to vector<2x4xf32>
      %307 = arith.addf %304, %306 : vector<2x4xf32>
      %c0_112 = arith.constant 0 : index
      %c0_113 = arith.constant 0 : index
      %308 = vector.load %arg21[%c0_112, %c0_113] : memref<2x4xf32, #tpu.memory_space<vmem>>, vector<2x4xf32>
      tpu.vector_store %arg21[%c0_112, %c0_113], %307 {strides = array<i32>} : memref<2x4xf32, #tpu.memory_space<vmem>>, vector<2x4xf32>,
    } else {
    }
    return
  }
  func.func @transform_0(%arg0: i32) -> (i32, i32) {
    %c0_i32 = arith.constant 0 : i32
    %c0_i32_0 = arith.constant 0 : i32
    %c0_i32_1 = arith.constant 0 : i32
    return %c0_i32, %c0_i32_0 : i32, i32
  }
  func.func @transform_1(%arg0: i32) -> (i32, i32) {
    %c0_i32 = arith.constant 0 : i32
    %c0_i32_0 = arith.constant 0 : i32
    %c0_i32_1 = arith.constant 0 : i32
    return %c0_i32, %c0_i32_0 : i32, i32
  }
  func.func @transform_2(%arg0: i32) -> (i32, i32) {
    %c0_i32 = arith.constant 0 : i32
    %c0_i32_0 = arith.constant 0 : i32
    %c0_i32_1 = arith.constant 0 : i32
    return %c0_i32, %c0_i32_0 : i32, i32
  }
  func.func @transform_3(%arg0: i32) -> (i32, i32) {
    %c0_i32 = arith.constant 0 : i32
    %c0_i32_0 = arith.constant 0 : i32
    %c0_i32_1 = arith.constant 0 : i32
    return %c0_i32, %c0_i32_0 : i32, i32
  }
  func.func @transform_4(%arg0: i32) -> (i32, i32, i32) {
    %c0_i32 = arith.constant 0 : i32
    %c0_i32_0 = arith.constant 0 : i32
    %c0_i32_1 = arith.constant 0 : i32
    return %arg0, %c0_i32, %c0_i32_0 : i32, i32, i32
  }
  func.func @transform_5(%arg0: i32) -> (i32, i32, i32) {
    %c0_i32 = arith.constant 0 : i32
    %c0_i32_0 = arith.constant 0 : i32
    %c0_i32_1 = arith.constant 0 : i32
    return %arg0, %c0_i32, %c0_i32_0 : i32, i32, i32
  }
  func.func @transform_6(%arg0: i32) -> (i32, i32, i32) {
    %c0_i32 = arith.constant 0 : i32
    %c0_i32_0 = arith.constant 0 : i32
    %c0_i32_1 = arith.constant 0 : i32
    return %arg0, %c0_i32, %c0_i32_0 : i32, i32, i32
  }
  func.func @transform_7(%arg0: i32) -> (i32, i32, i32) {
    %c0_i32 = arith.constant 0 : i32
    %c0_i32_0 = arith.constant 0 : i32
    %c0_i32_1 = arith.constant 0 : i32
    return %arg0, %c0_i32, %c0_i32_0 : i32, i32, i32
  }
  func.func @transform_8(%arg0: i32) -> (i32, i32, i32) {
    %c0_i32 = arith.constant 0 : i32
    %c0_i32_0 = arith.constant 0 : i32
    %c0_i32_1 = arith.constant 0 : i32
    return %arg0, %c0_i32, %c0_i32_0 : i32, i32, i32
  }
  func.func @transform_9(%arg0: i32) -> (i32, i32, i32) {
    %c0_i32 = arith.constant 0 : i32
    %c0_i32_0 = arith.constant 0 : i32
    %c0_i32_1 = arith.constant 0 : i32
    return %arg0, %c0_i32, %c0_i32_0 : i32, i32, i32
  }
  func.func @transform_10(%arg0: i32) -> (i32, i32) {
    %c0_i32 = arith.constant 0 : i32
    %c0_i32_0 = arith.constant 0 : i32
    %c0_i32_1 = arith.constant 0 : i32
    return %c0_i32, %c0_i32_0 : i32, i32
  }
  func.func @transform_11(%arg0: i32) -> (i32, i32) {
    %c0_i32 = arith.constant 0 : i32
    %c0_i32_0 = arith.constant 0 : i32
    %c0_i32_1 = arith.constant 0 : i32
    return %c0_i32, %c0_i32_0 : i32, i32
  }
  func.func @transform_12(%arg0: i32) -> (i32, i32) {
    %c0_i32 = arith.constant 0 : i32
    %c0_i32_0 = arith.constant 0 : i32
    %c0_i32_1 = arith.constant 0 : i32
    return %c0_i32, %c0_i32_0 : i32, i32
  }
  func.func @transform_13(%arg0: i32) -> (i32, i32) {
    %c0_i32 = arith.constant 0 : i32
    %c0_i32_0 = arith.constant 0 : i32
    %c0_i32_1 = arith.constant 0 : i32
    return %c0_i32, %c0_i32_0 : i32, i32
  }
  func.func @transform_14(%arg0: i32) -> (i32, i32) {
    %c0_i32 = arith.constant 0 : i32
    %c0_i32_0 = arith.constant 0 : i32
    %c0_i32_1 = arith.constant 0 : i32
    return %c0_i32, %c0_i32_0 : i32, i32
  }
  func.func @transform_15(%arg0: i32) -> (i32, i32) {
    %c0_i32 = arith.constant 0 : i32
    %c0_i32_0 = arith.constant 0 : i32
    %c0_i32_1 = arith.constant 0 : i32
    return %c0_i32, %c0_i32_0 : i32, i32
  }
  func.func @transform_16(%arg0: i32) -> (i32, i32) {
    %c0_i32 = arith.constant 0 : i32
    %c0_i32_0 = arith.constant 0 : i32
    %c0_i32_1 = arith.constant 0 : i32
    return %c0_i32, %c0_i32_0 : i32, i32
  }
  func.func @transform_17(%arg0: i32) -> (i32, i32) {
    %c0_i32 = arith.constant 0 : i32
    %c0_i32_0 = arith.constant 0 : i32
    %c0_i32_1 = arith.constant 0 : i32
    return %c0_i32, %c0_i32_0 : i32, i32
  }
  func.func @transform_18(%arg0: i32) -> (i32, i32) {
    %c0_i32 = arith.constant 0 : i32
    %c0_i32_0 = arith.constant 0 : i32
    %c0_i32_1 = arith.constant 0 : i32
    return %c0_i32, %c0_i32_0 : i32, i32
  }
  func.func @transform_19(%arg0: i32) -> (i32, i32) {
    %c0_i32 = arith.constant 0 : i32
    %c0_i32_0 = arith.constant 0 : i32
    %c0_i32_1 = arith.constant 0 : i32
    return %c0_i32, %c0_i32_0 : i32, i32
  }
  func.func @transform_20(%arg0: i32) -> (i32, i32) {
    %c0_i32 = arith.constant 0 : i32
    %c0_i32_0 = arith.constant 0 : i32
    %c0_i32_1 = arith.constant 0 : i32
    return %c0_i32, %c0_i32_0 : i32, i32
  }
}

</mosaic_0001>

<llo_original>
// kernel: tpu_custom_call.1
$region0: #{tpu_custom_call.1}
  #allocation0 [shape = 'u32[]', space=smem, size = 0x4, offset = 0x4, fixed_abs, tag = 'smem constant byte address 0x4 - core index']
  #allocation1 [shape = 'u32[144,128]{1,0:T(1,128)}', space=vmem, size = 0x12000, scoped, tag = 'internal scratch']
  #allocation2 [shape = 'f32[8,128]{1,0:T(8,128)}', space=vmem, size = 0x1000, scoped, tag = 'scratch operand']
  %s0 = inlined_call_operand.vmem [shape: f32[8,256], index: 0, kind: input, shape index: {}]
  %s1 = inlined_call_operand.vmem [shape: f32[8,128], index: 1, kind: input, shape index: {}]
  %s2 = inlined_call_operand.vmem [shape: bf16[256,128], index: 2, kind: input, shape index: {}]
  %s3 = inlined_call_operand.vmem [shape: f32[1,128], index: 3, kind: input, shape index: {}]
  %s4 = inlined_call_operand.hbm [shape: bf16[2,128,384], index: 4, kind: input, shape index: {}]
  %s5 = inlined_call_operand.hbm [shape: bf16[2,128,128], index: 5, kind: input, shape index: {}]
  %s6 = inlined_call_operand.vmem [shape: f32[2,1,128], index: 6, kind: input, shape index: {}]
  %s7 = inlined_call_operand.hbm [shape: bf16[2,128,256], index: 7, kind: input, shape index: {}]
  %s8 = inlined_call_operand.hbm [shape: bf16[2,256,128], index: 8, kind: input, shape index: {}]
  %s9 = inlined_call_operand.vmem [shape: f32[2,1,128], index: 9, kind: input, shape index: {}]
  %s10 = inlined_call_operand.vmem [shape: f32[128,32], index: 10, kind: input, shape index: {}]
  %s11 = inlined_call_operand.vmem [shape: f32[1,32], index: 11, kind: input, shape index: {}]
  %s12 = inlined_call_operand.vmem [shape: f32[1,32], index: 12, kind: input, shape index: {}]
  %s13 = inlined_call_operand.vmem [shape: f32[1,32], index: 13, kind: input, shape index: {}]
  %s14 = inlined_call_operand.vmem [shape: f32[1,32], index: 14, kind: input, shape index: {}]
  %s15 = inlined_call_operand.vmem [shape: f32[1,32], index: 15, kind: input, shape index: {}]
  %s16 = inlined_call_operand.vmem [shape: f32[32,8], index: 16, kind: input, shape index: {}]
  %s17 = inlined_call_operand.vmem [shape: f32[1,8], index: 17, kind: input, shape index: {}]
  %s18 = inlined_call_operand.vmem [shape: f32[8,4], index: 18, kind: input, shape index: {}]
  %s19 = inlined_call_operand.vmem [shape: f32[1,4], index: 19, kind: input, shape index: {}]
  %s20 = inlined_call_operand.hbm [shape: f32[2,4], index: 20, kind: output, shape index: {}]
  %s21 = sld [smem:[#allocation0]]
  $region137: #{tpu_custom_call.1} parent=0
    _
  %s23 = ssub.s32 1, %s21
  %s24 = scalar_select 0, %s23, %s21
  $region1: #{tpu_custom_call.1} parent=0
    #allocation3 [shape = 'u8[196608]{0}', space=vmem, size = 0x30000, scoped, tag = 'input window, operand 4']
    #allocation4 [shape = 's32[2]{0}', space=sflag, size = 0x8, scoped, tag = 'scoped memory for tpu_custom_call.1']
    #allocation5 [shape = 's32[2]{0}', space=sflag, size = 0x8, scoped, tag = 'scoped memory for tpu_custom_call.1']
    #allocation6 [shape = 'u8[65536]{0}', space=vmem, size = 0x10000, scoped, tag = 'input window, operand 5']
    #allocation7 [shape = 's32[2]{0}', space=sflag, size = 0x8, scoped, tag = 'scoped memory for tpu_custom_call.1']
    #allocation8 [shape = 'u8[131072]{0}', space=vmem, size = 0x20000, scoped, tag = 'input window, operand 7']
    #allocation9 [shape = 'u8[131072]{0}', space=vmem, size = 0x20000, scoped, tag = 'input window, operand 8']
    #allocation10 [shape = 's32[2]{0}', space=sflag, size = 0x8, scoped, tag = 'scoped memory for tpu_custom_call.1']
    #allocation11 [shape = 'u8[1024]{0}', space=vmem, size = 0x400, scoped, tag = 'output window, operand 0, single buffered']
    %25 = vsyncpa [#allocation4], 0
    %s26 = scalar_lea.sflag [#allocation4], 1
    %27 = vsyncpa %s26, 0
    %28 = vsyncpa [#allocation7], 0
    %s29 = scalar_lea.sflag [#allocation7], 1
    %30 = vsyncpa %s29, 0
    %31 = vsyncpa [#allocation10], 0
    %s32 = scalar_lea.sflag [#allocation10], 1
    %33 = vsyncpa %s32, 0
    %34 = vsyncpa [#allocation5], 0
    loop: start=0, step=1, limit=4
    $region2: #{tpu_custom_call.1} parent=1 // loop_pre_header
      _
    $region3: #{tpu_custom_call.1} parent=1 // loop_header
      %s36 = sphi 0, %s40
      %p37 = scmp.ge.s32.totalorder %s36, 4
      %s44 = sphi 0, %s44
      %s46 = sphi 0, %s44
      %s47 = sphi 0, %s46
      %s61 = sphi 0, %s47
      %s65 = sphi 0, %s65
      %s67 = sphi 0, %s65
      %s68 = sphi 0, %s67
      %s82 = sphi 0, %s68
      %s86 = sphi 0, %s86
      %s88 = sphi 0, %s86
      %s89 = sphi 0, %s88
      %s103 = sphi 0, %s89
      %s107 = sphi 0, %s107
      %s109 = sphi 0, %s107
      %s110 = sphi 0, %s109
      %s124 = sphi 0, %s110
      %s130 = sphi 0, %s132
      %s133 = sphi 0, %s130
      %s134 = sphi 0, %s133
      %s150 = sphi 0, %s134
      %s156 = sphi 0, %s158
      %s159 = sphi 0, %s156
      %s160 = sphi 0, %s159
      %s176 = sphi 0, %s160
      %s182 = sphi 0, %s184
      %s185 = sphi 0, %s182
      %s186 = sphi 0, %s185
      %s202 = sphi 0, %s186
      %s208 = sphi 0, %s210
      %s211 = sphi 0, %s208
      %s212 = sphi 0, %s211
      %s228 = sphi 0, %s212
      %s234 = sphi 0, %s236
      %s237 = sphi 0, %s234
      %s238 = sphi 0, %s237
      %s254 = sphi 0, %s238
      %s260 = sphi 0, %s262
      %s263 = sphi 0, %s260
      %s264 = sphi 0, %s263
      %s280 = sphi 0, %s264
      %s284 = sphi 0, %s284
      %s286 = sphi 0, %s284
      %s287 = sphi 0, %s286
      %s301 = sphi 0, %s287
      %s305 = sphi 0, %s305
      %s307 = sphi 0, %s305
      %s308 = sphi 0, %s307
      %s322 = sphi 0, %s308
      %s326 = sphi 0, %s326
      %s328 = sphi 0, %s326
      %s329 = sphi 0, %s328
      %s343 = sphi 0, %s329
      %s347 = sphi 0, %s347
      %s349 = sphi 0, %s347
      %s350 = sphi 0, %s349
      %s364 = sphi 0, %s350
      %s368 = sphi 0, %s368
      %s370 = sphi 0, %s368
      %s371 = sphi 0, %s370
      %s385 = sphi 0, %s371
      %s389 = sphi 0, %s389
      %s391 = sphi 0, %s389
      %s392 = sphi 0, %s391
      %s406 = sphi 0, %s392
      %s410 = sphi 0, %s410
      %s412 = sphi 0, %s410
      %s413 = sphi 0, %s412
      %s427 = sphi 0, %s413
      %s431 = sphi 0, %s431
      %s433 = sphi 0, %s431
      %s434 = sphi 0, %s433
      %s448 = sphi 0, %s434
      %s452 = sphi 0, %s452
      %s454 = sphi 0, %s452
      %s455 = sphi 0, %s454
      %s469 = sphi 0, %s455
      %s473 = sphi 0, %s473
      %s475 = sphi 0, %s473
      %s476 = sphi 0, %s475
      %s490 = sphi 0, %s476
      %s494 = sphi 0, %s494
      %s496 = sphi 0, %s494
      %s497 = sphi 0, %s496
      %s511 = sphi 0, %s497
    $region4: #{tpu_custom_call.1} parent=1 // loop_header_branch
      %39 = sbr.rel (%p37) target = $region8
    $region5: #{tpu_custom_call.1} parent=1 // loop_body
      %s41 = ssub.s32 %s36, 1
      %s42 = ssub.s32 %s36, 2
      %s43 = sadd.s32 %s36, 1
      %s45 = sadd.s32 %s44, 1
      %p48 = scmp.eq.s32.totalorder %s36, 1
      %p49 = scmp.ne.s32.totalorder %s44, %s46
      %p50 = scmp.eq.s32.totalorder %s36, 0
      %p51 = por %p49, %p50
      %p52 = scmp.ne.s32.totalorder %s44, %s46
      %p53 = scmp.eq.s32.totalorder %s41, 1
      %p54 = por %p52, %p53
      %p55 = scmp.ne.s32.totalorder %s46, %s47
      %p56 = scmp.eq.s32.totalorder %s41, 0
      %p57 = por %p55, %p56
      %p58 = scmp.ne.s32.totalorder %s46, %s47
      %p59 = scmp.eq.s32.totalorder %s42, 1
      %p60 = por %p58, %p59
      %p62 = scmp.ne.s32.totalorder %s47, %s61
      %p63 = scmp.eq.s32.totalorder %s42, 0
      %p64 = por %p62, %p63
      %s66 = sadd.s32 %s65, 1
      %p69 = scmp.eq.s32.totalorder %s36, 1
      %p70 = scmp.ne.s32.totalorder %s65, %s67
      %p71 = scmp.eq.s32.totalorder %s36, 0
      %p72 = por %p70, %p71
      %p73 = scmp.ne.s32.totalorder %s65, %s67
      %p74 = scmp.eq.s32.totalorder %s41, 1
      %p75 = por %p73, %p74
      %p76 = scmp.ne.s32.totalorder %s67, %s68
      %p77 = scmp.eq.s32.totalorder %s41, 0
      %p78 = por %p76, %p77
      %p79 = scmp.ne.s32.totalorder %s67, %s68
      %p80 = scmp.eq.s32.totalorder %s42, 1
      %p81 = por %p79, %p80
      %p83 = scmp.ne.s32.totalorder %s68, %s82
      %p84 = scmp.eq.s32.totalorder %s42, 0
      %p85 = por %p83, %p84
      %s87 = sadd.s32 %s86, 1
      %p90 = scmp.eq.s32.totalorder %s36, 1
      %p91 = scmp.ne.s32.totalorder %s86, %s88
      %p92 = scmp.eq.s32.totalorder %s36, 0
      %p93 = por %p91, %p92
      %p94 = scmp.ne.s32.totalorder %s86, %s88
      %p95 = scmp.eq.s32.totalorder %s41, 1
      %p96 = por %p94, %p95
      %p97 = scmp.ne.s32.totalorder %s88, %s89
      %p98 = scmp.eq.s32.totalorder %s41, 0
      %p99 = por %p97, %p98
      %p100 = scmp.ne.s32.totalorder %s88, %s89
      %p101 = scmp.eq.s32.totalorder %s42, 1
      %p102 = por %p100, %p101
      %p104 = scmp.ne.s32.totalorder %s89, %s103
      %p105 = scmp.eq.s32.totalorder %s42, 0
      %p106 = por %p104, %p105
      %s108 = sadd.s32 %s107, 1
      %p111 = scmp.eq.s32.totalorder %s36, 1
      %p112 = scmp.ne.s32.totalorder %s107, %s109
      %p113 = scmp.eq.s32.totalorder %s36, 0
      %p114 = por %p112, %p113
      %p115 = scmp.ne.s32.totalorder %s107, %s109
      %p116 = scmp.eq.s32.totalorder %s41, 1
      %p117 = por %p115, %p116
      %p118 = scmp.ne.s32.totalorder %s109, %s110
      %p119 = scmp.eq.s32.totalorder %s41, 0
      %p120 = por %p118, %p119
      %p121 = scmp.ne.s32.totalorder %s109, %s110
      %p122 = scmp.eq.s32.totalorder %s42, 1
      %p123 = por %p121, %p122
      %p125 = scmp.ne.s32.totalorder %s110, %s124
      %p126 = scmp.eq.s32.totalorder %s42, 0
      %p127 = por %p125, %p126
      %s128 = ssub.s32 %s36, %s43
      %p129 = scmp.eq.s32.totalorder %s128, 0
      %s131 = sadd.s32 %s130, 1
      %s132 = scalar_select %p129, %s130, %s131
      %p135 = pneg %p129
      %p136 = scmp.eq.s32.totalorder %s36, 1
      %p137 = por %p135, %p136
      %p138 = scmp.ne.s32.totalorder %s130, %s133
      %p139 = scmp.eq.s32.totalorder %s36, 0
      %p140 = por %p138, %p139
      %p141 = scmp.ne.s32.totalorder %s130, %s133
      %p142 = scmp.eq.s32.totalorder %s41, 1
      %p143 = por %p141, %p142
      %p144 = scmp.ne.s32.totalorder %s133, %s134
      %p145 = scmp.eq.s32.totalorder %s41, 0
      %p146 = por %p144, %p145
      %p147 = scmp.ne.s32.totalorder %s133, %s134
      %p148 = scmp.eq.s32.totalorder %s42, 1
      %p149 = por %p147, %p148
      %p151 = scmp.ne.s32.totalorder %s134, %s150
      %p152 = scmp.eq.s32.totalorder %s42, 0
      %p153 = por %p151, %p152
      %s154 = ssub.s32 %s36, %s43
      %p155 = scmp.eq.s32.totalorder %s154, 0
      %s157 = sadd.s32 %s156, 1
      %s158 = scalar_select %p155, %s156, %s157
      %p161 = pneg %p155
      %p162 = scmp.eq.s32.totalorder %s36, 1
      %p163 = por %p161, %p162
      %p164 = scmp.ne.s32.totalorder %s156, %s159
      %p165 = scmp.eq.s32.totalorder %s36, 0
      %p166 = por %p164, %p165
      %p167 = scmp.ne.s32.totalorder %s156, %s159
      %p168 = scmp.eq.s32.totalorder %s41, 1
      %p169 = por %p167, %p168
      %p170 = scmp.ne.s32.totalorder %s159, %s160
      %p171 = scmp.eq.s32.totalorder %s41, 0
      %p172 = por %p170, %p171
      %p173 = scmp.ne.s32.totalorder %s159, %s160
      %p174 = scmp.eq.s32.totalorder %s42, 1
      %p175 = por %p173, %p174
      %p177 = scmp.ne.s32.totalorder %s160, %s176
      %p178 = scmp.eq.s32.totalorder %s42, 0
      %p179 = por %p177, %p178
      %s180 = ssub.s32 %s36, %s43
      %p181 = scmp.eq.s32.totalorder %s180, 0
      %s183 = sadd.s32 %s182, 1
      %s184 = scalar_select %p181, %s182, %s183
      %p187 = pneg %p181
      %p188 = scmp.eq.s32.totalorder %s36, 1
      %p189 = por %p187, %p188
      %p190 = scmp.ne.s32.totalorder %s182, %s185
      %p191 = scmp.eq.s32.totalorder %s36, 0
      %p192 = por %p190, %p191
      %p193 = scmp.ne.s32.totalorder %s182, %s185
      %p194 = scmp.eq.s32.totalorder %s41, 1
      %p195 = por %p193, %p194
      %p196 = scmp.ne.s32.totalorder %s185, %s186
      %p197 = scmp.eq.s32.totalorder %s41, 0
      %p198 = por %p196, %p197
      %p199 = scmp.ne.s32.totalorder %s185, %s186
      %p200 = scmp.eq.s32.totalorder %s42, 1
      %p201 = por %p199, %p200
      %p203 = scmp.ne.s32.totalorder %s186, %s202
      %p204 = scmp.eq.s32.totalorder %s42, 0
      %p205 = por %p203, %p204
      %s206 = ssub.s32 %s36, %s43
      %p207 = scmp.eq.s32.totalorder %s206, 0
      %s209 = sadd.s32 %s208, 1
      %s210 = scalar_select %p207, %s208, %s209
      %p213 = pneg %p207
      %p214 = scmp.eq.s32.totalorder %s36, 1
      %p215 = por %p213, %p214
      %p216 = scmp.ne.s32.totalorder %s208, %s211
      %p217 = scmp.eq.s32.totalorder %s36, 0
      %p218 = por %p216, %p217
      %p219 = scmp.ne.s32.totalorder %s208, %s211
      %p220 = scmp.eq.s32.totalorder %s41, 1
      %p221 = por %p219, %p220
      %p222 = scmp.ne.s32.totalorder %s211, %s212
      %p223 = scmp.eq.s32.totalorder %s41, 0
      %p224 = por %p222, %p223
      %p225 = scmp.ne.s32.totalorder %s211, %s212
      %p226 = scmp.eq.s32.totalorder %s42, 1
      %p227 = por %p225, %p226
      %p229 = scmp.ne.s32.totalorder %s212, %s228
      %p230 = scmp.eq.s32.totalorder %s42, 0
      %p231 = por %p229, %p230
      %s232 = ssub.s32 %s36, %s43
      %p233 = scmp.eq.s32.totalorder %s232, 0
      %s235 = sadd.s32 %s234, 1
      %s236 = scalar_select %p233, %s234, %s235
      %p239 = pneg %p233
      %p240 = scmp.eq.s32.totalorder %s36, 1
      %p241 = por %p239, %p240
      %p242 = scmp.ne.s32.totalorder %s234, %s237
      %p243 = scmp.eq.s32.totalorder %s36, 0
      %p244 = por %p242, %p243
      %p245 = scmp.ne.s32.totalorder %s234, %s237
      %p246 = scmp.eq.s32.totalorder %s41, 1
      %p247 = por %p245, %p246
      %p248 = scmp.ne.s32.totalorder %s237, %s238
      %p249 = scmp.eq.s32.totalorder %s41, 0
      %p250 = por %p248, %p249
      %p251 = scmp.ne.s32.totalorder %s237, %s238
      %p252 = scmp.eq.s32.totalorder %s42, 1
      %p253 = por %p251, %p252
      %p255 = scmp.ne.s32.totalorder %s238, %s254
      %p256 = scmp.eq.s32.totalorder %s42, 0
      %p257 = por %p255, %p256
      %s258 = ssub.s32 %s36, %s43
      %p259 = scmp.eq.s32.totalorder %s258, 0
      %s261 = sadd.s32 %s260, 1
      %s262 = scalar_select %p259, %s260, %s261
      %p265 = pneg %p259
      %p266 = scmp.eq.s32.totalorder %s36, 1
      %p267 = por %p265, %p266
      %p268 = scmp.ne.s32.totalorder %s260, %s263
      %p269 = scmp.eq.s32.totalorder %s36, 0
      %p270 = por %p268, %p269
      %p271 = scmp.ne.s32.totalorder %s260, %s263
      %p272 = scmp.eq.s32.totalorder %s41, 1
      %p273 = por %p271, %p272
      %p274 = scmp.ne.s32.totalorder %s263, %s264
      %p275 = scmp.eq.s32.totalorder %s41, 0
      %p276 = por %p274, %p275
      %p277 = scmp.ne.s32.totalorder %s263, %s264
      %p278 = scmp.eq.s32.totalorder %s42, 1
      %p279 = por %p277, %p278
      %p281 = scmp.ne.s32.totalorder %s264, %s280
      %p282 = scmp.eq.s32.totalorder %s42, 0
      %p283 = por %p281, %p282
      %s285 = sadd.s32 %s284, 1
      %p288 = scmp.eq.s32.totalorder %s36, 1
      %p289 = scmp.ne.s32.totalorder %s284, %s286
      %p290 = scmp.eq.s32.totalorder %s36, 0
      %p291 = por %p289, %p290
      %p292 = scmp.ne.s32.totalorder %s284, %s286
      %p293 = scmp.eq.s32.totalorder %s41, 1
      %p294 = por %p292, %p293
      %p295 = scmp.ne.s32.totalorder %s286, %s287
      %p296 = scmp.eq.s32.totalorder %s41, 0
      %p297 = por %p295, %p296
      %p298 = scmp.ne.s32.totalorder %s286, %s287
      %p299 = scmp.eq.s32.totalorder %s42, 1
      %p300 = por %p298, %p299
      %p302 = scmp.ne.s32.totalorder %s287, %s301
      %p303 = scmp.eq.s32.totalorder %s42, 0
      %p304 = por %p302, %p303
      %s306 = sadd.s32 %s305, 1
      %p309 = scmp.eq.s32.totalorder %s36, 1
      %p310 = scmp.ne.s32.totalorder %s305, %s307
      %p311 = scmp.eq.s32.totalorder %s36, 0
      %p312 = por %p310, %p311
      %p313 = scmp.ne.s32.totalorder %s305, %s307
      %p314 = scmp.eq.s32.totalorder %s41, 1
      %p315 = por %p313, %p314
      %p316 = scmp.ne.s32.totalorder %s307, %s308
      %p317 = scmp.eq.s32.totalorder %s41, 0
      %p318 = por %p316, %p317
      %p319 = scmp.ne.s32.totalorder %s307, %s308
      %p320 = scmp.eq.s32.totalorder %s42, 1
      %p321 = por %p319, %p320
      %p323 = scmp.ne.s32.totalorder %s308, %s322
      %p324 = scmp.eq.s32.totalorder %s42, 0
      %p325 = por %p323, %p324
      %s327 = sadd.s32 %s326, 1
      %p330 = scmp.eq.s32.totalorder %s36, 1
      %p331 = scmp.ne.s32.totalorder %s326, %s328
      %p332 = scmp.eq.s32.totalorder %s36, 0
      %p333 = por %p331, %p332
      %p334 = scmp.ne.s32.totalorder %s326, %s328
      %p335 = scmp.eq.s32.totalorder %s41, 1
      %p336 = por %p334, %p335
      %p337 = scmp.ne.s32.totalorder %s328, %s329
      %p338 = scmp.eq.s32.totalorder %s41, 0
      %p339 = por %p337, %p338
      %p340 = scmp.ne.s32.totalorder %s328, %s329
      %p341 = scmp.eq.s32.totalorder %s42, 1
      %p342 = por %p340, %p341
      %p344 = scmp.ne.s32.totalorder %s329, %s343
      %p345 = scmp.eq.s32.totalorder %s42, 0
      %p346 = por %p344, %p345
      %s348 = sadd.s32 %s347, 1
      %p351 = scmp.eq.s32.totalorder %s36, 1
      %p352 = scmp.ne.s32.totalorder %s347, %s349
      %p353 = scmp.eq.s32.totalorder %s36, 0
      %p354 = por %p352, %p353
      %p355 = scmp.ne.s32.totalorder %s347, %s349
      %p356 = scmp.eq.s32.totalorder %s41, 1
      %p357 = por %p355, %p356
      %p358 = scmp.ne.s32.totalorder %s349, %s350
      %p359 = scmp.eq.s32.totalorder %s41, 0
      %p360 = por %p358, %p359
      %p361 = scmp.ne.s32.totalorder %s349, %s350
      %p362 = scmp.eq.s32.totalorder %s42, 1
      %p363 = por %p361, %p362
      %p365 = scmp.ne.s32.totalorder %s350, %s364
      %p366 = scmp.eq.s32.totalorder %s42, 0
      %p367 = por %p365, %p366
      %s369 = sadd.s32 %s368, 1
      %p372 = scmp.eq.s32.totalorder %s36, 1
      %p373 = scmp.ne.s32.totalorder %s368, %s370
      %p374 = scmp.eq.s32.totalorder %s36, 0
      %p375 = por %p373, %p374
      %p376 = scmp.ne.s32.totalorder %s368, %s370
      %p377 = scmp.eq.s32.totalorder %s41, 1
      %p378 = por %p376, %p377
      %p379 = scmp.ne.s32.totalorder %s370, %s371
      %p380 = scmp.eq.s32.totalorder %s41, 0
      %p381 = por %p379, %p380
      %p382 = scmp.ne.s32.totalorder %s370, %s371
      %p383 = scmp.eq.s32.totalorder %s42, 1
      %p384 = por %p382, %p383
      %p386 = scmp.ne.s32.totalorder %s371, %s385
      %p387 = scmp.eq.s32.totalorder %s42, 0
      %p388 = por %p386, %p387
      %s390 = sadd.s32 %s389, 1
      %p393 = scmp.eq.s32.totalorder %s36, 1
      %p394 = scmp.ne.s32.totalorder %s389, %s391
      %p395 = scmp.eq.s32.totalorder %s36, 0
      %p396 = por %p394, %p395
      %p397 = scmp.ne.s32.totalorder %s389, %s391
      %p398 = scmp.eq.s32.totalorder %s41, 1
      %p399 = por %p397, %p398
      %p400 = scmp.ne.s32.totalorder %s391, %s392
      %p401 = scmp.eq.s32.totalorder %s41, 0
      %p402 = por %p400, %p401
      %p403 = scmp.ne.s32.totalorder %s391, %s392
      %p404 = scmp.eq.s32.totalorder %s42, 1
      %p405 = por %p403, %p404
      %p407 = scmp.ne.s32.totalorder %s392, %s406
      %p408 = scmp.eq.s32.totalorder %s42, 0
      %p409 = por %p407, %p408
      %s411 = sadd.s32 %s410, 1
      %p414 = scmp.eq.s32.totalorder %s36, 1
      %p415 = scmp.ne.s32.totalorder %s410, %s412
      %p416 = scmp.eq.s32.totalorder %s36, 0
      %p417 = por %p415, %p416
      %p418 = scmp.ne.s32.totalorder %s410, %s412
      %p419 = scmp.eq.s32.totalorder %s41, 1
      %p420 = por %p418, %p419
      %p421 = scmp.ne.s32.totalorder %s412, %s413
      %p422 = scmp.eq.s32.totalorder %s41, 0
      %p423 = por %p421, %p422
      %p424 = scmp.ne.s32.totalorder %s412, %s413
      %p425 = scmp.eq.s32.totalorder %s42, 1
      %p426 = por %p424, %p425
      %p428 = scmp.ne.s32.totalorder %s413, %s427
      %p429 = scmp.eq.s32.totalorder %s42, 0
      %p430 = por %p428, %p429
      %s432 = sadd.s32 %s431, 1
      %p435 = scmp.eq.s32.totalorder %s36, 1
      %p436 = scmp.ne.s32.totalorder %s431, %s433
      %p437 = scmp.eq.s32.totalorder %s36, 0
      %p438 = por %p436, %p437
      %p439 = scmp.ne.s32.totalorder %s431, %s433
      %p440 = scmp.eq.s32.totalorder %s41, 1
      %p441 = por %p439, %p440
      %p442 = scmp.ne.s32.totalorder %s433, %s434
      %p443 = scmp.eq.s32.totalorder %s41, 0
      %p444 = por %p442, %p443
      %p445 = scmp.ne.s32.totalorder %s433, %s434
      %p446 = scmp.eq.s32.totalorder %s42, 1
      %p447 = por %p445, %p446
      %p449 = scmp.ne.s32.totalorder %s434, %s448
      %p450 = scmp.eq.s32.totalorder %s42, 0
      %p451 = por %p449, %p450
      %s453 = sadd.s32 %s452, 1
      %p456 = scmp.eq.s32.totalorder %s36, 1
      %p457 = scmp.ne.s32.totalorder %s452, %s454
      %p458 = scmp.eq.s32.totalorder %s36, 0
      %p459 = por %p457, %p458
      %p460 = scmp.ne.s32.totalorder %s452, %s454
      %p461 = scmp.eq.s32.totalorder %s41, 1
      %p462 = por %p460, %p461
      %p463 = scmp.ne.s32.totalorder %s454, %s455
      %p464 = scmp.eq.s32.totalorder %s41, 0
      %p465 = por %p463, %p464
      %p466 = scmp.ne.s32.totalorder %s454, %s455
      %p467 = scmp.eq.s32.totalorder %s42, 1
      %p468 = por %p466, %p467
      %p470 = scmp.ne.s32.totalorder %s455, %s469
      %p471 = scmp.eq.s32.totalorder %s42, 0
      %p472 = por %p470, %p471
      %s474 = sadd.s32 %s473, 1
      %p477 = scmp.eq.s32.totalorder %s36, 1
      %p478 = scmp.ne.s32.totalorder %s473, %s475
      %p479 = scmp.eq.s32.totalorder %s36, 0
      %p480 = por %p478, %p479
      %p481 = scmp.ne.s32.totalorder %s473, %s475
      %p482 = scmp.eq.s32.totalorder %s41, 1
      %p483 = por %p481, %p482
      %p484 = scmp.ne.s32.totalorder %s475, %s476
      %p485 = scmp.eq.s32.totalorder %s41, 0
      %p486 = por %p484, %p485
      %p487 = scmp.ne.s32.totalorder %s475, %s476
      %p488 = scmp.eq.s32.totalorder %s42, 1
      %p489 = por %p487, %p488
      %p491 = scmp.ne.s32.totalorder %s476, %s490
      %p492 = scmp.eq.s32.totalorder %s42, 0
      %p493 = por %p491, %p492
      %s495 = sadd.s32 %s494, 1
      %p498 = scmp.eq.s32.totalorder %s36, 1
      %p499 = scmp.ne.s32.totalorder %s494, %s496
      %p500 = scmp.eq.s32.totalorder %s36, 0
      %p501 = por %p499, %p500
      %p502 = scmp.ne.s32.totalorder %s494, %s496
      %p503 = scmp.eq.s32.totalorder %s41, 1
      %p504 = por %p502, %p503
      %p505 = scmp.ne.s32.totalorder %s496, %s497
      %p506 = scmp.eq.s32.totalorder %s41, 0
      %p507 = por %p505, %p506
      %p508 = scmp.ne.s32.totalorder %s496, %s497
      %p509 = scmp.eq.s32.totalorder %s42, 1
      %p510 = por %p508, %p509
      %p512 = scmp.ne.s32.totalorder %s497, %s511
      %p513 = scmp.eq.s32.totalorder %s42, 0
      %p514 = por %p512, %p513
      %p515 = scmp.le.s32.totalorder 1, %s36
      %p516 = scmp.lt.s32.totalorder %s36, 3
      %p517 = pnand %p515, %p516
      %p518 = pneg %p517
      // Predicated region
      $region9: #{tpu_custom_call.1} parent=5 // pred_check
        _
      $region10: #{tpu_custom_call.1} parent=5 // pred_check_branch
        %520 = sbr.rel (%p517) target = $region12
      $region11: #{tpu_custom_call.1} parent=5 // pred_region
        %s521 = ssub.s32 %s36, 1
        // Predicated region
        $region13: #{tpu_custom_call.1} parent=11 // pred_check
          %p522 = pneg %p57
        $region14: #{tpu_custom_call.1} parent=11 // pred_check_branch
          %524 = sbr.rel (%p522) target = $region16
        $region15: #{tpu_custom_call.1} parent=11 // pred_region
          _
        $region16: #{tpu_custom_call.1} parent=11 // pred_fallthru
          _
        // Predicated region
        $region17: #{tpu_custom_call.1} parent=11 // pred_check
          %p525 = pneg %p78
        $region18: #{tpu_custom_call.1} parent=11 // pred_check_branch
          %527 = sbr.rel (%p525) target = $region20
        $region19: #{tpu_custom_call.1} parent=11 // pred_region
          _
        $region20: #{tpu_custom_call.1} parent=11 // pred_fallthru
          _
        // Predicated region
        $region21: #{tpu_custom_call.1} parent=11 // pred_check
          %p528 = pneg %p99
        $region22: #{tpu_custom_call.1} parent=11 // pred_check_branch
          %530 = sbr.rel (%p528) target = $region24
        $region23: #{tpu_custom_call.1} parent=11 // pred_region
          _
        $region24: #{tpu_custom_call.1} parent=11 // pred_fallthru
          _
        // Predicated region
        $region25: #{tpu_custom_call.1} parent=11 // pred_check
          %p531 = pneg %p120
        $region26: #{tpu_custom_call.1} parent=11 // pred_check_branch
          %533 = sbr.rel (%p531) target = $region28
        $region27: #{tpu_custom_call.1} parent=11 // pred_region
          _
        $region28: #{tpu_custom_call.1} parent=11 // pred_fallthru
          _
        // Predicated region
        $region29: #{tpu_custom_call.1} parent=11 // pred_check
          %p534 = pneg %p297
        $region30: #{tpu_custom_call.1} parent=11 // pred_check_branch
          %536 = sbr.rel (%p534) target = $region32
        $region31: #{tpu_custom_call.1} parent=11 // pred_region
          _
        $region32: #{tpu_custom_call.1} parent=11 // pred_fallthru
          _
        // Predicated region
        $region33: #{tpu_custom_call.1} parent=11 // pred_check
          %p537 = pneg %p318
        $region34: #{tpu_custom_call.1} parent=11 // pred_check_branch
          %539 = sbr.rel (%p537) target = $region36
        $region35: #{tpu_custom_call.1} parent=11 // pred_region
          _
        $region36: #{tpu_custom_call.1} parent=11 // pred_fallthru
          _
        // Predicated region
        $region37: #{tpu_custom_call.1} parent=11 // pred_check
          %p540 = pneg %p339
        $region38: #{tpu_custom_call.1} parent=11 // pred_check_branch
          %542 = sbr.rel (%p540) target = $region40
        $region39: #{tpu_custom_call.1} parent=11 // pred_region
          _
        $region40: #{tpu_custom_call.1} parent=11 // pred_fallthru
          _
        // Predicated region
        $region41: #{tpu_custom_call.1} parent=11 // pred_check
          %p543 = pneg %p360
        $region42: #{tpu_custom_call.1} parent=11 // pred_check_branch
          %545 = sbr.rel (%p543) target = $region44
        $region43: #{tpu_custom_call.1} parent=11 // pred_region
          _
        $region44: #{tpu_custom_call.1} parent=11 // pred_fallthru
          _
        // Predicated region
        $region45: #{tpu_custom_call.1} parent=11 // pred_check
          %p546 = pneg %p381
        $region46: #{tpu_custom_call.1} parent=11 // pred_check_branch
          %548 = sbr.rel (%p546) target = $region48
        $region47: #{tpu_custom_call.1} parent=11 // pred_region
          _
        $region48: #{tpu_custom_call.1} parent=11 // pred_fallthru
          _
        // Predicated region
        $region49: #{tpu_custom_call.1} parent=11 // pred_check
          %p549 = pneg %p402
        $region50: #{tpu_custom_call.1} parent=11 // pred_check_branch
          %551 = sbr.rel (%p549) target = $region52
        $region51: #{tpu_custom_call.1} parent=11 // pred_region
          _
        $region52: #{tpu_custom_call.1} parent=11 // pred_fallthru
          _
        // Predicated region
        $region53: #{tpu_custom_call.1} parent=11 // pred_check
          %p552 = pneg %p423
        $region54: #{tpu_custom_call.1} parent=11 // pred_check_branch
          %554 = sbr.rel (%p552) target = $region56
        $region55: #{tpu_custom_call.1} parent=11 // pred_region
          _
        $region56: #{tpu_custom_call.1} parent=11 // pred_fallthru
          _
        // Predicated region
        $region57: #{tpu_custom_call.1} parent=11 // pred_check
          %p555 = pneg %p444
        $region58: #{tpu_custom_call.1} parent=11 // pred_check_branch
          %557 = sbr.rel (%p555) target = $region60
        $region59: #{tpu_custom_call.1} parent=11 // pred_region
          _
        $region60: #{tpu_custom_call.1} parent=11 // pred_fallthru
          _
        // Predicated region
        $region61: #{tpu_custom_call.1} parent=11 // pred_check
          %p558 = pneg %p465
        $region62: #{tpu_custom_call.1} parent=11 // pred_check_branch
          %560 = sbr.rel (%p558) target = $region64
        $region63: #{tpu_custom_call.1} parent=11 // pred_region
          _
        $region64: #{tpu_custom_call.1} parent=11 // pred_fallthru
          _
        // Predicated region
        $region65: #{tpu_custom_call.1} parent=11 // pred_check
          %p561 = pneg %p486
        $region66: #{tpu_custom_call.1} parent=11 // pred_check_branch
          %563 = sbr.rel (%p561) target = $region68
        $region67: #{tpu_custom_call.1} parent=11 // pred_region
          _
        $region68: #{tpu_custom_call.1} parent=11 // pred_fallthru
          _
      $region12: #{tpu_custom_call.1} parent=5 // pred_fallthru
        _
      %p564 = scmp.lt.s32.totalorder %s36, 2
      // Predicated region
      $region69: #{tpu_custom_call.1} parent=5 // pred_check
        %p565 = pneg %p564
      $region70: #{tpu_custom_call.1} parent=5 // pred_check_branch
        %567 = sbr.rel (%p565) target = $region72
      $region71: #{tpu_custom_call.1} parent=5 // pred_region
        // Predicated region
        $region73: #{tpu_custom_call.1} parent=71 // pred_check
          %p568 = pneg %p140
        $region74: #{tpu_custom_call.1} parent=71 // pred_check_branch
          %570 = sbr.rel (%p568) target = $region76
        $region75: #{tpu_custom_call.1} parent=71 // pred_region
          %s571 = sand.u32 %s130, 1
          %s572 = scalar_lea.sflag [#allocation4], %s571
          %s573 = sand.u32 %s130, 1
          %s574 = smul.addr %s573, 192
          %s575 = scalar_lea.vmem [#allocation3], %s574
          %s577 = ssub.s32 3072, 3072
          %578 = vsyncadd %s572, %s577
          %s579 = smul.addr %s36, 48
          %s580 = smul.addr %s579, 64
          %s581 = scalar_lea.hbm %s4, %s580
          %s582 = sshll.u32 %s575, 4
          %s583 = int_to_ptr.vmem [resolvable:$true] %s582
          %588 = dma.hbm_to_vmem [thread:$0]  %s581, 3072, %s583, %s572, 192, 192, 12
        $region76: #{tpu_custom_call.1} parent=71 // pred_fallthru
          _
        // Predicated region
        $region77: #{tpu_custom_call.1} parent=71 // pred_check
          %p589 = pneg %p166
        $region78: #{tpu_custom_call.1} parent=71 // pred_check_branch
          %591 = sbr.rel (%p589) target = $region80
        $region79: #{tpu_custom_call.1} parent=71 // pred_region
          %s592 = sand.u32 %s36, 1
          %s593 = scalar_lea.sflag [#allocation7], %s592
          %s594 = sand.u32 %s156, 1
          %s595 = smul.addr %s594, 64
          %s596 = scalar_lea.vmem [#allocation6], %s595
          %s598 = ssub.s32 1024, 1024
          %599 = vsyncadd %s593, %s598
          %s600 = smul.addr %s36, 16
          %s601 = smul.addr %s600, 64
          %s602 = scalar_lea.hbm %s5, %s601
          %s603 = sshll.u32 %s596, 4
          %s604 = int_to_ptr.vmem [resolvable:$true] %s603
          %609 = dma.hbm_to_vmem [thread:$0]  %s602, 1024, %s604, %s593, 64, 64, 4
        $region80: #{tpu_custom_call.1} parent=71 // pred_fallthru
          _
        // Predicated region
        $region81: #{tpu_custom_call.1} parent=71 // pred_check
          %p610 = pneg %p192
        $region82: #{tpu_custom_call.1} parent=71 // pred_check_branch
          %612 = sbr.rel (%p610) target = $region84
        $region83: #{tpu_custom_call.1} parent=71 // pred_region
          %p613 = scmp.lt.s32.totalorder %s36, 1
          %s614 = scalar_select %p613, %s36, 1
          %s615 = scalar_lea.vmem %s6, %s614
        $region84: #{tpu_custom_call.1} parent=71 // pred_fallthru
          _
        // Predicated region
        $region85: #{tpu_custom_call.1} parent=71 // pred_check
          %p616 = pneg %p218
        $region86: #{tpu_custom_call.1} parent=71 // pred_check_branch
          %618 = sbr.rel (%p616) target = $region88
        $region87: #{tpu_custom_call.1} parent=71 // pred_region
          %s619 = sand.u32 %s36, 1
          %s620 = scalar_lea.sflag [#allocation7], %s619
          %s621 = sand.u32 %s208, 1
          %s622 = smul.addr %s621, 128
          %s623 = scalar_lea.vmem [#allocation8], %s622
          %s625 = ssub.s32 2048, 2048
          %626 = vsyncadd %s620, %s625
          %s627 = smul.addr %s36, 32
          %s628 = smul.addr %s627, 64
          %s629 = scalar_lea.hbm %s7, %s628
          %s630 = sshll.u32 %s623, 4
          %s631 = int_to_ptr.vmem [resolvable:$true] %s630
          %636 = dma.hbm_to_vmem [thread:$0]  %s629, 2048, %s631, %s620, 128, 128, 8
        $region88: #{tpu_custom_call.1} parent=71 // pred_fallthru
          _
        // Predicated region
        $region89: #{tpu_custom_call.1} parent=71 // pred_check
          %p637 = pneg %p244
        $region90: #{tpu_custom_call.1} parent=71 // pred_check_branch
          %639 = sbr.rel (%p637) target = $region92
        $region91: #{tpu_custom_call.1} parent=71 // pred_region
          %s640 = sand.u32 %s234, 1
          %s641 = scalar_lea.sflag [#allocation10], %s640
          %s642 = sand.u32 %s234, 1
          %s643 = smul.addr %s642, 128
          %s644 = scalar_lea.vmem [#allocation9], %s643
          %s646 = ssub.s32 2048, 2048
          %647 = vsyncadd %s641, %s646
          %s648 = smul.addr %s36, 32
          %s649 = smul.addr %s648, 64
          %s650 = scalar_lea.hbm %s8, %s649
          %s651 = sshll.u32 %s644, 4
          %s652 = int_to_ptr.vmem [resolvable:$true] %s651
          %657 = dma.hbm_to_vmem [thread:$0]  %s650, 2048, %s652, %s641, 64, 64, 4
        $region92: #{tpu_custom_call.1} parent=71 // pred_fallthru
          _
        // Predicated region
        $region93: #{tpu_custom_call.1} parent=71 // pred_check
          %p658 = pneg %p270
        $region94: #{tpu_custom_call.1} parent=71 // pred_check_branch
          %660 = sbr.rel (%p658) target = $region96
        $region95: #{tpu_custom_call.1} parent=71 // pred_region
          %p661 = scmp.lt.s32.totalorder %s36, 1
          %s662 = scalar_select %p661, %s36, 1
          %s663 = scalar_lea.vmem %s9, %s662
        $region96: #{tpu_custom_call.1} parent=71 // pred_fallthru
          _
      $region72: #{tpu_custom_call.1} parent=5 // pred_fallthru
        _
      %p664 = scmp.le.s32.totalorder 1, %s36
      %p665 = scmp.lt.s32.totalorder %s36, 3
      %p666 = pnand %p664, %p665
      %p667 = pneg %p666
      // Predicated region
      $region97: #{tpu_custom_call.1} parent=5 // pred_check
        _
      $region98: #{tpu_custom_call.1} parent=5 // pred_check_branch
        %669 = sbr.rel (%p666) target = $region100
      $region99: #{tpu_custom_call.1} parent=5 // pred_region
        %s670 = ssub.s32 %s36, 1
        %s671 = sand.u32 %s133, 1
        %s672 = scalar_lea.sflag [#allocation4], %s671
        %s673 = sand.u32 %s133, 1
        %s674 = smul.addr %s673, 192
        %s675 = scalar_lea.vmem [#allocation3], %s674
        // Predicated region
        $region101: #{tpu_custom_call.1} parent=99 // pred_check
          %p676 = pneg %p146
        $region102: #{tpu_custom_call.1} parent=99 // pred_check_branch
          %678 = sbr.rel (%p676) target = $region104
        $region103: #{tpu_custom_call.1} parent=99 // pred_region
          %679 = dma.done %s672, 3072
        $region104: #{tpu_custom_call.1} parent=99 // pred_fallthru
          _
        %s680 = sand.u32 %s41, 1
        %s681 = scalar_lea.sflag [#allocation7], %s680
        %s682 = sand.u32 %s159, 1
        %s683 = smul.addr %s682, 64
        %s684 = scalar_lea.vmem [#allocation6], %s683
        // Predicated region
        $region105: #{tpu_custom_call.1} parent=99 // pred_check
          %p685 = pneg %p172
        $region106: #{tpu_custom_call.1} parent=99 // pred_check_branch
          %687 = sbr.rel (%p685) target = $region108
        $region107: #{tpu_custom_call.1} parent=99 // pred_region
          %688 = dma.done %s681, 1024
        $region108: #{tpu_custom_call.1} parent=99 // pred_fallthru
          _
        %s689 = sand.u32 %s41, 1
        %s690 = scalar_lea.sflag [#allocation7], %s689
        %s691 = sand.u32 %s211, 1
        %s692 = smul.addr %s691, 128
        %s693 = scalar_lea.vmem [#allocation8], %s692
        // Predicated region
        $region109: #{tpu_custom_call.1} parent=99 // pred_check
          %p694 = pneg %p224
        $region110: #{tpu_custom_call.1} parent=99 // pred_check_branch
          %696 = sbr.rel (%p694) target = $region112
        $region111: #{tpu_custom_call.1} parent=99 // pred_region
          %697 = dma.done %s690, 2048
        $region112: #{tpu_custom_call.1} parent=99 // pred_fallthru
          _
        %s698 = sand.u32 %s237, 1
        %s699 = scalar_lea.sflag [#allocation10], %s698
        %s700 = sand.u32 %s237, 1
        %s701 = smul.addr %s700, 128
        %s702 = scalar_lea.vmem [#allocation9], %s701
        // Predicated region
        $region113: #{tpu_custom_call.1} parent=99 // pred_check
          %p703 = pneg %p250
        $region114: #{tpu_custom_call.1} parent=99 // pred_check_branch
          %705 = sbr.rel (%p703) target = $region116
        $region115: #{tpu_custom_call.1} parent=99 // pred_region
          %706 = dma.done %s699, 2048
        $region116: #{tpu_custom_call.1} parent=99 // pred_fallthru
          _
        %p707 = pneg %p57
        %p708 = pneg %p54
        %p709 = pneg %p78
        %p710 = pneg %p75
        %p711 = pneg %p99
        %p712 = pneg %p96
        %p713 = pneg %p120
        %p714 = pneg %p117
        %s715 = sand.u32 %s133, 1
        %s716 = scalar_lea.sflag [#allocation4], %s715
        %s717 = sand.u32 %s133, 1
        %s718 = smul.addr %s717, 192
        %s719 = scalar_lea.vmem [#allocation3], %s718
        %p720 = pneg %p146
        %p721 = pneg %p143
        %s722 = sand.u32 %s41, 1
        %s723 = scalar_lea.sflag [#allocation7], %s722
        %s724 = sand.u32 %s159, 1
        %s725 = smul.addr %s724, 64
        %s726 = scalar_lea.vmem [#allocation6], %s725
        %p727 = pneg %p172
        %p728 = pneg %p169
        %p729 = scmp.lt.s32.totalorder %s41, 1
        %s730 = scalar_select %p729, %s41, 1
        %s731 = scalar_lea.vmem %s6, %s730
        %p732 = pneg %p198
        %p733 = pneg %p195
        %s734 = sand.u32 %s41, 1
        %s735 = scalar_lea.sflag [#allocation7], %s734
        %s736 = sand.u32 %s211, 1
        %s737 = smul.addr %s736, 128
        %s738 = scalar_lea.vmem [#allocation8], %s737
        %p739 = pneg %p224
        %p740 = pneg %p221
        %s741 = sand.u32 %s237, 1
        %s742 = scalar_lea.sflag [#allocation10], %s741
        %s743 = sand.u32 %s237, 1
        %s744 = smul.addr %s743, 128
        %s745 = scalar_lea.vmem [#allocation9], %s744
        %p746 = pneg %p250
        %p747 = pneg %p247
        %p748 = scmp.lt.s32.totalorder %s41, 1
        %s749 = scalar_select %p748, %s41, 1
        %s750 = scalar_lea.vmem %s9, %s749
        %p751 = pneg %p276
        %p752 = pneg %p273
        %p753 = pneg %p297
        %p754 = pneg %p294
        %p755 = pneg %p318
        %p756 = pneg %p315
        %p757 = pneg %p339
        %p758 = pneg %p336
        %p759 = pneg %p360
        %p760 = pneg %p357
        %p761 = pneg %p381
        %p762 = pneg %p378
        %p763 = pneg %p402
        %p764 = pneg %p399
        %p765 = pneg %p423
        %p766 = pneg %p420
        %p767 = pneg %p444
        %p768 = pneg %p441
        %p769 = pneg %p465
        %p770 = pneg %p462
        %p771 = pneg %p486
        %p772 = pneg %p483
        %p773 = pneg %p507
        %p774 = pneg %p504
        %p775 = scmp.lt.s32.totalorder %s41, 1
        %s776 = scalar_select %p775, %s41, 1
        %s777 = scalar_lea.vmem %s6, %s776
        %p778 = scmp.lt.s32.totalorder %s41, 1
        %s779 = scalar_select %p778, %s41, 1
        %s780 = scalar_lea.vmem %s9, %s779
        %p782 = scmp.eq.s32.totalorder %s41, 0
        // Predicated region
        $region117: #{tpu_custom_call.1} parent=99 // pred_check
          %p783 = pneg %p782
        $region118: #{tpu_custom_call.1} parent=99 // pred_check_branch
          %785 = sbr.rel (%p783) target = $region120
        $region119: #{tpu_custom_call.1} parent=99 // pred_region
          %v786 = vld [vmem:[%s0] sm:$0xff]
          %v787 = vld [vmem:[%s0 + $0x8] sm:$0xff]
          %v788 = vpack.c.bf16 %v786, %v786
          %v789 = vpack.c.bf16 %v787, %v787
          %v790 = vld [vmem:[%s2] sm:$0xf]
          %v791 = vld [vmem:[%s2 + $0x4] sm:$0xf]
          %v792 = vld [vmem:[%s2 + $0x8] sm:$0xf]
          %v793 = vld [vmem:[%s2 + $0xc] sm:$0xf]
          %v794 = vld [vmem:[%s2 + $0x10] sm:$0xf]
          %v795 = vld [vmem:[%s2 + $0x14] sm:$0xf]
          %v796 = vld [vmem:[%s2 + $0x18] sm:$0xf]
          %v797 = vld [vmem:[%s2 + $0x1c] sm:$0xf]
          %v798 = vld [vmem:[%s2 + $0x20] sm:$0xf]
          %v799 = vld [vmem:[%s2 + $0x24] sm:$0xf]
          %v800 = vld [vmem:[%s2 + $0x28] sm:$0xf]
          %v801 = vld [vmem:[%s2 + $0x2c] sm:$0xf]
          %v802 = vld [vmem:[%s2 + $0x30] sm:$0xf]
          %v803 = vld [vmem:[%s2 + $0x34] sm:$0xf]
          %v804 = vld [vmem:[%s2 + $0x38] sm:$0xf]
          %v805 = vld [vmem:[%s2 + $0x3c] sm:$0xf]
          %v806 = vld [vmem:[%s2 + $0x40] sm:$0xf]
          %v807 = vld [vmem:[%s2 + $0x44] sm:$0xf]
          %v808 = vld [vmem:[%s2 + $0x48] sm:$0xf]
          %v809 = vld [vmem:[%s2 + $0x4c] sm:$0xf]
          %v810 = vld [vmem:[%s2 + $0x50] sm:$0xf]
          %v811 = vld [vmem:[%s2 + $0x54] sm:$0xf]
          %v812 = vld [vmem:[%s2 + $0x58] sm:$0xf]
          %v813 = vld [vmem:[%s2 + $0x5c] sm:$0xf]
          %v814 = vld [vmem:[%s2 + $0x60] sm:$0xf]
          %v815 = vld [vmem:[%s2 + $0x64] sm:$0xf]
          %v816 = vld [vmem:[%s2 + $0x68] sm:$0xf]
          %v817 = vld [vmem:[%s2 + $0x6c] sm:$0xf]
          %v818 = vld [vmem:[%s2 + $0x70] sm:$0xf]
          %v819 = vld [vmem:[%s2 + $0x74] sm:$0xf]
          %v820 = vld [vmem:[%s2 + $0x78] sm:$0xf]
          %v821 = vld [vmem:[%s2 + $0x7c] sm:$0xf]
          %v822 = vld [vmem:[%s3] sm:$0x1]
          %v824 = vlaneseq
          %v825 = vshrl.u32 %v824, 7
          %v826 = vsub.s32 0, %v825
          %v827 = vrot.slane %v822, %v826
          %v861 = vunpack.c.l.b16 %v790
          %v862 = vunpack.c.l.b16 %v791
          %v863 = vunpack.c.l.b16 %v792
          %v864 = vunpack.c.l.b16 %v793
          %v865 = vunpack.c.l.b16 %v794
          %v866 = vunpack.c.l.b16 %v795
          %v867 = vunpack.c.l.b16 %v796
          %v868 = vunpack.c.l.b16 %v797
          %v869 = vunpack.c.l.b16 %v798
          %v870 = vunpack.c.l.b16 %v799
          %v871 = vunpack.c.l.b16 %v800
          %v872 = vunpack.c.l.b16 %v801
          %v873 = vunpack.c.l.b16 %v802
          %v874 = vunpack.c.l.b16 %v803
          %v875 = vunpack.c.l.b16 %v804
          %v876 = vunpack.c.l.b16 %v805
          %v877 = vunpack.c.l.b16 %v806
          %v878 = vunpack.c.l.b16 %v807
          %v879 = vunpack.c.l.b16 %v808
          %v880 = vunpack.c.l.b16 %v809
          %v881 = vunpack.c.l.b16 %v810
          %v882 = vunpack.c.l.b16 %v811
          %v883 = vunpack.c.l.b16 %v812
          %v884 = vunpack.c.l.b16 %v813
          %v885 = vunpack.c.l.b16 %v814
          %v886 = vunpack.c.l.b16 %v815
          %v887 = vunpack.c.l.b16 %v816
          %v888 = vunpack.c.l.b16 %v817
          %v889 = vunpack.c.l.b16 %v818
          %v890 = vunpack.c.l.b16 %v819
          %v891 = vunpack.c.l.b16 %v820
          %v892 = vunpack.c.l.b16 %v821
          %v893 = vpack.c.b16 %v862, %v861
          %v894 = vpack.c.b16 %v864, %v863
          %v895 = vpack.c.b16 %v866, %v865
          %v896 = vpack.c.b16 %v868, %v867
          %v897 = vpack.c.b16 %v870, %v869
          %v898 = vpack.c.b16 %v872, %v871
          %v899 = vpack.c.b16 %v874, %v873
          %v900 = vpack.c.b16 %v876, %v875
          %v901 = vpack.c.b16 %v878, %v877
          %v902 = vpack.c.b16 %v880, %v879
          %v903 = vpack.c.b16 %v882, %v881
          %v904 = vpack.c.b16 %v884, %v883
          %v905 = vpack.c.b16 %v886, %v885
          %v906 = vpack.c.b16 %v888, %v887
          %v907 = vpack.c.b16 %v890, %v889
          %v908 = vpack.c.b16 %v892, %v891
          %925 = vmatprep.subr.bf16.mxu0 0
          %926 = vmatpush1.bf16.msra.mxu0 %v893
          %927 = vmatprep.subr.bf16.mxu0 0
          %928 = vmatpush1.bf16.msra.mxu0 %v894
          %929 = vmatprep.subr.bf16.mxu0 0
          %930 = vmatpush1.bf16.msra.mxu0 %v895
          %931 = vmatprep.subr.bf16.mxu0 0
          %932 = vmatpush1.bf16.msra.mxu0 %v896
          %933 = vmatprep.subr.bf16.mxu0 0
          %934 = vmatpush1.bf16.msra.mxu0 %v897
          %935 = vmatprep.subr.bf16.mxu0 0
          %936 = vmatpush1.bf16.msra.mxu0 %v898
          %937 = vmatprep.subr.bf16.mxu0 0
          %938 = vmatpush1.bf16.msra.mxu0 %v899
          %939 = vmatprep.subr.bf16.mxu0 0
          %940 = vmatpush1.bf16.msra.mxu0 %v900
          %941 = vmatprep.subr.bf16.mxu0 0
          %942 = vmatpush1.bf16.msra.mxu0 %v901
          %943 = vmatprep.subr.bf16.mxu0 0
          %944 = vmatpush1.bf16.msra.mxu0 %v902
          %945 = vmatprep.subr.bf16.mxu0 0
          %946 = vmatpush1.bf16.msra.mxu0 %v903
          %947 = vmatprep.subr.bf16.mxu0 0
          %948 = vmatpush1.bf16.msra.mxu0 %v904
          %949 = vmatprep.subr.bf16.mxu0 0
          %950 = vmatpush1.bf16.msra.mxu0 %v905
          %951 = vmatprep.subr.bf16.mxu0 0
          %952 = vmatpush1.bf16.msra.mxu0 %v906
          %953 = vmatprep.subr.bf16.mxu0 0
          %954 = vmatpush1.bf16.msra.mxu0 %v907
          %955 = vmatprep.subr.bf16.mxu0 0
          %956 = vmatpush1.bf16.msra.mxu0 %v908
          %957 = vmatprep.mubr.bf16.mxu0 %v789
          %958 = vmatmul.mubr.bf16.gmra.mrb[0].mxu0 %v788
          %v959 = vpop.f32.mrb[0].mxu0
          %v960 = vadd.f32 %v827, %v959
          %v961 = vpop.f32.mrb[0].mxu0
          %v962 = vpop.f32.mrb[0].mxu0
          %v963 = vpop.f32.mrb[0].mxu0
          %964 = vdwg.mxu0
          %v965 = vld [vmem:[%s1] sm:$0xff]
          %v966 = vadd.f32 %v960, %v965
          %967 = vst [vmem:[#allocation2] sm:$0xff] %v966
        $region120: #{tpu_custom_call.1} parent=99 // pred_fallthru
          _
        %v968 = vld [vmem:[#allocation2] sm:$0xff]
        %v969 = vpack.c.bf16 %v968, %v968
        %v970 = vld [vmem:[%s675] sm:$0xff]
        %v971 = vld [vmem:[%s675 + $0x8] sm:$0xf]
        %v972 = vld [vmem:[%s675 + $0xc] sm:$0xff]
        %v973 = vld [vmem:[%s675 + $0x14] sm:$0xf]
        %v974 = vld [vmem:[%s675 + $0x18] sm:$0xff]
        %v975 = vld [vmem:[%s675 + $0x20] sm:$0xf]
        %v976 = vld [vmem:[%s675 + $0x24] sm:$0xff]
        %v977 = vld [vmem:[%s675 + $0x2c] sm:$0xf]
        %v978 = vld [vmem:[%s675 + $0x30] sm:$0xff]
        %v979 = vld [vmem:[%s675 + $0x38] sm:$0xf]
        %v980 = vld [vmem:[%s675 + $0x3c] sm:$0xff]
        %v981 = vld [vmem:[%s675 + $0x44] sm:$0xf]
        %v982 = vld [vmem:[%s675 + $0x48] sm:$0xff]
        %v983 = vld [vmem:[%s675 + $0x50] sm:$0xf]
        %v984 = vld [vmem:[%s675 + $0x54] sm:$0xff]
        %v985 = vld [vmem:[%s675 + $0x5c] sm:$0xf]
        %v986 = vld [vmem:[%s675 + $0x60] sm:$0xff]
        %v987 = vld [vmem:[%s675 + $0x68] sm:$0xf]
        %v988 = vld [vmem:[%s675 + $0x6c] sm:$0xff]
        %v989 = vld [vmem:[%s675 + $0x74] sm:$0xf]
        %v990 = vld [vmem:[%s675 + $0x78] sm:$0xff]
        %v991 = vld [vmem:[%s675 + $0x80] sm:$0xf]
        %v992 = vld [vmem:[%s675 + $0x84] sm:$0xff]
        %v993 = vld [vmem:[%s675 + $0x8c] sm:$0xf]
        %v994 = vld [vmem:[%s675 + $0x90] sm:$0xff]
        %v995 = vld [vmem:[%s675 + $0x98] sm:$0xf]
        %v996 = vld [vmem:[%s675 + $0x9c] sm:$0xff]
        %v997 = vld [vmem:[%s675 + $0xa4] sm:$0xf]
        %v998 = vld [vmem:[%s675 + $0xa8] sm:$0xff]
        %v999 = vld [vmem:[%s675 + $0xb0] sm:$0xf]
        %v1000 = vld [vmem:[%s675 + $0xb4] sm:$0xff]
        %v1001 = vld [vmem:[%s675 + $0xbc] sm:$0xf]
        %v1034 = vunpack.c.l.b16 %v970
        %v1035 = vunpack.c.h.b16 %v970
        %v1036 = vunpack.c.l.b16 %v971
        %v1037 = vunpack.c.l.b16 %v972
        %v1038 = vunpack.c.h.b16 %v972
        %v1039 = vunpack.c.l.b16 %v973
        %v1040 = vunpack.c.l.b16 %v974
        %v1041 = vunpack.c.h.b16 %v974
        %v1042 = vunpack.c.l.b16 %v975
        %v1043 = vunpack.c.l.b16 %v976
        %v1044 = vunpack.c.h.b16 %v976
        %v1045 = vunpack.c.l.b16 %v977
        %v1046 = vunpack.c.l.b16 %v978
        %v1047 = vunpack.c.h.b16 %v978
        %v1048 = vunpack.c.l.b16 %v979
        %v1049 = vunpack.c.l.b16 %v980
        %v1050 = vunpack.c.h.b16 %v980
        %v1051 = vunpack.c.l.b16 %v981
        %v1052 = vunpack.c.l.b16 %v982
        %v1053 = vunpack.c.h.b16 %v982
        %v1054 = vunpack.c.l.b16 %v983
        %v1055 = vunpack.c.l.b16 %v984
        %v1056 = vunpack.c.h.b16 %v984
        %v1057 = vunpack.c.l.b16 %v985
        %v1058 = vunpack.c.l.b16 %v986
        %v1059 = vunpack.c.h.b16 %v986
        %v1060 = vunpack.c.l.b16 %v987
        %v1061 = vunpack.c.l.b16 %v988
        %v1062 = vunpack.c.h.b16 %v988
        %v1063 = vunpack.c.l.b16 %v989
        %v1064 = vunpack.c.l.b16 %v990
        %v1065 = vunpack.c.h.b16 %v990
        %v1066 = vunpack.c.l.b16 %v991
        %v1067 = vunpack.c.l.b16 %v992
        %v1068 = vunpack.c.h.b16 %v992
        %v1069 = vunpack.c.l.b16 %v993
        %v1070 = vunpack.c.l.b16 %v994
        %v1071 = vunpack.c.h.b16 %v994
        %v1072 = vunpack.c.l.b16 %v995
        %v1073 = vunpack.c.l.b16 %v996
        %v1074 = vunpack.c.h.b16 %v996
        %v1075 = vunpack.c.l.b16 %v997
        %v1076 = vunpack.c.l.b16 %v998
        %v1077 = vunpack.c.h.b16 %v998
        %v1078 = vunpack.c.l.b16 %v999
        %v1079 = vunpack.c.l.b16 %v1000
        %v1080 = vunpack.c.h.b16 %v1000
        %v1081 = vunpack.c.l.b16 %v1001
        %v1082 = vpack.c.b16 %v1037, %v1034
        %v1083 = vpack.c.b16 %v1038, %v1035
        %v1084 = vpack.c.b16 %v1039, %v1036
        %v1085 = vpack.c.b16 %v1043, %v1040
        %v1086 = vpack.c.b16 %v1044, %v1041
        %v1087 = vpack.c.b16 %v1045, %v1042
        %v1088 = vpack.c.b16 %v1049, %v1046
        %v1089 = vpack.c.b16 %v1050, %v1047
        %v1090 = vpack.c.b16 %v1051, %v1048
        %v1091 = vpack.c.b16 %v1055, %v1052
        %v1092 = vpack.c.b16 %v1056, %v1053
        %v1093 = vpack.c.b16 %v1057, %v1054
        %v1094 = vpack.c.b16 %v1061, %v1058
        %v1095 = vpack.c.b16 %v1062, %v1059
        %v1096 = vpack.c.b16 %v1063, %v1060
        %v1097 = vpack.c.b16 %v1067, %v1064
        %v1098 = vpack.c.b16 %v1068, %v1065
        %v1099 = vpack.c.b16 %v1069, %v1066
        %v1100 = vpack.c.b16 %v1073, %v1070
        %v1101 = vpack.c.b16 %v1074, %v1071
        %v1102 = vpack.c.b16 %v1075, %v1072
        %v1103 = vpack.c.b16 %v1079, %v1076
        %v1104 = vpack.c.b16 %v1080, %v1077
        %v1105 = vpack.c.b16 %v1081, %v1078
        %1130 = vmatprep.subr.bf16.mxu0 %v1083
        %1131 = vmatpush1.bf16.msra.mxu0 %v1082
        %1132 = vmatprep.subr.bf16.mxu0 %v1086
        %1133 = vmatpush1.bf16.msra.mxu0 %v1085
        %1134 = vmatprep.subr.bf16.mxu0 %v1089
        %1135 = vmatpush1.bf16.msra.mxu0 %v1088
        %1136 = vmatprep.subr.bf16.mxu0 %v1092
        %1137 = vmatpush1.bf16.msra.mxu0 %v1091
        %1138 = vmatprep.subr.bf16.mxu0 %v1095
        %1139 = vmatpush1.bf16.msra.mxu0 %v1094
        %1140 = vmatprep.subr.bf16.mxu0 %v1098
        %1141 = vmatpush1.bf16.msra.mxu0 %v1097
        %1142 = vmatprep.subr.bf16.mxu0 %v1101
        %1143 = vmatpush1.bf16.msra.mxu0 %v1100
        %1144 = vmatprep.subr.bf16.mxu0 %v1104
        %1145 = vmatpush1.bf16.msra.mxu0 %v1103
        %1146 = vmatprep.subr.bf16.mxu0 0
        %1147 = vmatpush1.bf16.msra.mxu0 0
        %1148 = vmatprep.subr.bf16.mxu0 0
        %1149 = vmatpush1.bf16.msra.mxu0 0
        %1150 = vmatprep.subr.bf16.mxu0 0
        %1151 = vmatpush1.bf16.msra.mxu0 0
        %1152 = vmatprep.subr.bf16.mxu0 0
        %1153 = vmatpush1.bf16.msra.mxu0 0
        %1154 = vmatprep.subr.bf16.mxu0 0
        %1155 = vmatpush1.bf16.msra.mxu0 0
        %1156 = vmatprep.subr.bf16.mxu0 0
        %1157 = vmatpush1.bf16.msra.mxu0 0
        %1158 = vmatprep.subr.bf16.mxu0 0
        %1159 = vmatpush1.bf16.msra.mxu0 0
        %1160 = vmatprep.subr.bf16.mxu0 0
        %1161 = vmatpush1.bf16.msra.mxu0 0
        %1162 = vmatprep.mubr.bf16.mxu0 0
        %1163 = vmatmul.mubr.bf16.gmra.mrb[0].mxu0 %v969
        %v1164 = vpop.f32.mrb[0].mxu0
        %v1165 = vadd.f32 0.0, %v1164
        %v1166 = vpop.f32.mrb[0].mxu0
        %v1167 = vadd.f32 0.0, %v1166
        %v1168 = vpop.f32.mrb[0].mxu0
        %v1169 = vpop.f32.mrb[0].mxu0
        %1170 = vdwg.mxu0
        %1171 = vmatprep.subr.bf16.mxu0 0
        %1172 = vmatpush1.bf16.msra.mxu0 %v1084
        %1173 = vmatprep.subr.bf16.mxu0 0
        %1174 = vmatpush1.bf16.msra.mxu0 %v1087
        %1175 = vmatprep.subr.bf16.mxu0 0
        %1176 = vmatpush1.bf16.msra.mxu0 %v1090
        %1177 = vmatprep.subr.bf16.mxu0 0
        %1178 = vmatpush1.bf16.msra.mxu0 %v1093
        %1179 = vmatprep.subr.bf16.mxu0 0
        %1180 = vmatpush1.bf16.msra.mxu0 %v1096
        %1181 = vmatprep.subr.bf16.mxu0 0
        %1182 = vmatpush1.bf16.msra.mxu0 %v1099
        %1183 = vmatprep.subr.bf16.mxu0 0
        %1184 = vmatpush1.bf16.msra.mxu0 %v1102
        %1185 = vmatprep.subr.bf16.mxu0 0
        %1186 = vmatpush1.bf16.msra.mxu0 %v1105
        %1187 = vmatprep.subr.bf16.mxu0 0
        %1188 = vmatpush1.bf16.msra.mxu0 0
        %1189 = vmatprep.subr.bf16.mxu0 0
        %1190 = vmatpush1.bf16.msra.mxu0 0
        %1191 = vmatprep.subr.bf16.mxu0 0
        %1192 = vmatpush1.bf16.msra.mxu0 0
        %1193 = vmatprep.subr.bf16.mxu0 0
        %1194 = vmatpush1.bf16.msra.mxu0 0
        %1195 = vmatprep.subr.bf16.mxu0 0
        %1196 = vmatpush1.bf16.msra.mxu0 0
        %1197 = vmatprep.subr.bf16.mxu0 0
        %1198 = vmatpush1.bf16.msra.mxu0 0
        %1199 = vmatprep.subr.bf16.mxu0 0
        %1200 = vmatpush1.bf16.msra.mxu0 0
        %1201 = vmatprep.subr.bf16.mxu0 0
        %1202 = vmatpush1.bf16.msra.mxu0 0
        %1203 = vmatprep.mubr.bf16.mxu0 0
        %1204 = vmatmul.mubr.bf16.gmra.mrb[0].mxu0 %v969
        %v1205 = vpop.f32.mrb[0].mxu0
        %v1206 = vadd.f32 0.0, %v1205
        %v1207 = vpop.f32.mrb[0].mxu0
        %v1208 = vpop.f32.mrb[0].mxu0
        %v1209 = vpop.f32.mrb[0].mxu0
        %1210 = vdwg.mxu0
        %v1211 = vpack.c.bf16 %v1165, %v1165
        %v1212 = vpack.c.bf16 %v1167, %v1167
        %vm1213 = vcmask 261120
        %v1215 = vsel %vm1213, %v1211, 0
        %v1218 = vsel %vm1213, %v1212, 0
        %1220 = vmatprep.subr.bf16.mxu0 0
        %1221 = vmatpush1.bf16.xpose.msra.mxu0 %v1218
        %1222 = vmatprep.subr.bf16.mxu0 0
        %1223 = vmatpush1.bf16.xpose.msra.mxu0 0
        %1224 = vmatprep.subr.bf16.mxu0 0
        %1225 = vmatpush1.bf16.xpose.msra.mxu0 0
        %1226 = vmatprep.subr.bf16.mxu0 0
        %1227 = vmatpush1.bf16.xpose.msra.mxu0 0
        %1228 = vmatprep.subr.bf16.mxu0 0
        %1229 = vmatpush1.bf16.xpose.msra.mxu0 0
        %1230 = vmatprep.subr.bf16.mxu0 0
        %1231 = vmatpush1.bf16.xpose.msra.mxu0 0
        %1232 = vmatprep.subr.bf16.mxu0 0
        %1233 = vmatpush1.bf16.xpose.msra.mxu0 0
        %1234 = vmatprep.subr.bf16.mxu0 0
        %1235 = vmatpush1.bf16.xpose.msra.mxu0 0
        %1236 = vmatprep.subr.bf16.mxu0 0
        %1237 = vmatpush1.bf16.xpose.msra.mxu0 0
        %1238 = vmatprep.subr.bf16.mxu0 0
        %1239 = vmatpush1.bf16.xpose.msra.mxu0 0
        %1240 = vmatprep.subr.bf16.mxu0 0
        %1241 = vmatpush1.bf16.xpose.msra.mxu0 0
        %1242 = vmatprep.subr.bf16.mxu0 0
        %1243 = vmatpush1.bf16.xpose.msra.mxu0 0
        %1244 = vmatprep.subr.bf16.mxu0 0
        %1245 = vmatpush1.bf16.xpose.msra.mxu0 0
        %1246 = vmatprep.subr.bf16.mxu0 0
        %1247 = vmatpush1.bf16.xpose.msra.mxu0 0
        %1248 = vmatprep.subr.bf16.mxu0 0
        %1249 = vmatpush1.bf16.xpose.msra.mxu0 0
        %1250 = vmatprep.subr.bf16.mxu0 0
        %1251 = vmatpush1.bf16.xpose.msra.mxu0 0
        %1252 = vmatprep.mubr.bf16.mxu0 0
        %1253 = vmatmul.mubr.bf16.gmra.mrb[0].mxu0 %v1215
        %v1254 = vpop.f32.mrb[0].mxu0
        %v1255 = vadd.f32 0.0, %v1254
        %v1256 = vpop.f32.mrb[0].mxu0
        %v1257 = vpop.f32.mrb[0].mxu0
        %v1258 = vpop.f32.mrb[0].mxu0
        %1259 = vdwg.mxu0
        %v1260 = vmul.f32 %v1255, 0.17677669
        %vm1261 = vcmask 27648
        %v1262 = vsel %vm1261, %v1260, -inf
        %1263 = vmax.xlane.f32.xlu0 %v1262
        %v1264 = vpop.xlane.xlu0 %1263
        %v1265 = vsub.f32 %v1260, %v1264
        %v1266 = vmul.f32 %v1265, 1.442695
        %v1267 = vpow.pop %v1266
        %v1268 = vsel %vm1261, %v1267, 0.0
        %1269 = vadd.xlane.f32.xlu0 %v1268
        %v1270 = vpop.xlane.xlu0 %1269
        %v1271 = vrcp.pop %v1270
        %v1272 = vmul.f32 %v1267, %v1271
        %v1273 = vpack.c.bf16 %v1272, %v1272
        %v1274 = vpack.c.bf16 %v1206, %v1206
        %vm1275 = vcmask 31744
        %v1277 = vsel %vm1275, %v1273, 0
        %vm1279 = vcmask 1041408
        %v1281 = vsel %vm1279, %v1274, 0
        %1283 = vmatprep.subr.bf16.mxu0 0
        %1284 = vmatpush1.bf16.msra.mxu0 %v1281
        %1285 = vmatprep.subr.bf16.mxu0 0
        %1286 = vmatpush1.bf16.msra.mxu0 0
        %1287 = vmatprep.subr.bf16.mxu0 0
        %1288 = vmatpush1.bf16.msra.mxu0 0
        %1289 = vmatprep.subr.bf16.mxu0 0
        %1290 = vmatpush1.bf16.msra.mxu0 0
        %1291 = vmatprep.subr.bf16.mxu0 0
        %1292 = vmatpush1.bf16.msra.mxu0 0
        %1293 = vmatprep.subr.bf16.mxu0 0
        %1294 = vmatpush1.bf16.msra.mxu0 0
        %1295 = vmatprep.subr.bf16.mxu0 0
        %1296 = vmatpush1.bf16.msra.mxu0 0
        %1297 = vmatprep.subr.bf16.mxu0 0
        %1298 = vmatpush1.bf16.msra.mxu0 0
        %1299 = vmatprep.subr.bf16.mxu0 0
        %1300 = vmatpush1.bf16.msra.mxu0 0
        %1301 = vmatprep.subr.bf16.mxu0 0
        %1302 = vmatpush1.bf16.msra.mxu0 0
        %1303 = vmatprep.subr.bf16.mxu0 0
        %1304 = vmatpush1.bf16.msra.mxu0 0
        %1305 = vmatprep.subr.bf16.mxu0 0
        %1306 = vmatpush1.bf16.msra.mxu0 0
        %1307 = vmatprep.subr.bf16.mxu0 0
        %1308 = vmatpush1.bf16.msra.mxu0 0
        %1309 = vmatprep.subr.bf16.mxu0 0
        %1310 = vmatpush1.bf16.msra.mxu0 0
        %1311 = vmatprep.subr.bf16.mxu0 0
        %1312 = vmatpush1.bf16.msra.mxu0 0
        %1313 = vmatprep.subr.bf16.mxu0 0
        %1314 = vmatpush1.bf16.msra.mxu0 0
        %1315 = vmatprep.mubr.bf16.mxu0 0
        %1316 = vmatmul.mubr.bf16.gmra.mrb[0].mxu0 %v1277
        %v1317 = vpop.f32.mrb[0].mxu0
        %v1318 = vadd.f32 0.0, %v1317
        %v1319 = vpop.f32.mrb[0].mxu0
        %v1320 = vpop.f32.mrb[0].mxu0
        %v1321 = vpop.f32.mrb[0].mxu0
        %1322 = vdwg.mxu0
        %1324 = vrot.lane.b32.xlu0 %v1211, 96
        %v1325 = vpop.permute.xlu0 %1324
        %1327 = vrot.lane.b32.xlu0 %v1212, 96
        %v1328 = vpop.permute.xlu0 %1327
        %v1330 = vsel %vm1213, %v1325, 0
        %v1333 = vsel %vm1213, %v1328, 0
        %1335 = vmatprep.subr.bf16.mxu0 0
        %1336 = vmatpush1.bf16.xpose.msra.mxu0 %v1333
        %1337 = vmatprep.subr.bf16.mxu0 0
        %1338 = vmatpush1.bf16.xpose.msra.mxu0 0
        %1339 = vmatprep.subr.bf16.mxu0 0
        %1340 = vmatpush1.bf16.xpose.msra.mxu0 0
        %1341 = vmatprep.subr.bf16.mxu0 0
        %1342 = vmatpush1.bf16.xpose.msra.mxu0 0
        %1343 = vmatprep.subr.bf16.mxu0 0
        %1344 = vmatpush1.bf16.xpose.msra.mxu0 0
        %1345 = vmatprep.subr.bf16.mxu0 0
        %1346 = vmatpush1.bf16.xpose.msra.mxu0 0
        %1347 = vmatprep.subr.bf16.mxu0 0
        %1348 = vmatpush1.bf16.xpose.msra.mxu0 0
        %1349 = vmatprep.subr.bf16.mxu0 0
        %1350 = vmatpush1.bf16.xpose.msra.mxu0 0
        %1351 = vmatprep.subr.bf16.mxu0 0
        %1352 = vmatpush1.bf16.xpose.msra.mxu0 0
        %1353 = vmatprep.subr.bf16.mxu0 0
        %1354 = vmatpush1.bf16.xpose.msra.mxu0 0
        %1355 = vmatprep.subr.bf16.mxu0 0
        %1356 = vmatpush1.bf16.xpose.msra.mxu0 0
        %1357 = vmatprep.subr.bf16.mxu0 0
        %1358 = vmatpush1.bf16.xpose.msra.mxu0 0
        %1359 = vmatprep.subr.bf16.mxu0 0
        %1360 = vmatpush1.bf16.xpose.msra.mxu0 0
        %1361 = vmatprep.subr.bf16.mxu0 0
        %1362 = vmatpush1.bf16.xpose.msra.mxu0 0
        %1363 = vmatprep.subr.bf16.mxu0 0
        %1364 = vmatpush1.bf16.xpose.msra.mxu0 0
        %1365 = vmatprep.subr.bf16.mxu0 0
        %1366 = vmatpush1.bf16.xpose.msra.mxu0 0
        %1367 = vmatprep.mubr.bf16.mxu0 0
        %1368 = vmatmul.mubr.bf16.gmra.mrb[0].mxu0 %v1330
        %v1369 = vpop.f32.mrb[0].mxu0
        %v1370 = vadd.f32 0.0, %v1369
        %v1371 = vpop.f32.mrb[0].mxu0
        %v1372 = vpop.f32.mrb[0].mxu0
        %v1373 = vpop.f32.mrb[0].mxu0
        %1374 = vdwg.mxu0
        %v1375 = vmul.f32 %v1370, 0.17677669
        %v1376 = vsel %vm1261, %v1375, -inf
        %1377 = vmax.xlane.f32.xlu0 %v1376
        %v1378 = vpop.xlane.xlu0 %1377
        %v1379 = vsub.f32 %v1375, %v1378
        %v1380 = vmul.f32 %v1379, 1.442695
        %v1381 = vpow.pop %v1380
        %v1382 = vsel %vm1261, %v1381, 0.0
        %1383 = vadd.xlane.f32.xlu0 %v1382
        %v1384 = vpop.xlane.xlu0 %1383
        %v1385 = vrcp.pop %v1384
        %v1386 = vmul.f32 %v1381, %v1385
        %v1387 = vpack.c.bf16 %v1386, %v1386
        %1389 = vrot.lane.b32.xlu0 %v1274, 96
        %v1390 = vpop.permute.xlu0 %1389
        %v1392 = vsel %vm1275, %v1387, 0
        %v1395 = vsel %vm1279, %v1390, 0
        %1397 = vmatprep.subr.bf16.mxu0 0
        %1398 = vmatpush1.bf16.msra.mxu0 %v1395
        %1399 = vmatprep.subr.bf16.mxu0 0
        %1400 = vmatpush1.bf16.msra.mxu0 0
        %1401 = vmatprep.subr.bf16.mxu0 0
        %1402 = vmatpush1.bf16.msra.mxu0 0
        %1403 = vmatprep.subr.bf16.mxu0 0
        %1404 = vmatpush1.bf16.msra.mxu0 0
        %1405 = vmatprep.subr.bf16.mxu0 0
        %1406 = vmatpush1.bf16.msra.mxu0 0
        %1407 = vmatprep.subr.bf16.mxu0 0
        %1408 = vmatpush1.bf16.msra.mxu0 0
        %1409 = vmatprep.subr.bf16.mxu0 0
        %1410 = vmatpush1.bf16.msra.mxu0 0
        %1411 = vmatprep.subr.bf16.mxu0 0
        %1412 = vmatpush1.bf16.msra.mxu0 0
        %1413 = vmatprep.subr.bf16.mxu0 0
        %1414 = vmatpush1.bf16.msra.mxu0 0
        %1415 = vmatprep.subr.bf16.mxu0 0
        %1416 = vmatpush1.bf16.msra.mxu0 0
        %1417 = vmatprep.subr.bf16.mxu0 0
        %1418 = vmatpush1.bf16.msra.mxu0 0
        %1419 = vmatprep.subr.bf16.mxu0 0
        %1420 = vmatpush1.bf16.msra.mxu0 0
        %1421 = vmatprep.subr.bf16.mxu0 0
        %1422 = vmatpush1.bf16.msra.mxu0 0
        %1423 = vmatprep.subr.bf16.mxu0 0
        %1424 = vmatpush1.bf16.msra.mxu0 0
        %1425 = vmatprep.subr.bf16.mxu0 0
        %1426 = vmatpush1.bf16.msra.mxu0 0
        %1427 = vmatprep.subr.bf16.mxu0 0
        %1428 = vmatpush1.bf16.msra.mxu0 0
        %1429 = vmatprep.mubr.bf16.mxu0 0
        %1430 = vmatmul.mubr.bf16.gmra.mrb[0].mxu0 %v1392
        %v1431 = vpop.f32.mrb[0].mxu0
        %v1432 = vadd.f32 0.0, %v1431
        %v1433 = vpop.f32.mrb[0].mxu0
        %v1434 = vpop.f32.mrb[0].mxu0
        %v1435 = vpop.f32.mrb[0].mxu0
        %1436 = vdwg.mxu0
        %1437 = vrot.lane.b32.xlu0 %v1211, 64
        %v1438 = vpop.permute.xlu0 %1437
        %1439 = vrot.lane.b32.xlu0 %v1212, 64
        %v1440 = vpop.permute.xlu0 %1439
        %v1442 = vsel %vm1213, %v1438, 0
        %v1445 = vsel %vm1213, %v1440, 0
        %1447 = vmatprep.subr.bf16.mxu0 0
        %1448 = vmatpush1.bf16.xpose.msra.mxu0 %v1445
        %1449 = vmatprep.subr.bf16.mxu0 0
        %1450 = vmatpush1.bf16.xpose.msra.mxu0 0
        %1451 = vmatprep.subr.bf16.mxu0 0
        %1452 = vmatpush1.bf16.xpose.msra.mxu0 0
        %1453 = vmatprep.subr.bf16.mxu0 0
        %1454 = vmatpush1.bf16.xpose.msra.mxu0 0
        %1455 = vmatprep.subr.bf16.mxu0 0
        %1456 = vmatpush1.bf16.xpose.msra.mxu0 0
        %1457 = vmatprep.subr.bf16.mxu0 0
        %1458 = vmatpush1.bf16.xpose.msra.mxu0 0
        %1459 = vmatprep.subr.bf16.mxu0 0
        %1460 = vmatpush1.bf16.xpose.msra.mxu0 0
        %1461 = vmatprep.subr.bf16.mxu0 0
        %1462 = vmatpush1.bf16.xpose.msra.mxu0 0
        %1463 = vmatprep.subr.bf16.mxu0 0
        %1464 = vmatpush1.bf16.xpose.msra.mxu0 0
        %1465 = vmatprep.subr.bf16.mxu0 0
        %1466 = vmatpush1.bf16.xpose.msra.mxu0 0
        %1467 = vmatprep.subr.bf16.mxu0 0
        %1468 = vmatpush1.bf16.xpose.msra.mxu0 0
        %1469 = vmatprep.subr.bf16.mxu0 0
        %1470 = vmatpush1.bf16.xpose.msra.mxu0 0
        %1471 = vmatprep.subr.bf16.mxu0 0
        %1472 = vmatpush1.bf16.xpose.msra.mxu0 0
        %1473 = vmatprep.subr.bf16.mxu0 0
        %1474 = vmatpush1.bf16.xpose.msra.mxu0 0
        %1475 = vmatprep.subr.bf16.mxu0 0
        %1476 = vmatpush1.bf16.xpose.msra.mxu0 0
        %1477 = vmatprep.subr.bf16.mxu0 0
        %1478 = vmatpush1.bf16.xpose.msra.mxu0 0
        %1479 = vmatprep.mubr.bf16.mxu0 0
        %1480 = vmatmul.mubr.bf16.gmra.mrb[0].mxu0 %v1442
        %v1481 = vpop.f32.mrb[0].mxu0
        %v1482 = vadd.f32 0.0, %v1481
        %v1483 = vpop.f32.mrb[0].mxu0
        %v1484 = vpop.f32.mrb[0].mxu0
        %v1485 = vpop.f32.mrb[0].mxu0
        %1486 = vdwg.mxu0
        %v1487 = vmul.f32 %v1482, 0.17677669
        %v1488 = vsel %vm1261, %v1487, -inf
        %1489 = vmax.xlane.f32.xlu0 %v1488
        %v1490 = vpop.xlane.xlu0 %1489
        %v1491 = vsub.f32 %v1487, %v1490
        %v1492 = vmul.f32 %v1491, 1.442695
        %v1493 = vpow.pop %v1492
        %v1494 = vsel %vm1261, %v1493, 0.0
        %1495 = vadd.xlane.f32.xlu0 %v1494
        %v1496 = vpop.xlane.xlu0 %1495
        %v1497 = vrcp.pop %v1496
        %v1498 = vmul.f32 %v1493, %v1497
        %v1499 = vpack.c.bf16 %v1498, %v1498
        %1500 = vrot.lane.b32.xlu0 %v1274, 64
        %v1501 = vpop.permute.xlu0 %1500
        %v1503 = vsel %vm1275, %v1499, 0
        %v1506 = vsel %vm1279, %v1501, 0
        %1508 = vmatprep.subr.bf16.mxu0 0
        %1509 = vmatpush1.bf16.msra.mxu0 %v1506
        %1510 = vmatprep.subr.bf16.mxu0 0
        %1511 = vmatpush1.bf16.msra.mxu0 0
        %1512 = vmatprep.subr.bf16.mxu0 0
        %1513 = vmatpush1.bf16.msra.mxu0 0
        %1514 = vmatprep.subr.bf16.mxu0 0
        %1515 = vmatpush1.bf16.msra.mxu0 0
        %1516 = vmatprep.subr.bf16.mxu0 0
        %1517 = vmatpush1.bf16.msra.mxu0 0
        %1518 = vmatprep.subr.bf16.mxu0 0
        %1519 = vmatpush1.bf16.msra.mxu0 0
        %1520 = vmatprep.subr.bf16.mxu0 0
        %1521 = vmatpush1.bf16.msra.mxu0 0
        %1522 = vmatprep.subr.bf16.mxu0 0
        %1523 = vmatpush1.bf16.msra.mxu0 0
        %1524 = vmatprep.subr.bf16.mxu0 0
        %1525 = vmatpush1.bf16.msra.mxu0 0
        %1526 = vmatprep.subr.bf16.mxu0 0
        %1527 = vmatpush1.bf16.msra.mxu0 0
        %1528 = vmatprep.subr.bf16.mxu0 0
        %1529 = vmatpush1.bf16.msra.mxu0 0
        %1530 = vmatprep.subr.bf16.mxu0 0
        %1531 = vmatpush1.bf16.msra.mxu0 0
        %1532 = vmatprep.subr.bf16.mxu0 0
        %1533 = vmatpush1.bf16.msra.mxu0 0
        %1534 = vmatprep.subr.bf16.mxu0 0
        %1535 = vmatpush1.bf16.msra.mxu0 0
        %1536 = vmatprep.subr.bf16.mxu0 0
        %1537 = vmatpush1.bf16.msra.mxu0 0
        %1538 = vmatprep.subr.bf16.mxu0 0
        %1539 = vmatpush1.bf16.msra.mxu0 0
        %1540 = vmatprep.mubr.bf16.mxu0 0
        %1541 = vmatmul.mubr.bf16.gmra.mrb[0].mxu0 %v1503
        %v1542 = vpop.f32.mrb[0].mxu0
        %v1543 = vadd.f32 0.0, %v1542
        %v1544 = vpop.f32.mrb[0].mxu0
        %v1545 = vpop.f32.mrb[0].mxu0
        %v1546 = vpop.f32.mrb[0].mxu0
        %1547 = vdwg.mxu0
        %1548 = vrot.lane.b32.xlu0 %v1211, 32
        %v1549 = vpop.permute.xlu0 %1548
        %1550 = vrot.lane.b32.xlu0 %v1212, 32
        %v1551 = vpop.permute.xlu0 %1550
        %v1553 = vsel %vm1213, %v1549, 0
        %v1556 = vsel %vm1213, %v1551, 0
        %1558 = vmatprep.subr.bf16.mxu0 0
        %1559 = vmatpush1.bf16.xpose.msra.mxu0 %v1556
        %1560 = vmatprep.subr.bf16.mxu0 0
        %1561 = vmatpush1.bf16.xpose.msra.mxu0 0
        %1562 = vmatprep.subr.bf16.mxu0 0
        %1563 = vmatpush1.bf16.xpose.msra.mxu0 0
        %1564 = vmatprep.subr.bf16.mxu0 0
        %1565 = vmatpush1.bf16.xpose.msra.mxu0 0
        %1566 = vmatprep.subr.bf16.mxu0 0
        %1567 = vmatpush1.bf16.xpose.msra.mxu0 0
        %1568 = vmatprep.subr.bf16.mxu0 0
        %1569 = vmatpush1.bf16.xpose.msra.mxu0 0
        %1570 = vmatprep.subr.bf16.mxu0 0
        %1571 = vmatpush1.bf16.xpose.msra.mxu0 0
        %1572 = vmatprep.subr.bf16.mxu0 0
        %1573 = vmatpush1.bf16.xpose.msra.mxu0 0
        %1574 = vmatprep.subr.bf16.mxu0 0
        %1575 = vmatpush1.bf16.xpose.msra.mxu0 0
        %1576 = vmatprep.subr.bf16.mxu0 0
        %1577 = vmatpush1.bf16.xpose.msra.mxu0 0
        %1578 = vmatprep.subr.bf16.mxu0 0
        %1579 = vmatpush1.bf16.xpose.msra.mxu0 0
        %1580 = vmatprep.subr.bf16.mxu0 0
        %1581 = vmatpush1.bf16.xpose.msra.mxu0 0
        %1582 = vmatprep.subr.bf16.mxu0 0
        %1583 = vmatpush1.bf16.xpose.msra.mxu0 0
        %1584 = vmatprep.subr.bf16.mxu0 0
        %1585 = vmatpush1.bf16.xpose.msra.mxu0 0
        %1586 = vmatprep.subr.bf16.mxu0 0
        %1587 = vmatpush1.bf16.xpose.msra.mxu0 0
        %1588 = vmatprep.subr.bf16.mxu0 0
        %1589 = vmatpush1.bf16.xpose.msra.mxu0 0
        %1590 = vmatprep.mubr.bf16.mxu0 0
        %1591 = vmatmul.mubr.bf16.gmra.mrb[0].mxu0 %v1553
        %v1592 = vpop.f32.mrb[0].mxu0
        %v1593 = vadd.f32 0.0, %v1592
        %v1594 = vpop.f32.mrb[0].mxu0
        %v1595 = vpop.f32.mrb[0].mxu0
        %v1596 = vpop.f32.mrb[0].mxu0
        %1597 = vdwg.mxu0
        %v1598 = vmul.f32 %v1593, 0.17677669
        %v1599 = vsel %vm1261, %v1598, -inf
        %1600 = vmax.xlane.f32.xlu0 %v1599
        %v1601 = vpop.xlane.xlu0 %1600
        %v1602 = vsub.f32 %v1598, %v1601
        %v1603 = vmul.f32 %v1602, 1.442695
        %v1604 = vpow.pop %v1603
        %v1605 = vsel %vm1261, %v1604, 0.0
        %1606 = vadd.xlane.f32.xlu0 %v1605
        %v1607 = vpop.xlane.xlu0 %1606
        %v1608 = vrcp.pop %v1607
        %v1609 = vmul.f32 %v1604, %v1608
        %v1610 = vpack.c.bf16 %v1609, %v1609
        %1611 = vrot.lane.b32.xlu0 %v1274, 32
        %v1612 = vpop.permute.xlu0 %1611
        %v1614 = vsel %vm1275, %v1610, 0
        %v1617 = vsel %vm1279, %v1612, 0
        %1619 = vmatprep.subr.bf16.mxu0 0
        %1620 = vmatpush1.bf16.msra.mxu0 %v1617
        %1621 = vmatprep.subr.bf16.mxu0 0
        %1622 = vmatpush1.bf16.msra.mxu0 0
        %1623 = vmatprep.subr.bf16.mxu0 0
        %1624 = vmatpush1.bf16.msra.mxu0 0
        %1625 = vmatprep.subr.bf16.mxu0 0
        %1626 = vmatpush1.bf16.msra.mxu0 0
        %1627 = vmatprep.subr.bf16.mxu0 0
        %1628 = vmatpush1.bf16.msra.mxu0 0
        %1629 = vmatprep.subr.bf16.mxu0 0
        %1630 = vmatpush1.bf16.msra.mxu0 0
        %1631 = vmatprep.subr.bf16.mxu0 0
        %1632 = vmatpush1.bf16.msra.mxu0 0
        %1633 = vmatprep.subr.bf16.mxu0 0
        %1634 = vmatpush1.bf16.msra.mxu0 0
        %1635 = vmatprep.subr.bf16.mxu0 0
        %1636 = vmatpush1.bf16.msra.mxu0 0
        %1637 = vmatprep.subr.bf16.mxu0 0
        %1638 = vmatpush1.bf16.msra.mxu0 0
        %1639 = vmatprep.subr.bf16.mxu0 0
        %1640 = vmatpush1.bf16.msra.mxu0 0
        %1641 = vmatprep.subr.bf16.mxu0 0
        %1642 = vmatpush1.bf16.msra.mxu0 0
        %1643 = vmatprep.subr.bf16.mxu0 0
        %1644 = vmatpush1.bf16.msra.mxu0 0
        %1645 = vmatprep.subr.bf16.mxu0 0
        %1646 = vmatpush1.bf16.msra.mxu0 0
        %1647 = vmatprep.subr.bf16.mxu0 0
        %1648 = vmatpush1.bf16.msra.mxu0 0
        %1649 = vmatprep.subr.bf16.mxu0 0
        %1650 = vmatpush1.bf16.msra.mxu0 0
        %1651 = vmatprep.mubr.bf16.mxu0 0
        %1652 = vmatmul.mubr.bf16.gmra.mrb[0].mxu0 %v1614
        %v1653 = vpop.f32.mrb[0].mxu0
        %v1654 = vadd.f32 0.0, %v1653
        %v1655 = vpop.f32.mrb[0].mxu0
        %v1656 = vpop.f32.mrb[0].mxu0
        %v1657 = vpop.f32.mrb[0].mxu0
        %1658 = vdwg.mxu0
        %1660 = vrot.lane.b32.xlu0 %v1432, 32
        %v1661 = vpop.permute.xlu0 %1660
        %1664 = vrot.lane.b32.xlu0 %v1543, 64
        %v1665 = vpop.permute.xlu0 %1664
        %1668 = vrot.lane.b32.xlu0 %v1654, 96
        %v1669 = vpop.permute.xlu0 %1668
        %v1671 = vsel %vm1213, %v1318, %v1661
        %vm1672 = vcmask 523264
        %v1673 = vsel %vm1672, %v1671, %v1665
        %vm1674 = vcmask 785408
        %v1675 = vsel %vm1674, %v1673, %v1669
        %v1676 = vrot.slane %v1211, 2
        %v1677 = vrot.slane %v1212, 2
        %v1679 = vsel %vm1213, %v1676, 0
        %v1682 = vsel %vm1213, %v1677, 0
        %1684 = vmatprep.subr.bf16.mxu0 0
        %1685 = vmatpush1.bf16.xpose.msra.mxu0 %v1682
        %1686 = vmatprep.subr.bf16.mxu0 0
        %1687 = vmatpush1.bf16.xpose.msra.mxu0 0
        %1688 = vmatprep.subr.bf16.mxu0 0
        %1689 = vmatpush1.bf16.xpose.msra.mxu0 0
        %1690 = vmatprep.subr.bf16.mxu0 0
        %1691 = vmatpush1.bf16.xpose.msra.mxu0 0
        %1692 = vmatprep.subr.bf16.mxu0 0
        %1693 = vmatpush1.bf16.xpose.msra.mxu0 0
        %1694 = vmatprep.subr.bf16.mxu0 0
        %1695 = vmatpush1.bf16.xpose.msra.mxu0 0
        %1696 = vmatprep.subr.bf16.mxu0 0
        %1697 = vmatpush1.bf16.xpose.msra.mxu0 0
        %1698 = vmatprep.subr.bf16.mxu0 0
        %1699 = vmatpush1.bf16.xpose.msra.mxu0 0
        %1700 = vmatprep.subr.bf16.mxu0 0
        %1701 = vmatpush1.bf16.xpose.msra.mxu0 0
        %1702 = vmatprep.subr.bf16.mxu0 0
        %1703 = vmatpush1.bf16.xpose.msra.mxu0 0
        %1704 = vmatprep.subr.bf16.mxu0 0
        %1705 = vmatpush1.bf16.xpose.msra.mxu0 0
        %1706 = vmatprep.subr.bf16.mxu0 0
        %1707 = vmatpush1.bf16.xpose.msra.mxu0 0
        %1708 = vmatprep.subr.bf16.mxu0 0
        %1709 = vmatpush1.bf16.xpose.msra.mxu0 0
        %1710 = vmatprep.subr.bf16.mxu0 0
        %1711 = vmatpush1.bf16.xpose.msra.mxu0 0
        %1712 = vmatprep.subr.bf16.mxu0 0
        %1713 = vmatpush1.bf16.xpose.msra.mxu0 0
        %1714 = vmatprep.subr.bf16.mxu0 0
        %1715 = vmatpush1.bf16.xpose.msra.mxu0 0
        %1716 = vmatprep.mubr.bf16.mxu0 0
        %1717 = vmatmul.mubr.bf16.gmra.mrb[0].mxu0 %v1679
        %v1718 = vpop.f32.mrb[0].mxu0
        %v1719 = vadd.f32 0.0, %v1718
        %v1720 = vpop.f32.mrb[0].mxu0
        %v1721 = vpop.f32.mrb[0].mxu0
        %v1722 = vpop.f32.mrb[0].mxu0
        %1723 = vdwg.mxu0
        %v1724 = vmul.f32 %v1719, 0.17677669
        %v1725 = vsel %vm1261, %v1724, -inf
        %1726 = vmax.xlane.f32.xlu0 %v1725
        %v1727 = vpop.xlane.xlu0 %1726
        %v1728 = vsub.f32 %v1724, %v1727
        %v1729 = vmul.f32 %v1728, 1.442695
        %v1730 = vpow.pop %v1729
        %v1731 = vsel %vm1261, %v1730, 0.0
        %1732 = vadd.xlane.f32.xlu0 %v1731
        %v1733 = vpop.xlane.xlu0 %1732
        %v1734 = vrcp.pop %v1733
        %v1735 = vmul.f32 %v1730, %v1734
        %v1736 = vpack.c.bf16 %v1735, %v1735
        %v1737 = vrot.slane %v1274, 2
        %v1739 = vsel %vm1275, %v1736, 0
        %v1742 = vsel %vm1279, %v1737, 0
        %1744 = vmatprep.subr.bf16.mxu0 0
        %1745 = vmatpush1.bf16.msra.mxu0 %v1742
        %1746 = vmatprep.subr.bf16.mxu0 0
        %1747 = vmatpush1.bf16.msra.mxu0 0
        %1748 = vmatprep.subr.bf16.mxu0 0
        %1749 = vmatpush1.bf16.msra.mxu0 0
        %1750 = vmatprep.subr.bf16.mxu0 0
        %1751 = vmatpush1.bf16.msra.mxu0 0
        %1752 = vmatprep.subr.bf16.mxu0 0
        %1753 = vmatpush1.bf16.msra.mxu0 0
        %1754 = vmatprep.subr.bf16.mxu0 0
        %1755 = vmatpush1.bf16.msra.mxu0 0
        %1756 = vmatprep.subr.bf16.mxu0 0
        %1757 = vmatpush1.bf16.msra.mxu0 0
        %1758 = vmatprep.subr.bf16.mxu0 0
        %1759 = vmatpush1.bf16.msra.mxu0 0
        %1760 = vmatprep.subr.bf16.mxu0 0
        %1761 = vmatpush1.bf16.msra.mxu0 0
        %1762 = vmatprep.subr.bf16.mxu0 0
        %1763 = vmatpush1.bf16.msra.mxu0 0
        %1764 = vmatprep.subr.bf16.mxu0 0
        %1765 = vmatpush1.bf16.msra.mxu0 0
        %1766 = vmatprep.subr.bf16.mxu0 0
        %1767 = vmatpush1.bf16.msra.mxu0 0
        %1768 = vmatprep.subr.bf16.mxu0 0
        %1769 = vmatpush1.bf16.msra.mxu0 0
        %1770 = vmatprep.subr.bf16.mxu0 0
        %1771 = vmatpush1.bf16.msra.mxu0 0
        %1772 = vmatprep.subr.bf16.mxu0 0
        %1773 = vmatpush1.bf16.msra.mxu0 0
        %1774 = vmatprep.subr.bf16.mxu0 0
        %1775 = vmatpush1.bf16.msra.mxu0 0
        %1776 = vmatprep.mubr.bf16.mxu0 0
        %1777 = vmatmul.mubr.bf16.gmra.mrb[0].mxu0 %v1739
        %v1778 = vpop.f32.mrb[0].mxu0
        %v1779 = vadd.f32 0.0, %v1778
        %v1780 = vpop.f32.mrb[0].mxu0
        %v1781 = vpop.f32.mrb[0].mxu0
        %v1782 = vpop.f32.mrb[0].mxu0
        %1783 = vdwg.mxu0
        %1784 = vrot.lane.b32.xlu0 %v1676, 96
        %v1785 = vpop.permute.xlu0 %1784
        %1786 = vrot.lane.b32.xlu0 %v1677, 96
        %v1787 = vpop.permute.xlu0 %1786
        %v1789 = vsel %vm1213, %v1785, 0
        %v1792 = vsel %vm1213, %v1787, 0
        %1794 = vmatprep.subr.bf16.mxu0 0
        %1795 = vmatpush1.bf16.xpose.msra.mxu0 %v1792
        %1796 = vmatprep.subr.bf16.mxu0 0
        %1797 = vmatpush1.bf16.xpose.msra.mxu0 0
        %1798 = vmatprep.subr.bf16.mxu0 0
        %1799 = vmatpush1.bf16.xpose.msra.mxu0 0
        %1800 = vmatprep.subr.bf16.mxu0 0
        %1801 = vmatpush1.bf16.xpose.msra.mxu0 0
        %1802 = vmatprep.subr.bf16.mxu0 0
        %1803 = vmatpush1.bf16.xpose.msra.mxu0 0
        %1804 = vmatprep.subr.bf16.mxu0 0
        %1805 = vmatpush1.bf16.xpose.msra.mxu0 0
        %1806 = vmatprep.subr.bf16.mxu0 0
        %1807 = vmatpush1.bf16.xpose.msra.mxu0 0
        %1808 = vmatprep.subr.bf16.mxu0 0
        %1809 = vmatpush1.bf16.xpose.msra.mxu0 0
        %1810 = vmatprep.subr.bf16.mxu0 0
        %1811 = vmatpush1.bf16.xpose.msra.mxu0 0
        %1812 = vmatprep.subr.bf16.mxu0 0
        %1813 = vmatpush1.bf16.xpose.msra.mxu0 0
        %1814 = vmatprep.subr.bf16.mxu0 0
        %1815 = vmatpush1.bf16.xpose.msra.mxu0 0
        %1816 = vmatprep.subr.bf16.mxu0 0
        %1817 = vmatpush1.bf16.xpose.msra.mxu0 0
        %1818 = vmatprep.subr.bf16.mxu0 0
        %1819 = vmatpush1.bf16.xpose.msra.mxu0 0
        %1820 = vmatprep.subr.bf16.mxu0 0
        %1821 = vmatpush1.bf16.xpose.msra.mxu0 0
        %1822 = vmatprep.subr.bf16.mxu0 0
        %1823 = vmatpush1.bf16.xpose.msra.mxu0 0
        %1824 = vmatprep.subr.bf16.mxu0 0
        %1825 = vmatpush1.bf16.xpose.msra.mxu0 0
        %1826 = vmatprep.mubr.bf16.mxu0 0
        %1827 = vmatmul.mubr.bf16.gmra.mrb[0].mxu0 %v1789
        %v1828 = vpop.f32.mrb[0].mxu0
        %v1829 = vadd.f32 0.0, %v1828
        %v1830 = vpop.f32.mrb[0].mxu0
        %v1831 = vpop.f32.mrb[0].mxu0
        %v1832 = vpop.f32.mrb[0].mxu0
        %1833 = vdwg.mxu0
        %v1834 = vmul.f32 %v1829, 0.17677669
        %v1835 = vsel %vm1261, %v1834, -inf
        %1836 = vmax.xlane.f32.xlu0 %v1835
        %v1837 = vpop.xlane.xlu0 %1836
        %v1838 = vsub.f32 %v1834, %v1837
        %v1839 = vmul.f32 %v1838, 1.442695
        %v1840 = vpow.pop %v1839
        %v1841 = vsel %vm1261, %v1840, 0.0
        %1842 = vadd.xlane.f32.xlu0 %v1841
        %v1843 = vpop.xlane.xlu0 %1842
        %v1844 = vrcp.pop %v1843
        %v1845 = vmul.f32 %v1840, %v1844
        %v1846 = vpack.c.bf16 %v1845, %v1845
        %1847 = vrot.lane.b32.xlu0 %v1737, 96
        %v1848 = vpop.permute.xlu0 %1847
        %v1850 = vsel %vm1275, %v1846, 0
        %v1853 = vsel %vm1279, %v1848, 0
        %1855 = vmatprep.subr.bf16.mxu0 0
        %1856 = vmatpush1.bf16.msra.mxu0 %v1853
        %1857 = vmatprep.subr.bf16.mxu0 0
        %1858 = vmatpush1.bf16.msra.mxu0 0
        %1859 = vmatprep.subr.bf16.mxu0 0
        %1860 = vmatpush1.bf16.msra.mxu0 0
        %1861 = vmatprep.subr.bf16.mxu0 0
        %1862 = vmatpush1.bf16.msra.mxu0 0
        %1863 = vmatprep.subr.bf16.mxu0 0
        %1864 = vmatpush1.bf16.msra.mxu0 0
        %1865 = vmatprep.subr.bf16.mxu0 0
        %1866 = vmatpush1.bf16.msra.mxu0 0
        %1867 = vmatprep.subr.bf16.mxu0 0
        %1868 = vmatpush1.bf16.msra.mxu0 0
        %1869 = vmatprep.subr.bf16.mxu0 0
        %1870 = vmatpush1.bf16.msra.mxu0 0
        %1871 = vmatprep.subr.bf16.mxu0 0
        %1872 = vmatpush1.bf16.msra.mxu0 0
        %1873 = vmatprep.subr.bf16.mxu0 0
        %1874 = vmatpush1.bf16.msra.mxu0 0
        %1875 = vmatprep.subr.bf16.mxu0 0
        %1876 = vmatpush1.bf16.msra.mxu0 0
        %1877 = vmatprep.subr.bf16.mxu0 0
        %1878 = vmatpush1.bf16.msra.mxu0 0
        %1879 = vmatprep.subr.bf16.mxu0 0
        %1880 = vmatpush1.bf16.msra.mxu0 0
        %1881 = vmatprep.subr.bf16.mxu0 0
        %1882 = vmatpush1.bf16.msra.mxu0 0
        %1883 = vmatprep.subr.bf16.mxu0 0
        %1884 = vmatpush1.bf16.msra.mxu0 0
        %1885 = vmatprep.subr.bf16.mxu0 0
        %1886 = vmatpush1.bf16.msra.mxu0 0
        %1887 = vmatprep.mubr.bf16.mxu0 0
        %1888 = vmatmul.mubr.bf16.gmra.mrb[0].mxu0 %v1850
        %v1889 = vpop.f32.mrb[0].mxu0
        %v1890 = vadd.f32 0.0, %v1889
        %v1891 = vpop.f32.mrb[0].mxu0
        %v1892 = vpop.f32.mrb[0].mxu0
        %v1893 = vpop.f32.mrb[0].mxu0
        %1894 = vdwg.mxu0
        %1895 = vrot.lane.b32.xlu0 %v1676, 64
        %v1896 = vpop.permute.xlu0 %1895
        %1897 = vrot.lane.b32.xlu0 %v1677, 64
        %v1898 = vpop.permute.xlu0 %1897
        %v1900 = vsel %vm1213, %v1896, 0
        %v1903 = vsel %vm1213, %v1898, 0
        %1905 = vmatprep.subr.bf16.mxu0 0
        %1906 = vmatpush1.bf16.xpose.msra.mxu0 %v1903
        %1907 = vmatprep.subr.bf16.mxu0 0
        %1908 = vmatpush1.bf16.xpose.msra.mxu0 0
        %1909 = vmatprep.subr.bf16.mxu0 0
        %1910 = vmatpush1.bf16.xpose.msra.mxu0 0
        %1911 = vmatprep.subr.bf16.mxu0 0
        %1912 = vmatpush1.bf16.xpose.msra.mxu0 0
        %1913 = vmatprep.subr.bf16.mxu0 0
        %1914 = vmatpush1.bf16.xpose.msra.mxu0 0
        %1915 = vmatprep.subr.bf16.mxu0 0
        %1916 = vmatpush1.bf16.xpose.msra.mxu0 0
        %1917 = vmatprep.subr.bf16.mxu0 0
        %1918 = vmatpush1.bf16.xpose.msra.mxu0 0
        %1919 = vmatprep.subr.bf16.mxu0 0
        %1920 = vmatpush1.bf16.xpose.msra.mxu0 0
        %1921 = vmatprep.subr.bf16.mxu0 0
        %1922 = vmatpush1.bf16.xpose.msra.mxu0 0
        %1923 = vmatprep.subr.bf16.mxu0 0
        %1924 = vmatpush1.bf16.xpose.msra.mxu0 0
        %1925 = vmatprep.subr.bf16.mxu0 0
        %1926 = vmatpush1.bf16.xpose.msra.mxu0 0
        %1927 = vmatprep.subr.bf16.mxu0 0
        %1928 = vmatpush1.bf16.xpose.msra.mxu0 0
        %1929 = vmatprep.subr.bf16.mxu0 0
        %1930 = vmatpush1.bf16.xpose.msra.mxu0 0
        %1931 = vmatprep.subr.bf16.mxu0 0
        %1932 = vmatpush1.bf16.xpose.msra.mxu0 0
        %1933 = vmatprep.subr.bf16.mxu0 0
        %1934 = vmatpush1.bf16.xpose.msra.mxu0 0
        %1935 = vmatprep.subr.bf16.mxu0 0
        %1936 = vmatpush1.bf16.xpose.msra.mxu0 0
        %1937 = vmatprep.mubr.bf16.mxu0 0
        %1938 = vmatmul.mubr.bf16.gmra.mrb[0].mxu0 %v1900
        %v1939 = vpop.f32.mrb[0].mxu0
        %v1940 = vadd.f32 0.0, %v1939
        %v1941 = vpop.f32.mrb[0].mxu0
        %v1942 = vpop.f32.mrb[0].mxu0
        %v1943 = vpop.f32.mrb[0].mxu0
        %1944 = vdwg.mxu0
        %v1945 = vmul.f32 %v1940, 0.17677669
        %v1946 = vsel %vm1261, %v1945, -inf
        %1947 = vmax.xlane.f32.xlu0 %v1946
        %v1948 = vpop.xlane.xlu0 %1947
        %v1949 = vsub.f32 %v1945, %v1948
        %v1950 = vmul.f32 %v1949, 1.442695
        %v1951 = vpow.pop %v1950
        %v1952 = vsel %vm1261, %v1951, 0.0
        %1953 = vadd.xlane.f32.xlu0 %v1952
        %v1954 = vpop.xlane.xlu0 %1953
        %v1955 = vrcp.pop %v1954
        %v1956 = vmul.f32 %v1951, %v1955
        %v1957 = vpack.c.bf16 %v1956, %v1956
        %1958 = vrot.lane.b32.xlu0 %v1737, 64
        %v1959 = vpop.permute.xlu0 %1958
        %v1961 = vsel %vm1275, %v1957, 0
        %v1964 = vsel %vm1279, %v1959, 0
        %1966 = vmatprep.subr.bf16.mxu0 0
        %1967 = vmatpush1.bf16.msra.mxu0 %v1964
        %1968 = vmatprep.subr.bf16.mxu0 0
        %1969 = vmatpush1.bf16.msra.mxu0 0
        %1970 = vmatprep.subr.bf16.mxu0 0
        %1971 = vmatpush1.bf16.msra.mxu0 0
        %1972 = vmatprep.subr.bf16.mxu0 0
        %1973 = vmatpush1.bf16.msra.mxu0 0
        %1974 = vmatprep.subr.bf16.mxu0 0
        %1975 = vmatpush1.bf16.msra.mxu0 0
        %1976 = vmatprep.subr.bf16.mxu0 0
        %1977 = vmatpush1.bf16.msra.mxu0 0
        %1978 = vmatprep.subr.bf16.mxu0 0
        %1979 = vmatpush1.bf16.msra.mxu0 0
        %1980 = vmatprep.subr.bf16.mxu0 0
        %1981 = vmatpush1.bf16.msra.mxu0 0
        %1982 = vmatprep.subr.bf16.mxu0 0
        %1983 = vmatpush1.bf16.msra.mxu0 0
        %1984 = vmatprep.subr.bf16.mxu0 0
        %1985 = vmatpush1.bf16.msra.mxu0 0
        %1986 = vmatprep.subr.bf16.mxu0 0
        %1987 = vmatpush1.bf16.msra.mxu0 0
        %1988 = vmatprep.subr.bf16.mxu0 0
        %1989 = vmatpush1.bf16.msra.mxu0 0
        %1990 = vmatprep.subr.bf16.mxu0 0
        %1991 = vmatpush1.bf16.msra.mxu0 0
        %1992 = vmatprep.subr.bf16.mxu0 0
        %1993 = vmatpush1.bf16.msra.mxu0 0
        %1994 = vmatprep.subr.bf16.mxu0 0
        %1995 = vmatpush1.bf16.msra.mxu0 0
        %1996 = vmatprep.subr.bf16.mxu0 0
        %1997 = vmatpush1.bf16.msra.mxu0 0
        %1998 = vmatprep.mubr.bf16.mxu0 0
        %1999 = vmatmul.mubr.bf16.gmra.mrb[0].mxu0 %v1961
        %v2000 = vpop.f32.mrb[0].mxu0
        %v2001 = vadd.f32 0.0, %v2000
        %v2002 = vpop.f32.mrb[0].mxu0
        %v2003 = vpop.f32.mrb[0].mxu0
        %v2004 = vpop.f32.mrb[0].mxu0
        %2005 = vdwg.mxu0
        %2006 = vrot.lane.b32.xlu0 %v1676, 32
        %v2007 = vpop.permute.xlu0 %2006
        %2008 = vrot.lane.b32.xlu0 %v1677, 32
        %v2009 = vpop.permute.xlu0 %2008
        %v2011 = vsel %vm1213, %v2007, 0
        %v2014 = vsel %vm1213, %v2009, 0
        %2016 = vmatprep.subr.bf16.mxu0 0
        %2017 = vmatpush1.bf16.xpose.msra.mxu0 %v2014
        %2018 = vmatprep.subr.bf16.mxu0 0
        %2019 = vmatpush1.bf16.xpose.msra.mxu0 0
        %2020 = vmatprep.subr.bf16.mxu0 0
        %2021 = vmatpush1.bf16.xpose.msra.mxu0 0
        %2022 = vmatprep.subr.bf16.mxu0 0
        %2023 = vmatpush1.bf16.xpose.msra.mxu0 0
        %2024 = vmatprep.subr.bf16.mxu0 0
        %2025 = vmatpush1.bf16.xpose.msra.mxu0 0
        %2026 = vmatprep.subr.bf16.mxu0 0
        %2027 = vmatpush1.bf16.xpose.msra.mxu0 0
        %2028 = vmatprep.subr.bf16.mxu0 0
        %2029 = vmatpush1.bf16.xpose.msra.mxu0 0
        %2030 = vmatprep.subr.bf16.mxu0 0
        %2031 = vmatpush1.bf16.xpose.msra.mxu0 0
        %2032 = vmatprep.subr.bf16.mxu0 0
        %2033 = vmatpush1.bf16.xpose.msra.mxu0 0
        %2034 = vmatprep.subr.bf16.mxu0 0
        %2035 = vmatpush1.bf16.xpose.msra.mxu0 0
        %2036 = vmatprep.subr.bf16.mxu0 0
        %2037 = vmatpush1.bf16.xpose.msra.mxu0 0
        %2038 = vmatprep.subr.bf16.mxu0 0
        %2039 = vmatpush1.bf16.xpose.msra.mxu0 0
        %2040 = vmatprep.subr.bf16.mxu0 0
        %2041 = vmatpush1.bf16.xpose.msra.mxu0 0
        %2042 = vmatprep.subr.bf16.mxu0 0
        %2043 = vmatpush1.bf16.xpose.msra.mxu0 0
        %2044 = vmatprep.subr.bf16.mxu0 0
        %2045 = vmatpush1.bf16.xpose.msra.mxu0 0
        %2046 = vmatprep.subr.bf16.mxu0 0
        %2047 = vmatpush1.bf16.xpose.msra.mxu0 0
        %2048 = vmatprep.mubr.bf16.mxu0 0
        %2049 = vmatmul.mubr.bf16.gmra.mrb[0].mxu0 %v2011
        %v2050 = vpop.f32.mrb[0].mxu0
        %v2051 = vadd.f32 0.0, %v2050
        %v2052 = vpop.f32.mrb[0].mxu0
        %v2053 = vpop.f32.mrb[0].mxu0
        %v2054 = vpop.f32.mrb[0].mxu0
        %2055 = vdwg.mxu0
        %v2056 = vmul.f32 %v2051, 0.17677669
        %v2057 = vsel %vm1261, %v2056, -inf
        %2058 = vmax.xlane.f32.xlu0 %v2057
        %v2059 = vpop.xlane.xlu0 %2058
        %v2060 = vsub.f32 %v2056, %v2059
        %v2061 = vmul.f32 %v2060, 1.442695
        %v2062 = vpow.pop %v2061
        %v2063 = vsel %vm1261, %v2062, 0.0
        %2064 = vadd.xlane.f32.xlu0 %v2063
        %v2065 = vpop.xlane.xlu0 %2064
        %v2066 = vrcp.pop %v2065
        %v2067 = vmul.f32 %v2062, %v2066
        %v2068 = vpack.c.bf16 %v2067, %v2067
        %2069 = vrot.lane.b32.xlu0 %v1737, 32
        %v2070 = vpop.permute.xlu0 %2069
        %v2072 = vsel %vm1275, %v2068, 0
        %v2075 = vsel %vm1279, %v2070, 0
        %2077 = vmatprep.subr.bf16.mxu0 0
        %2078 = vmatpush1.bf16.msra.mxu0 %v2075
        %2079 = vmatprep.subr.bf16.mxu0 0
        %2080 = vmatpush1.bf16.msra.mxu0 0
        %2081 = vmatprep.subr.bf16.mxu0 0
        %2082 = vmatpush1.bf16.msra.mxu0 0
        %2083 = vmatprep.subr.bf16.mxu0 0
        %2084 = vmatpush1.bf16.msra.mxu0 0
        %2085 = vmatprep.subr.bf16.mxu0 0
        %2086 = vmatpush1.bf16.msra.mxu0 0
        %2087 = vmatprep.subr.bf16.mxu0 0
        %2088 = vmatpush1.bf16.msra.mxu0 0
        %2089 = vmatprep.subr.bf16.mxu0 0
        %2090 = vmatpush1.bf16.msra.mxu0 0
        %2091 = vmatprep.subr.bf16.mxu0 0
        %2092 = vmatpush1.bf16.msra.mxu0 0
        %2093 = vmatprep.subr.bf16.mxu0 0
        %2094 = vmatpush1.bf16.msra.mxu0 0
        %2095 = vmatprep.subr.bf16.mxu0 0
        %2096 = vmatpush1.bf16.msra.mxu0 0
        %2097 = vmatprep.subr.bf16.mxu0 0
        %2098 = vmatpush1.bf16.msra.mxu0 0
        %2099 = vmatprep.subr.bf16.mxu0 0
        %2100 = vmatpush1.bf16.msra.mxu0 0
        %2101 = vmatprep.subr.bf16.mxu0 0
        %2102 = vmatpush1.bf16.msra.mxu0 0
        %2103 = vmatprep.subr.bf16.mxu0 0
        %2104 = vmatpush1.bf16.msra.mxu0 0
        %2105 = vmatprep.subr.bf16.mxu0 0
        %2106 = vmatpush1.bf16.msra.mxu0 0
        %2107 = vmatprep.subr.bf16.mxu0 0
        %2108 = vmatpush1.bf16.msra.mxu0 0
        %2109 = vmatprep.mubr.bf16.mxu0 0
        %2110 = vmatmul.mubr.bf16.gmra.mrb[0].mxu0 %v2072
        %v2111 = vpop.f32.mrb[0].mxu0
        %v2112 = vadd.f32 0.0, %v2111
        %v2113 = vpop.f32.mrb[0].mxu0
        %v2114 = vpop.f32.mrb[0].mxu0
        %v2115 = vpop.f32.mrb[0].mxu0
        %2116 = vdwg.mxu0
        %2118 = vrot.lane.b32.xlu0 %v1890, 32
        %v2119 = vpop.permute.xlu0 %2118
        %2122 = vrot.lane.b32.xlu0 %v2001, 64
        %v2123 = vpop.permute.xlu0 %2122
        %2126 = vrot.lane.b32.xlu0 %v2112, 96
        %v2127 = vpop.permute.xlu0 %2126
        %v2129 = vsel %vm1213, %v1779, %v2119
        %v2130 = vsel %vm1672, %v2129, %v2123
        %v2131 = vsel %vm1674, %v2130, %v2127
        %v2133 = vrot.slane %v2131, 4
        %vm2135 = vcmask 1043456
        %v2136 = vsel %vm2135, %v1675, %v2133
        %v2137 = vpack.c.bf16 %v2136, %v2136
        %v2138 = vld [vmem:[%s684] sm:$0xf]
        %v2139 = vld [vmem:[%s684 + $0x4] sm:$0xf]
        %v2140 = vld [vmem:[%s684 + $0x8] sm:$0xf]
        %v2141 = vld [vmem:[%s684 + $0xc] sm:$0xf]
        %v2142 = vld [vmem:[%s684 + $0x10] sm:$0xf]
        %v2143 = vld [vmem:[%s684 + $0x14] sm:$0xf]
        %v2144 = vld [vmem:[%s684 + $0x18] sm:$0xf]
        %v2145 = vld [vmem:[%s684 + $0x1c] sm:$0xf]
        %v2146 = vld [vmem:[%s684 + $0x20] sm:$0xf]
        %v2147 = vld [vmem:[%s684 + $0x24] sm:$0xf]
        %v2148 = vld [vmem:[%s684 + $0x28] sm:$0xf]
        %v2149 = vld [vmem:[%s684 + $0x2c] sm:$0xf]
        %v2150 = vld [vmem:[%s684 + $0x30] sm:$0xf]
        %v2151 = vld [vmem:[%s684 + $0x34] sm:$0xf]
        %v2152 = vld [vmem:[%s684 + $0x38] sm:$0xf]
        %v2153 = vld [vmem:[%s684 + $0x3c] sm:$0xf]
        %v2170 = vunpack.c.l.b16 %v2138
        %v2171 = vunpack.c.l.b16 %v2139
        %v2172 = vunpack.c.l.b16 %v2140
        %v2173 = vunpack.c.l.b16 %v2141
        %v2174 = vunpack.c.l.b16 %v2142
        %v2175 = vunpack.c.l.b16 %v2143
        %v2176 = vunpack.c.l.b16 %v2144
        %v2177 = vunpack.c.l.b16 %v2145
        %v2178 = vunpack.c.l.b16 %v2146
        %v2179 = vunpack.c.l.b16 %v2147
        %v2180 = vunpack.c.l.b16 %v2148
        %v2181 = vunpack.c.l.b16 %v2149
        %v2182 = vunpack.c.l.b16 %v2150
        %v2183 = vunpack.c.l.b16 %v2151
        %v2184 = vunpack.c.l.b16 %v2152
        %v2185 = vunpack.c.l.b16 %v2153
        %v2186 = vpack.c.b16 %v2171, %v2170
        %v2187 = vpack.c.b16 %v2173, %v2172
        %v2188 = vpack.c.b16 %v2175, %v2174
        %v2189 = vpack.c.b16 %v2177, %v2176
        %v2190 = vpack.c.b16 %v2179, %v2178
        %v2191 = vpack.c.b16 %v2181, %v2180
        %v2192 = vpack.c.b16 %v2183, %v2182
        %v2193 = vpack.c.b16 %v2185, %v2184
        %2202 = vmatprep.subr.bf16.mxu0 0
        %2203 = vmatpush1.bf16.msra.mxu0 %v2186
        %2204 = vmatprep.subr.bf16.mxu0 0
        %2205 = vmatpush1.bf16.msra.mxu0 %v2187
        %2206 = vmatprep.subr.bf16.mxu0 0
        %2207 = vmatpush1.bf16.msra.mxu0 %v2188
        %2208 = vmatprep.subr.bf16.mxu0 0
        %2209 = vmatpush1.bf16.msra.mxu0 %v2189
        %2210 = vmatprep.subr.bf16.mxu0 0
        %2211 = vmatpush1.bf16.msra.mxu0 %v2190
        %2212 = vmatprep.subr.bf16.mxu0 0
        %2213 = vmatpush1.bf16.msra.mxu0 %v2191
        %2214 = vmatprep.subr.bf16.mxu0 0
        %2215 = vmatpush1.bf16.msra.mxu0 %v2192
        %2216 = vmatprep.subr.bf16.mxu0 0
        %2217 = vmatpush1.bf16.msra.mxu0 %v2193
        %2218 = vmatprep.subr.bf16.mxu0 0
        %2219 = vmatpush1.bf16.msra.mxu0 0
        %2220 = vmatprep.subr.bf16.mxu0 0
        %2221 = vmatpush1.bf16.msra.mxu0 0
        %2222 = vmatprep.subr.bf16.mxu0 0
        %2223 = vmatpush1.bf16.msra.mxu0 0
        %2224 = vmatprep.subr.bf16.mxu0 0
        %2225 = vmatpush1.bf16.msra.mxu0 0
        %2226 = vmatprep.subr.bf16.mxu0 0
        %2227 = vmatpush1.bf16.msra.mxu0 0
        %2228 = vmatprep.subr.bf16.mxu0 0
        %2229 = vmatpush1.bf16.msra.mxu0 0
        %2230 = vmatprep.subr.bf16.mxu0 0
        %2231 = vmatpush1.bf16.msra.mxu0 0
        %2232 = vmatprep.subr.bf16.mxu0 0
        %2233 = vmatpush1.bf16.msra.mxu0 0
        %2234 = vmatprep.mubr.bf16.mxu0 0
        %2235 = vmatmul.mubr.bf16.gmra.mrb[0].mxu0 %v2137
        %v2236 = vpop.f32.mrb[0].mxu0
        %v2237 = vadd.f32 0.0, %v2236
        %v2238 = vpop.f32.mrb[0].mxu0
        %v2239 = vpop.f32.mrb[0].mxu0
        %v2240 = vpop.f32.mrb[0].mxu0
        %2241 = vdwg.mxu0
        %v2242 = vadd.f32 %v968, %v2237
        %2243 = vadd.xlane.f32.xlu0 %v2242
        %v2244 = vpop.xlane.xlu0 %2243
        %v2245 = vrcp.pop 128.0
        %v2246 = vmul.f32 %v2244, %v2245
        %v2247 = vsub.f32 %v2242, %v2246
        %v2248 = vmul.f32 %v2247, %v2247
        %2249 = vadd.xlane.f32.xlu0 %v2248
        %v2250 = vpop.xlane.xlu0 %2249
        %v2251 = vmul.f32 %v2250, %v2245
        %v2252 = vadd.f32 %v2251, 1e-05
        %v2253 = vrsqrt.pop %v2252
        %v2254 = vmul.f32 %v2247, %v2253
        %v2255 = vld [vmem:[%s777] sm:$0x1]
        %v2257 = vlaneseq
        %v2258 = vshrl.u32 %v2257, 7
        %v2259 = vsub.s32 0, %v2258
        %v2260 = vrot.slane %v2255, %v2259
        %v2262 = vmul.f32 %v2254, %v2260
        %v2263 = vpack.c.bf16 %v2262, %v2262
        %v2264 = vld [vmem:[%s693] sm:$0xff]
        %v2265 = vld [vmem:[%s693 + $0x8] sm:$0xff]
        %v2266 = vld [vmem:[%s693 + $0x10] sm:$0xff]
        %v2267 = vld [vmem:[%s693 + $0x18] sm:$0xff]
        %v2268 = vld [vmem:[%s693 + $0x20] sm:$0xff]
        %v2269 = vld [vmem:[%s693 + $0x28] sm:$0xff]
        %v2270 = vld [vmem:[%s693 + $0x30] sm:$0xff]
        %v2271 = vld [vmem:[%s693 + $0x38] sm:$0xff]
        %v2272 = vld [vmem:[%s693 + $0x40] sm:$0xff]
        %v2273 = vld [vmem:[%s693 + $0x48] sm:$0xff]
        %v2274 = vld [vmem:[%s693 + $0x50] sm:$0xff]
        %v2275 = vld [vmem:[%s693 + $0x58] sm:$0xff]
        %v2276 = vld [vmem:[%s693 + $0x60] sm:$0xff]
        %v2277 = vld [vmem:[%s693 + $0x68] sm:$0xff]
        %v2278 = vld [vmem:[%s693 + $0x70] sm:$0xff]
        %v2279 = vld [vmem:[%s693 + $0x78] sm:$0xff]
        %v2296 = vunpack.c.l.b16 %v2264
        %v2297 = vunpack.c.h.b16 %v2264
        %v2298 = vunpack.c.l.b16 %v2265
        %v2299 = vunpack.c.h.b16 %v2265
        %v2300 = vunpack.c.l.b16 %v2266
        %v2301 = vunpack.c.h.b16 %v2266
        %v2302 = vunpack.c.l.b16 %v2267
        %v2303 = vunpack.c.h.b16 %v2267
        %v2304 = vunpack.c.l.b16 %v2268
        %v2305 = vunpack.c.h.b16 %v2268
        %v2306 = vunpack.c.l.b16 %v2269
        %v2307 = vunpack.c.h.b16 %v2269
        %v2308 = vunpack.c.l.b16 %v2270
        %v2309 = vunpack.c.h.b16 %v2270
        %v2310 = vunpack.c.l.b16 %v2271
        %v2311 = vunpack.c.h.b16 %v2271
        %v2312 = vunpack.c.l.b16 %v2272
        %v2313 = vunpack.c.h.b16 %v2272
        %v2314 = vunpack.c.l.b16 %v2273
        %v2315 = vunpack.c.h.b16 %v2273
        %v2316 = vunpack.c.l.b16 %v2274
        %v2317 = vunpack.c.h.b16 %v2274
        %v2318 = vunpack.c.l.b16 %v2275
        %v2319 = vunpack.c.h.b16 %v2275
        %v2320 = vunpack.c.l.b16 %v2276
        %v2321 = vunpack.c.h.b16 %v2276
        %v2322 = vunpack.c.l.b16 %v2277
        %v2323 = vunpack.c.h.b16 %v2277
        %v2324 = vunpack.c.l.b16 %v2278
        %v2325 = vunpack.c.h.b16 %v2278
        %v2326 = vunpack.c.l.b16 %v2279
        %v2327 = vunpack.c.h.b16 %v2279
        %v2328 = vpack.c.b16 %v2298, %v2296
        %v2329 = vpack.c.b16 %v2299, %v2297
        %v2330 = vpack.c.b16 %v2302, %v2300
        %v2331 = vpack.c.b16 %v2303, %v2301
        %v2332 = vpack.c.b16 %v2306, %v2304
        %v2333 = vpack.c.b16 %v2307, %v2305
        %v2334 = vpack.c.b16 %v2310, %v2308
        %v2335 = vpack.c.b16 %v2311, %v2309
        %v2336 = vpack.c.b16 %v2314, %v2312
        %v2337 = vpack.c.b16 %v2315, %v2313
        %v2338 = vpack.c.b16 %v2318, %v2316
        %v2339 = vpack.c.b16 %v2319, %v2317
        %v2340 = vpack.c.b16 %v2322, %v2320
        %v2341 = vpack.c.b16 %v2323, %v2321
        %v2342 = vpack.c.b16 %v2326, %v2324
        %v2343 = vpack.c.b16 %v2327, %v2325
        %2360 = vmatprep.subr.bf16.mxu0 %v2329
        %2361 = vmatpush1.bf16.msra.mxu0 %v2328
        %2362 = vmatprep.subr.bf16.mxu0 %v2331
        %2363 = vmatpush1.bf16.msra.mxu0 %v2330
        %2364 = vmatprep.subr.bf16.mxu0 %v2333
        %2365 = vmatpush1.bf16.msra.mxu0 %v2332
        %2366 = vmatprep.subr.bf16.mxu0 %v2335
        %2367 = vmatpush1.bf16.msra.mxu0 %v2334
        %2368 = vmatprep.subr.bf16.mxu0 %v2337
        %2369 = vmatpush1.bf16.msra.mxu0 %v2336
        %2370 = vmatprep.subr.bf16.mxu0 %v2339
        %2371 = vmatpush1.bf16.msra.mxu0 %v2338
        %2372 = vmatprep.subr.bf16.mxu0 %v2341
        %2373 = vmatpush1.bf16.msra.mxu0 %v2340
        %2374 = vmatprep.subr.bf16.mxu0 %v2343
        %2375 = vmatpush1.bf16.msra.mxu0 %v2342
        %2376 = vmatprep.subr.bf16.mxu0 0
        %2377 = vmatpush1.bf16.msra.mxu0 0
        %2378 = vmatprep.subr.bf16.mxu0 0
        %2379 = vmatpush1.bf16.msra.mxu0 0
        %2380 = vmatprep.subr.bf16.mxu0 0
        %2381 = vmatpush1.bf16.msra.mxu0 0
        %2382 = vmatprep.subr.bf16.mxu0 0
        %2383 = vmatpush1.bf16.msra.mxu0 0
        %2384 = vmatprep.subr.bf16.mxu0 0
        %2385 = vmatpush1.bf16.msra.mxu0 0
        %2386 = vmatprep.subr.bf16.mxu0 0
        %2387 = vmatpush1.bf16.msra.mxu0 0
        %2388 = vmatprep.subr.bf16.mxu0 0
        %2389 = vmatpush1.bf16.msra.mxu0 0
        %2390 = vmatprep.subr.bf16.mxu0 0
        %2391 = vmatpush1.bf16.msra.mxu0 0
        %2392 = vmatprep.mubr.bf16.mxu0 0
        %2393 = vmatmul.mubr.bf16.gmra.mrb[0].mxu0 %v2263
        %v2394 = vpop.f32.mrb[0].mxu0
        %v2395 = vadd.f32 0.0, %v2394
        %v2396 = vpop.f32.mrb[0].mxu0
        %v2397 = vadd.f32 0.0, %v2396
        %v2398 = vpop.f32.mrb[0].mxu0
        %v2399 = vpop.f32.mrb[0].mxu0
        %2400 = vdwg.mxu0
        %v2401 = vmul.f32 %v2395, %v2395
        %v2402 = vmul.f32 %v2397, %v2397
        %v2403 = vmul.f32 %v2395, %v2401
        %v2404 = vmul.f32 %v2397, %v2402
        %v2405 = vmul.f32 %v2403, 0.044715
        %v2406 = vmul.f32 %v2404, 0.044715
        %v2407 = vadd.f32 %v2395, %v2405
        %v2408 = vadd.f32 %v2397, %v2406
        %v2409 = vmul.f32 %v2407, 0.7978846
        %v2410 = vmul.f32 %v2408, 0.7978846
        %v2411 = vtanh.pop %v2409
        %v2412 = vtanh.pop %v2410
        %v2413 = vadd.f32 %v2411, 1.0
        %v2414 = vadd.f32 %v2412, 1.0
        %v2415 = vmul.f32 %v2413, 0.5
        %v2416 = vmul.f32 %v2414, 0.5
        %v2417 = vmul.f32 %v2395, %v2415
        %v2418 = vmul.f32 %v2397, %v2416
        %v2419 = vpack.c.bf16 %v2417, %v2417
        %v2420 = vpack.c.bf16 %v2418, %v2418
        %v2421 = vld [vmem:[%s702] sm:$0xf]
        %v2422 = vld [vmem:[%s702 + $0x4] sm:$0xf]
        %v2423 = vld [vmem:[%s702 + $0x8] sm:$0xf]
        %v2424 = vld [vmem:[%s702 + $0xc] sm:$0xf]
        %v2425 = vld [vmem:[%s702 + $0x10] sm:$0xf]
        %v2426 = vld [vmem:[%s702 + $0x14] sm:$0xf]
        %v2427 = vld [vmem:[%s702 + $0x18] sm:$0xf]
        %v2428 = vld [vmem:[%s702 + $0x1c] sm:$0xf]
        %v2429 = vld [vmem:[%s702 + $0x20] sm:$0xf]
        %v2430 = vld [vmem:[%s702 + $0x24] sm:$0xf]
        %v2431 = vld [vmem:[%s702 + $0x28] sm:$0xf]
        %v2432 = vld [vmem:[%s702 + $0x2c] sm:$0xf]
        %v2433 = vld [vmem:[%s702 + $0x30] sm:$0xf]
        %v2434 = vld [vmem:[%s702 + $0x34] sm:$0xf]
        %v2435 = vld [vmem:[%s702 + $0x38] sm:$0xf]
        %v2436 = vld [vmem:[%s702 + $0x3c] sm:$0xf]
        %v2437 = vld [vmem:[%s702 + $0x40] sm:$0xf]
        %v2438 = vld [vmem:[%s702 + $0x44] sm:$0xf]
        %v2439 = vld [vmem:[%s702 + $0x48] sm:$0xf]
        %v2440 = vld [vmem:[%s702 + $0x4c] sm:$0xf]
        %v2441 = vld [vmem:[%s702 + $0x50] sm:$0xf]
        %v2442 = vld [vmem:[%s702 + $0x54] sm:$0xf]
        %v2443 = vld [vmem:[%s702 + $0x58] sm:$0xf]
        %v2444 = vld [vmem:[%s702 + $0x5c] sm:$0xf]
        %v2445 = vld [vmem:[%s702 + $0x60] sm:$0xf]
        %v2446 = vld [vmem:[%s702 + $0x64] sm:$0xf]
        %v2447 = vld [vmem:[%s702 + $0x68] sm:$0xf]
        %v2448 = vld [vmem:[%s702 + $0x6c] sm:$0xf]
        %v2449 = vld [vmem:[%s702 + $0x70] sm:$0xf]
        %v2450 = vld [vmem:[%s702 + $0x74] sm:$0xf]
        %v2451 = vld [vmem:[%s702 + $0x78] sm:$0xf]
        %v2452 = vld [vmem:[%s702 + $0x7c] sm:$0xf]
        %v2485 = vunpack.c.l.b16 %v2421
        %v2486 = vunpack.c.l.b16 %v2422
        %v2487 = vunpack.c.l.b16 %v2423
        %v2488 = vunpack.c.l.b16 %v2424
        %v2489 = vunpack.c.l.b16 %v2425
        %v2490 = vunpack.c.l.b16 %v2426
        %v2491 = vunpack.c.l.b16 %v2427
        %v2492 = vunpack.c.l.b16 %v2428
        %v2493 = vunpack.c.l.b16 %v2429
        %v2494 = vunpack.c.l.b16 %v2430
        %v2495 = vunpack.c.l.b16 %v2431
        %v2496 = vunpack.c.l.b16 %v2432
        %v2497 = vunpack.c.l.b16 %v2433
        %v2498 = vunpack.c.l.b16 %v2434
        %v2499 = vunpack.c.l.b16 %v2435
        %v2500 = vunpack.c.l.b16 %v2436
        %v2501 = vunpack.c.l.b16 %v2437
        %v2502 = vunpack.c.l.b16 %v2438
        %v2503 = vunpack.c.l.b16 %v2439
        %v2504 = vunpack.c.l.b16 %v2440
        %v2505 = vunpack.c.l.b16 %v2441
        %v2506 = vunpack.c.l.b16 %v2442
        %v2507 = vunpack.c.l.b16 %v2443
        %v2508 = vunpack.c.l.b16 %v2444
        %v2509 = vunpack.c.l.b16 %v2445
        %v2510 = vunpack.c.l.b16 %v2446
        %v2511 = vunpack.c.l.b16 %v2447
        %v2512 = vunpack.c.l.b16 %v2448
        %v2513 = vunpack.c.l.b16 %v2449
        %v2514 = vunpack.c.l.b16 %v2450
        %v2515 = vunpack.c.l.b16 %v2451
        %v2516 = vunpack.c.l.b16 %v2452
        %v2517 = vpack.c.b16 %v2486, %v2485
        %v2518 = vpack.c.b16 %v2488, %v2487
        %v2519 = vpack.c.b16 %v2490, %v2489
        %v2520 = vpack.c.b16 %v2492, %v2491
        %v2521 = vpack.c.b16 %v2494, %v2493
        %v2522 = vpack.c.b16 %v2496, %v2495
        %v2523 = vpack.c.b16 %v2498, %v2497
        %v2524 = vpack.c.b16 %v2500, %v2499
        %v2525 = vpack.c.b16 %v2502, %v2501
        %v2526 = vpack.c.b16 %v2504, %v2503
        %v2527 = vpack.c.b16 %v2506, %v2505
        %v2528 = vpack.c.b16 %v2508, %v2507
        %v2529 = vpack.c.b16 %v2510, %v2509
        %v2530 = vpack.c.b16 %v2512, %v2511
        %v2531 = vpack.c.b16 %v2514, %v2513
        %v2532 = vpack.c.b16 %v2516, %v2515
        %2549 = vmatprep.subr.bf16.mxu0 0
        %2550 = vmatpush1.bf16.msra.mxu0 %v2517
        %2551 = vmatprep.subr.bf16.mxu0 0
        %2552 = vmatpush1.bf16.msra.mxu0 %v2518
        %2553 = vmatprep.subr.bf16.mxu0 0
        %2554 = vmatpush1.bf16.msra.mxu0 %v2519
        %2555 = vmatprep.subr.bf16.mxu0 0
        %2556 = vmatpush1.bf16.msra.mxu0 %v2520
        %2557 = vmatprep.subr.bf16.mxu0 0
        %2558 = vmatpush1.bf16.msra.mxu0 %v2521
        %2559 = vmatprep.subr.bf16.mxu0 0
        %2560 = vmatpush1.bf16.msra.mxu0 %v2522
        %2561 = vmatprep.subr.bf16.mxu0 0
        %2562 = vmatpush1.bf16.msra.mxu0 %v2523
        %2563 = vmatprep.subr.bf16.mxu0 0
        %2564 = vmatpush1.bf16.msra.mxu0 %v2524
        %2565 = vmatprep.subr.bf16.mxu0 0
        %2566 = vmatpush1.bf16.msra.mxu0 %v2525
        %2567 = vmatprep.subr.bf16.mxu0 0
        %2568 = vmatpush1.bf16.msra.mxu0 %v2526
        %2569 = vmatprep.subr.bf16.mxu0 0
        %2570 = vmatpush1.bf16.msra.mxu0 %v2527
        %2571 = vmatprep.subr.bf16.mxu0 0
        %2572 = vmatpush1.bf16.msra.mxu0 %v2528
        %2573 = vmatprep.subr.bf16.mxu0 0
        %2574 = vmatpush1.bf16.msra.mxu0 %v2529
        %2575 = vmatprep.subr.bf16.mxu0 0
        %2576 = vmatpush1.bf16.msra.mxu0 %v2530
        %2577 = vmatprep.subr.bf16.mxu0 0
        %2578 = vmatpush1.bf16.msra.mxu0 %v2531
        %2579 = vmatprep.subr.bf16.mxu0 0
        %2580 = vmatpush1.bf16.msra.mxu0 %v2532
        %2581 = vmatprep.mubr.bf16.mxu0 %v2420
        %2582 = vmatmul.mubr.bf16.gmra.mrb[0].mxu0 %v2419
        %v2583 = vpop.f32.mrb[0].mxu0
        %v2584 = vadd.f32 0.0, %v2583
        %v2585 = vpop.f32.mrb[0].mxu0
        %v2586 = vpop.f32.mrb[0].mxu0
        %v2587 = vpop.f32.mrb[0].mxu0
        %2588 = vdwg.mxu0
        %v2589 = vadd.f32 %v2262, %v2584
        %2590 = vadd.xlane.f32.xlu0 %v2589
        %v2591 = vpop.xlane.xlu0 %2590
        %v2592 = vmul.f32 %v2591, %v2245
        %v2593 = vsub.f32 %v2589, %v2592
        %v2594 = vmul.f32 %v2593, %v2593
        %2595 = vadd.xlane.f32.xlu0 %v2594
        %v2596 = vpop.xlane.xlu0 %2595
        %v2597 = vmul.f32 %v2596, %v2245
        %v2598 = vadd.f32 %v2597, 1e-05
        %v2599 = vrsqrt.pop %v2598
        %v2600 = vmul.f32 %v2593, %v2599
        %v2601 = vld [vmem:[%s780] sm:$0x1]
        %v2603 = vlaneseq
        %v2604 = vshrl.u32 %v2603, 7
        %v2605 = vsub.s32 0, %v2604
        %v2606 = vrot.slane %v2601, %v2605
        %v2608 = vmul.f32 %v2600, %v2606
        %2609 = vst [vmem:[#allocation2] sm:$0xff] %v2608
        %p2610 = scmp.eq.s32.totalorder %s41, 1
        // Predicated region
        $region121: #{tpu_custom_call.1} parent=99 // pred_check
          %p2611 = pneg %p2610
        $region122: #{tpu_custom_call.1} parent=99 // pred_check_branch
          %2613 = sbr.rel (%p2611) target = $region124
        $region123: #{tpu_custom_call.1} parent=99 // pred_region
          %v2614 = vsel %vm2135, %v2608, 0.0
          %v2615 = vrot.slane %v2614, 4
          %v2616 = vadd.f32 %v2614, %v2615
          %v2617 = vrot.slane %v2616, 2
          %v2618 = vadd.f32 %v2616, %v2617
          %v2619 = vrot.slane %v2618, 1
          %v2620 = vadd.f32 %v2618, %v2619
          %v2621 = vrcp.pop 4.0
          %v2622 = vmul.f32 %v2620, %v2621
          %v2624 = vrot.slane %v2608, 4
          %v2626 = vsel %vm2135, %v2624, 0.0
          %v2627 = vrot.slane %v2626, 4
          %v2628 = vadd.f32 %v2626, %v2627
          %v2629 = vrot.slane %v2628, 2
          %v2630 = vadd.f32 %v2628, %v2629
          %v2631 = vrot.slane %v2630, 1
          %v2632 = vadd.f32 %v2630, %v2631
          %v2633 = vmul.f32 %v2632, %v2621
          %vm2634 = vcmask 1040384
          %v2635 = vsel %vm2634, %v2622, %v2633
          %v2636 = vld [vmem:[%s10] sm:$0xff]
          %v2637 = vld [vmem:[%s10 + $0x8] sm:$0xff]
          %v2638 = vld [vmem:[%s10 + $0x10] sm:$0xff]
          %v2639 = vld [vmem:[%s10 + $0x18] sm:$0xff]
          %v2640 = vld [vmem:[%s10 + $0x20] sm:$0xff]
          %v2641 = vld [vmem:[%s10 + $0x28] sm:$0xff]
          %v2642 = vld [vmem:[%s10 + $0x30] sm:$0xff]
          %v2643 = vld [vmem:[%s10 + $0x38] sm:$0xff]
          %v2644 = vld [vmem:[%s10 + $0x40] sm:$0xff]
          %v2645 = vld [vmem:[%s10 + $0x48] sm:$0xff]
          %v2646 = vld [vmem:[%s10 + $0x50] sm:$0xff]
          %v2647 = vld [vmem:[%s10 + $0x58] sm:$0xff]
          %v2648 = vld [vmem:[%s10 + $0x60] sm:$0xff]
          %v2649 = vld [vmem:[%s10 + $0x68] sm:$0xff]
          %v2650 = vld [vmem:[%s10 + $0x70] sm:$0xff]
          %v2651 = vld [vmem:[%s10 + $0x78] sm:$0xff]
          %v2652 = vld [vmem:[%s11] sm:$0x1]
          %v2654 = vlaneseq
          %v2655 = vshrl.u32 %v2654, 7
          %v2656 = vsub.s32 0, %v2655
          %v2657 = vrot.slane %v2652, %v2656
          %2659 = vmatprep.subr.mxu0 0.0
          %2660 = vmatpush1.msra.mxu0 %v2636
          %2661 = vmatprep.subr.mxu0 0.0
          %2662 = vmatpush1.msra.mxu0 %v2637
          %2663 = vmatprep.subr.mxu0 0.0
          %2664 = vmatpush1.msra.mxu0 %v2638
          %2665 = vmatprep.subr.mxu0 0.0
          %2666 = vmatpush1.msra.mxu0 %v2639
          %2667 = vmatprep.subr.mxu0 0.0
          %2668 = vmatpush1.msra.mxu0 %v2640
          %2669 = vmatprep.subr.mxu0 0.0
          %2670 = vmatpush1.msra.mxu0 %v2641
          %2671 = vmatprep.subr.mxu0 0.0
          %2672 = vmatpush1.msra.mxu0 %v2642
          %2673 = vmatprep.subr.mxu0 0.0
          %2674 = vmatpush1.msra.mxu0 %v2643
          %2675 = vmatprep.subr.mxu0 0.0
          %2676 = vmatpush1.msra.mxu0 %v2644
          %2677 = vmatprep.subr.mxu0 0.0
          %2678 = vmatpush1.msra.mxu0 %v2645
          %2679 = vmatprep.subr.mxu0 0.0
          %2680 = vmatpush1.msra.mxu0 %v2646
          %2681 = vmatprep.subr.mxu0 0.0
          %2682 = vmatpush1.msra.mxu0 %v2647
          %2683 = vmatprep.subr.mxu0 0.0
          %2684 = vmatpush1.msra.mxu0 %v2648
          %2685 = vmatprep.subr.mxu0 0.0
          %2686 = vmatpush1.msra.mxu0 %v2649
          %2687 = vmatprep.subr.mxu0 0.0
          %2688 = vmatpush1.msra.mxu0 %v2650
          %2689 = vmatprep.subr.mxu0 0.0
          %2690 = vmatpush1.msra.mxu0 %v2651
          %2691 = vmatprep.subr.mxu0 0.0
          %2692 = vmatpush1.msra.mxu0 0.0
          %2693 = vmatprep.subr.mxu0 0.0
          %2694 = vmatpush1.msra.mxu0 0.0
          %2695 = vmatprep.subr.mxu0 0.0
          %2696 = vmatpush1.msra.mxu0 0.0
          %2697 = vmatprep.subr.mxu0 0.0
          %2698 = vmatpush1.msra.mxu0 0.0
          %2699 = vmatprep.subr.mxu0 0.0
          %2700 = vmatpush1.msra.mxu0 0.0
          %2701 = vmatprep.subr.mxu0 0.0
          %2702 = vmatpush1.msra.mxu0 0.0
          %2703 = vmatprep.subr.mxu0 0.0
          %2704 = vmatpush1.msra.mxu0 0.0
          %2705 = vmatprep.subr.mxu0 0.0
          %2706 = vmatpush1.msra.mxu0 0.0
          %2707 = vmatprep.subr.mxu0 0.0
          %2708 = vmatpush1.msra.mxu0 0.0
          %2709 = vmatprep.subr.mxu0 0.0
          %2710 = vmatpush1.msra.mxu0 0.0
          %2711 = vmatprep.subr.mxu0 0.0
          %2712 = vmatpush1.msra.mxu0 0.0
          %2713 = vmatprep.subr.mxu0 0.0
          %2714 = vmatpush1.msra.mxu0 0.0
          %2715 = vmatprep.subr.mxu0 0.0
          %2716 = vmatpush1.msra.mxu0 0.0
          %2717 = vmatprep.subr.mxu0 0.0
          %2718 = vmatpush1.msra.mxu0 0.0
          %2719 = vmatprep.subr.mxu0 0.0
          %2720 = vmatpush1.msra.mxu0 0.0
          %2721 = vmatprep.subr.mxu0 0.0
          %2722 = vmatpush1.msra.mxu0 0.0
          %2723 = vmatprep.mubr.f32.mxu0 0.0
          %2724 = vmatmul.mubr.f32.gmra.mrb[0].mxu0 %v2635
          %v2725 = vpop.f32.mrb[0].mxu0
          %v2726 = vadd.f32 %v2657, %v2725
          %v2727 = vpop.f32.mrb[0].mxu0
          %2728 = vdwg.mxu0
          %v2729 = vld [vmem:[%s14] sm:$0x1]
          %v2731 = vlaneseq
          %v2732 = vshrl.u32 %v2731, 7
          %v2733 = vsub.s32 0, %v2732
          %v2734 = vrot.slane %v2729, %v2733
          %v2736 = vsub.f32 %v2726, %v2734
          %v2737 = vld [vmem:[%s15] sm:$0x1]
          %v2738 = vadd.f32 %v2737, 1e-05
          %v2739 = vrsqrt.pop %v2738
          %v2741 = vlaneseq
          %v2742 = vshrl.u32 %v2741, 7
          %v2743 = vsub.s32 0, %v2742
          %v2744 = vrot.slane %v2739, %v2743
          %v2746 = vmul.f32 %v2736, %v2744
          %v2747 = vld [vmem:[%s12] sm:$0x1]
          %v2749 = vlaneseq
          %v2750 = vshrl.u32 %v2749, 7
          %v2751 = vsub.s32 0, %v2750
          %v2752 = vrot.slane %v2747, %v2751
          %v2754 = vmul.f32 %v2746, %v2752
          %v2755 = vld [vmem:[%s13] sm:$0x1]
          %v2757 = vlaneseq
          %v2758 = vshrl.u32 %v2757, 7
          %v2759 = vsub.s32 0, %v2758
          %v2760 = vrot.slane %v2755, %v2759
          %v2762 = vadd.f32 %v2754, %v2760
          %v2763 = vmul.f32 %v2762, %v2762
          %v2764 = vmul.f32 %v2762, %v2763
          %v2765 = vmul.f32 %v2764, 0.044715
          %v2766 = vadd.f32 %v2762, %v2765
          %v2767 = vmul.f32 %v2766, 0.7978846
          %v2768 = vtanh.pop %v2767
          %v2769 = vadd.f32 %v2768, 1.0
          %v2770 = vmul.f32 %v2769, 0.5
          %v2771 = vmul.f32 %v2762, %v2770
          %v2772 = vld [vmem:[%s16] sm:$0xff]
          %v2773 = vld [vmem:[%s16 + $0x8] sm:$0xff]
          %v2774 = vld [vmem:[%s16 + $0x10] sm:$0xff]
          %v2775 = vld [vmem:[%s16 + $0x18] sm:$0xff]
          %v2776 = vld [vmem:[%s17] sm:$0x1]
          %v2778 = vlaneseq
          %v2779 = vshrl.u32 %v2778, 7
          %v2780 = vsub.s32 0, %v2779
          %v2781 = vrot.slane %v2776, %v2780
          %v2784 = vsel %vm1213, %v2771, 0
          %2786 = vmatprep.subr.mxu0 0.0
          %2787 = vmatpush1.msra.mxu0 %v2772
          %2788 = vmatprep.subr.mxu0 0.0
          %2789 = vmatpush1.msra.mxu0 %v2773
          %2790 = vmatprep.subr.mxu0 0.0
          %2791 = vmatpush1.msra.mxu0 %v2774
          %2792 = vmatprep.subr.mxu0 0.0
          %2793 = vmatpush1.msra.mxu0 %v2775
          %2794 = vmatprep.subr.mxu0 0.0
          %2795 = vmatpush1.msra.mxu0 0.0
          %2796 = vmatprep.subr.mxu0 0.0
          %2797 = vmatpush1.msra.mxu0 0.0
          %2798 = vmatprep.subr.mxu0 0.0
          %2799 = vmatpush1.msra.mxu0 0.0
          %2800 = vmatprep.subr.mxu0 0.0
          %2801 = vmatpush1.msra.mxu0 0.0
          %2802 = vmatprep.subr.mxu0 0.0
          %2803 = vmatpush1.msra.mxu0 0.0
          %2804 = vmatprep.subr.mxu0 0.0
          %2805 = vmatpush1.msra.mxu0 0.0
          %2806 = vmatprep.subr.mxu0 0.0
          %2807 = vmatpush1.msra.mxu0 0.0
          %2808 = vmatprep.subr.mxu0 0.0
          %2809 = vmatpush1.msra.mxu0 0.0
          %2810 = vmatprep.subr.mxu0 0.0
          %2811 = vmatpush1.msra.mxu0 0.0
          %2812 = vmatprep.subr.mxu0 0.0
          %2813 = vmatpush1.msra.mxu0 0.0
          %2814 = vmatprep.subr.mxu0 0.0
          %2815 = vmatpush1.msra.mxu0 0.0
          %2816 = vmatprep.subr.mxu0 0.0
          %2817 = vmatpush1.msra.mxu0 0.0
          %2818 = vmatprep.subr.mxu0 0.0
          %2819 = vmatpush1.msra.mxu0 0.0
          %2820 = vmatprep.subr.mxu0 0.0
          %2821 = vmatpush1.msra.mxu0 0.0
          %2822 = vmatprep.subr.mxu0 0.0
          %2823 = vmatpush1.msra.mxu0 0.0
          %2824 = vmatprep.subr.mxu0 0.0
          %2825 = vmatpush1.msra.mxu0 0.0
          %2826 = vmatprep.subr.mxu0 0.0
          %2827 = vmatpush1.msra.mxu0 0.0
          %2828 = vmatprep.subr.mxu0 0.0
          %2829 = vmatpush1.msra.mxu0 0.0
          %2830 = vmatprep.subr.mxu0 0.0
          %2831 = vmatpush1.msra.mxu0 0.0
          %2832 = vmatprep.subr.mxu0 0.0
          %2833 = vmatpush1.msra.mxu0 0.0
          %2834 = vmatprep.subr.mxu0 0.0
          %2835 = vmatpush1.msra.mxu0 0.0
          %2836 = vmatprep.subr.mxu0 0.0
          %2837 = vmatpush1.msra.mxu0 0.0
          %2838 = vmatprep.subr.mxu0 0.0
          %2839 = vmatpush1.msra.mxu0 0.0
          %2840 = vmatprep.subr.mxu0 0.0
          %2841 = vmatpush1.msra.mxu0 0.0
          %2842 = vmatprep.subr.mxu0 0.0
          %2843 = vmatpush1.msra.mxu0 0.0
          %2844 = vmatprep.subr.mxu0 0.0
          %2845 = vmatpush1.msra.mxu0 0.0
          %2846 = vmatprep.subr.mxu0 0.0
          %2847 = vmatpush1.msra.mxu0 0.0
          %2848 = vmatprep.subr.mxu0 0.0
          %2849 = vmatpush1.msra.mxu0 0.0
          %2850 = vmatprep.mubr.f32.mxu0 0.0
          %2851 = vmatmul.mubr.f32.gmra.mrb[0].mxu0 %v2784
          %v2852 = vpop.f32.mrb[0].mxu0
          %v2853 = vadd.f32 %v2781, %v2852
          %v2854 = vpop.f32.mrb[0].mxu0
          %2855 = vdwg.mxu0
          %v2856 = vld [vmem:[%s18] sm:$0xff]
          %v2857 = vld [vmem:[%s19] sm:$0x1]
          %v2859 = vlaneseq
          %v2860 = vshrl.u32 %v2859, 7
          %v2861 = vsub.s32 0, %v2860
          %v2862 = vrot.slane %v2857, %v2861
          %vm2864 = vcmask 64512
          %v2866 = vsel %vm2864, %v2853, 0
          %2868 = vmatprep.subr.mxu0 0.0
          %2869 = vmatpush1.msra.mxu0 %v2856
          %2870 = vmatprep.subr.mxu0 0.0
          %2871 = vmatpush1.msra.mxu0 0.0
          %2872 = vmatprep.subr.mxu0 0.0
          %2873 = vmatpush1.msra.mxu0 0.0
          %2874 = vmatprep.subr.mxu0 0.0
          %2875 = vmatpush1.msra.mxu0 0.0
          %2876 = vmatprep.subr.mxu0 0.0
          %2877 = vmatpush1.msra.mxu0 0.0
          %2878 = vmatprep.subr.mxu0 0.0
          %2879 = vmatpush1.msra.mxu0 0.0
          %2880 = vmatprep.subr.mxu0 0.0
          %2881 = vmatpush1.msra.mxu0 0.0
          %2882 = vmatprep.subr.mxu0 0.0
          %2883 = vmatpush1.msra.mxu0 0.0
          %2884 = vmatprep.subr.mxu0 0.0
          %2885 = vmatpush1.msra.mxu0 0.0
          %2886 = vmatprep.subr.mxu0 0.0
          %2887 = vmatpush1.msra.mxu0 0.0
          %2888 = vmatprep.subr.mxu0 0.0
          %2889 = vmatpush1.msra.mxu0 0.0
          %2890 = vmatprep.subr.mxu0 0.0
          %2891 = vmatpush1.msra.mxu0 0.0
          %2892 = vmatprep.subr.mxu0 0.0
          %2893 = vmatpush1.msra.mxu0 0.0
          %2894 = vmatprep.subr.mxu0 0.0
          %2895 = vmatpush1.msra.mxu0 0.0
          %2896 = vmatprep.subr.mxu0 0.0
          %2897 = vmatpush1.msra.mxu0 0.0
          %2898 = vmatprep.subr.mxu0 0.0
          %2899 = vmatpush1.msra.mxu0 0.0
          %2900 = vmatprep.subr.mxu0 0.0
          %2901 = vmatpush1.msra.mxu0 0.0
          %2902 = vmatprep.subr.mxu0 0.0
          %2903 = vmatpush1.msra.mxu0 0.0
          %2904 = vmatprep.subr.mxu0 0.0
          %2905 = vmatpush1.msra.mxu0 0.0
          %2906 = vmatprep.subr.mxu0 0.0
          %2907 = vmatpush1.msra.mxu0 0.0
          %2908 = vmatprep.subr.mxu0 0.0
          %2909 = vmatpush1.msra.mxu0 0.0
          %2910 = vmatprep.subr.mxu0 0.0
          %2911 = vmatpush1.msra.mxu0 0.0
          %2912 = vmatprep.subr.mxu0 0.0
          %2913 = vmatpush1.msra.mxu0 0.0
          %2914 = vmatprep.subr.mxu0 0.0
          %2915 = vmatpush1.msra.mxu0 0.0
          %2916 = vmatprep.subr.mxu0 0.0
          %2917 = vmatpush1.msra.mxu0 0.0
          %2918 = vmatprep.subr.mxu0 0.0
          %2919 = vmatpush1.msra.mxu0 0.0
          %2920 = vmatprep.subr.mxu0 0.0
          %2921 = vmatpush1.msra.mxu0 0.0
          %2922 = vmatprep.subr.mxu0 0.0
          %2923 = vmatpush1.msra.mxu0 0.0
          %2924 = vmatprep.subr.mxu0 0.0
          %2925 = vmatpush1.msra.mxu0 0.0
          %2926 = vmatprep.subr.mxu0 0.0
          %2927 = vmatpush1.msra.mxu0 0.0
          %2928 = vmatprep.subr.mxu0 0.0
          %2929 = vmatpush1.msra.mxu0 0.0
          %2930 = vmatprep.subr.mxu0 0.0
          %2931 = vmatpush1.msra.mxu0 0.0
          %2932 = vmatprep.mubr.f32.mxu0 0.0
          %2933 = vmatmul.mubr.f32.gmra.mrb[0].mxu0 %v2866
          %v2934 = vpop.f32.mrb[0].mxu0
          %v2935 = vadd.f32 %v2862, %v2934
          %v2936 = vpop.f32.mrb[0].mxu0
          %2937 = vdwg.mxu0
          %vm2938 = vcmask 25600
          %2939 = vst.msk [vmem:[#allocation11] sm:$0x3] %vm2938, %v2935
        $region124: #{tpu_custom_call.1} parent=99 // pred_fallthru
          _
        // Predicated region
        $region125: #{tpu_custom_call.1} parent=99 // pred_check
          %p2940 = pneg %p504
        $region126: #{tpu_custom_call.1} parent=99 // pred_check_branch
          %2942 = sbr.rel (%p2940) target = $region128
        $region127: #{tpu_custom_call.1} parent=99 // pred_region
          %s2944 = ssub.s32 32, 32
          %2945 = vsyncadd [#allocation5], %s2944
          %s2947 = sshll.u32 [#allocation11], 4
          %s2948 = int_to_ptr.vmem [resolvable:$true] %s2947
          %2950 = dma.vmem_to_hbm [thread:$0]  %s2948, 32, %s20, [#allocation5]
        $region128: #{tpu_custom_call.1} parent=99 // pred_fallthru
          _
        // Predicated region
        $region129: #{tpu_custom_call.1} parent=99 // pred_check
          %p2951 = pneg %p504
        $region130: #{tpu_custom_call.1} parent=99 // pred_check_branch
          %2953 = sbr.rel (%p2951) target = $region132
        $region131: #{tpu_custom_call.1} parent=99 // pred_region
          %2954 = dma.done [#allocation5], 32
        $region132: #{tpu_custom_call.1} parent=99 // pred_fallthru
          _
      $region100: #{tpu_custom_call.1} parent=5 // pred_fallthru
        _
      %p2955 = scmp.le.s32.totalorder 2, %s36
      // Predicated region
      $region133: #{tpu_custom_call.1} parent=5 // pred_check
        %p2956 = pneg %p2955
      $region134: #{tpu_custom_call.1} parent=5 // pred_check_branch
        %2958 = sbr.rel (%p2956) target = $region136
      $region135: #{tpu_custom_call.1} parent=5 // pred_region
        %s2959 = ssub.s32 %s36, 2
      $region136: #{tpu_custom_call.1} parent=5 // pred_fallthru
        _
    $region6: #{tpu_custom_call.1} parent=1 // loop_footer
      %s40 = sadd.s32 1, %s36
    $region7: #{tpu_custom_call.1} parent=1 // loop_footer_branch
      %35 = sbr.rel target = $region3
    $region8: #{tpu_custom_call.1} parent=1 // loop_exit
      _
    %2960 = vsyncpa [#allocation4], 1
    %s2961 = scalar_lea.sflag [#allocation4], 1
    %2962 = vsyncpa %s2961, 1
    %2963 = vsyncpa [#allocation7], 1
    %s2964 = scalar_lea.sflag [#allocation7], 1
    %2965 = vsyncpa %s2964, 1
    %2966 = vsyncpa [#allocation10], 1
    %s2967 = scalar_lea.sflag [#allocation10], 1
    %2968 = vsyncpa %s2967, 1
    %2969 = vsyncpa [#allocation5], 1
    %s2970 = scalar_lea.sflag [#allocation5], 1
    %2971 = vsyncpa %s2970, 1

</llo_original>
